<compile_context>
chip_gen: v7x
topology: tpu7x:2x2x1
jax: 0.10.0
libtpu: 0.0.40
codegen_flags: <defaults>
</compile_context>

<pallas_src>
import jax
import jax.numpy as jnp
from jax import lax
from jax.experimental import pallas as pl
from jax.experimental.pallas import tpu as pltpu


def _round_up(n, m):
    return ((n + m - 1) // m) * m


# ----------------------------- Pallas kernel --------------------------------
def ncf_kernel(idx0_ref, idx1_ref,
               gmf_t0_ref, gmf_t1_ref, mlp_t0_ref, mlp_t1_ref,
               w1a_ref, w1b_ref, b1_ref, w2_ref, b2_ref,
               wfc_g_ref, wfc_m_ref, bfc_ref,
               out_ref):
    tm = idx0_ref.shape[0]
    r0 = gmf_t0_ref.shape[0]
    r1 = gmf_t1_ref.shape[0]

    # Fused embedding gather: one_hot(idx) @ table (exact row select on MXU).
    idx0 = idx0_ref[...]                                            # (TM, 1) i32
    idx1 = idx1_ref[...]
    oh0 = (idx0 == lax.broadcasted_iota(jnp.int32, (tm, r0), 1)).astype(jnp.float32)
    oh1 = (idx1 == lax.broadcasted_iota(jnp.int32, (tm, r1), 1)).astype(jnp.float32)

    g0 = jnp.dot(oh0, gmf_t0_ref[...], preferred_element_type=jnp.float32)  # (TM, E)
    g1 = jnp.dot(oh1, gmf_t1_ref[...], preferred_element_type=jnp.float32)
    m0 = jnp.dot(oh0, mlp_t0_ref[...], preferred_element_type=jnp.float32)
    m1 = jnp.dot(oh1, mlp_t1_ref[...], preferred_element_type=jnp.float32)

    # GMF branch: elementwise product of the two GMF field embeddings.
    gmf = g0 * g1                                                   # (TM, E)

    # MLP branch: [2E] -> 128 -> 64 with ReLU; concat folded into split w1.
    h = (jnp.dot(m0, w1a_ref[...], preferred_element_type=jnp.float32)
         + jnp.dot(m1, w1b_ref[...], preferred_element_type=jnp.float32)
         + b1_ref[...])                                             # (TM, 128)
    h = jnp.maximum(h, 0.0)
    h = jnp.dot(h, w2_ref[...], preferred_element_type=jnp.float32) + b2_ref[...]
    h = jnp.maximum(h, 0.0)                                         # (TM, 64)

    # fc([GMF, MLP]) with N=1: VPU multiply + lane (XLU) reduce, scalar bias
    # from SMEM.  Keeps the MXU / vext slot free for the real matmuls.
    logit = (jnp.sum(gmf * wfc_g_ref[...], axis=-1, keepdims=True)
             + jnp.sum(h * wfc_m_ref[...], axis=-1, keepdims=True)
             + bfc_ref[0, 0])                                       # (TM, 1)

    out_ref[...] = jax.nn.sigmoid(logit)


# ------------------------------ wrapper --------------------------------------
def neural_cf_forward(x, params, *, tile_m=256):
    """x: int32 (B, 2) feature indices; returns (B, 1) float32 sigmoid scores."""
    B = x.shape[0]
    E = params["gmf_tables"][0].shape[1]

    b_pad = _round_up(max(B, 1), tile_m)
    num_tiles = b_pad // tile_m

    # Index columns (padded with in-range index 0; padded rows discarded later).
    idx0 = x[:, 0:1].astype(jnp.int32)
    idx1 = x[:, 1:2].astype(jnp.int32)
    if b_pad != B:
        pad = ((0, b_pad - B), (0, 0))
        idx0 = jnp.pad(idx0, pad)
        idx1 = jnp.pad(idx1, pad)

    # Sublane-align embedding tables (zero rows never selected by one-hot).
    def pad_table(t):
        rp = _round_up(t.shape[0], 8)
        return jnp.pad(t, ((0, rp - t.shape[0]), (0, 0))) if rp != t.shape[0] else t

    gmf_t0 = pad_table(params["gmf_tables"][0])
    gmf_t1 = pad_table(params["gmf_tables"][1])
    mlp_t0 = pad_table(params["mlp_tables"][0])
    mlp_t1 = pad_table(params["mlp_tables"][1])

    w1, b1 = params["w1"], params["b1"]          # (2E,128), (1,128)
    w2, b2 = params["w2"], params["b2"]          # (128,64), (1,64)
    wfc, bfc = params["wfc"], params["bfc"]      # (E+64,1), (1,1)
    w1a, w1b = w1[:E, :], w1[E:, :]              # split -> no concat needed
    wfc_g = wfc[:E, :].T                          # (1, E)   row for VPU reduce
    wfc_m = wfc[E:, :].T                          # (1, 64)

    def tile_spec():                              # per-batch-tile blocks
        return pl.BlockSpec((tile_m, 1), lambda i: (i, 0))

    def resident_spec(a):                         # full array, constant block
        return pl.BlockSpec(a.shape, lambda i: (0, 0))

    in_specs = [
        tile_spec(),                              # idx0
        tile_spec(),                              # idx1
        resident_spec(gmf_t0), resident_spec(gmf_t1),
        resident_spec(mlp_t0), resident_spec(mlp_t1),
        resident_spec(w1a), resident_spec(w1b), resident_spec(b1),
        resident_spec(w2), resident_spec(b2),
        resident_spec(wfc_g), resident_spec(wfc_m),
        pl.BlockSpec(memory_space=pltpu.MemorySpace.SMEM),   # bfc scalar bias
    ]

    inputs = (idx0, idx1, gmf_t0, gmf_t1, mlp_t0, mlp_t1,
              w1a, w1b, b1, w2, b2, wfc_g, wfc_m, bfc)

    r0, r1 = gmf_t0.shape[0], gmf_t1.shape[0]
    flops = (2 * b_pad * (2 * r0 * E + 2 * r1 * E          # one-hot gathers
                          + 2 * E * 128 + 128 * 64)        # MLP matmuls
             + b_pad * (4 * E + 4 * 64))                   # GMF + final reduce
    bytes_accessed = sum(int(a.size) * a.dtype.itemsize for a in inputs) + b_pad * 4
    cost = pl.CostEstimate(flops=flops, transcendentals=b_pad,
                           bytes_accessed=bytes_accessed)

    out = pl.pallas_call(
        ncf_kernel,
        out_shape=jax.ShapeDtypeStruct((b_pad, 1), jnp.float32),
        grid=(num_tiles,),
        in_specs=in_specs,
        out_specs=pl.BlockSpec((tile_m, 1), lambda i: (i, 0)),
        compiler_params=pltpu.CompilerParams(
            dimension_semantics=("parallel",)),   # megacore on v7x, neutral else
        cost_estimate=cost,
    )(*inputs)
    return out[:B]


# ------------------------- deterministic params ------------------------------
def init_params(feature_nums, emb_dim, key):
    ks = jax.random.split(key, 10)
    F = len(feature_nums)
    scale = 0.1
    params = {
        "gmf_tables": [scale * jax.random.normal(ks[i], (feature_nums[i], emb_dim),
                                                 jnp.float32) for i in range(F)],
        "mlp_tables": [scale * jax.random.normal(ks[2 + i], (feature_nums[i], emb_dim),
                                                 jnp.float32) for i in range(F)],
        # DenseLayer([F*emb_dim, 128, 64]) assumed Linear+ReLU per layer
        # TODO(synk): DenseLayer internals (e.g. BatchNorm/Dropout) not shown in source; Linear+ReLU assumed.
        "w1": scale * jax.random.normal(ks[4], (F * emb_dim, 128), jnp.float32),
        "b1": scale * jax.random.normal(ks[5], (1, 128), jnp.float32),
        "w2": scale * jax.random.normal(ks[6], (128, 64), jnp.float32),
        "b2": scale * jax.random.normal(ks[7], (1, 64), jnp.float32),
        "wfc": scale * jax.random.normal(ks[8], (emb_dim + 64, 1), jnp.float32),
        "bfc": scale * jax.random.normal(ks[9], (1, 1), jnp.float32),
    }
    return params


# ------------------------------ reference ------------------------------------
def reference_forward(x, params):
    g0 = jnp.take(params["gmf_tables"][0], x[:, 0], axis=0)
    g1 = jnp.take(params["gmf_tables"][1], x[:, 1], axis=0)
    gmf = g0 * g1
    m0 = jnp.take(params["mlp_tables"][0], x[:, 0], axis=0)
    m1 = jnp.take(params["mlp_tables"][1], x[:, 1], axis=0)
    h = jnp.concatenate([m0, m1], axis=-1)
    h = jnp.maximum(h @ params["w1"] + params["b1"], 0.0)
    h = jnp.maximum(h @ params["w2"] + params["b2"], 0.0)
    full = jnp.concatenate([gmf, h], axis=-1)
    return jax.nn.sigmoid(full @ params["wfc"] + params["bfc"])


if __name__ == "__main__":
    feature_nums = [100, 200]   # [num_users, num_items]
    emb_dim = 16
    batch = 300                 # not a multiple of the 256 batch tile -> tests padding + 2 grid steps

    key = jax.random.PRNGKey(0)
    k_param, k_u, k_i = jax.random.split(key, 3)
    params = init_params(feature_nums, emb_dim, k_param)

    users = jax.random.randint(k_u, (batch,), 0, feature_nums[0], jnp.int32)
    items = jax.random.randint(k_i, (batch,), 0, feature_nums[1], jnp.int32)
    x = jnp.stack([users, items], axis=1)                 # (B, 2) int32 indices

    out = neural_cf_forward(x, params)
    out = jax.block_until_ready(out)

    ref = reference_forward(x, params)
    assert out.shape == (batch, 1)
    assert jnp.allclose(out, ref, atol=1e-5, rtol=1e-5)

    print("KERNEL_OK")
</pallas_src>

<mosaic_0001>
module attributes {stable_mosaic.version = 11 : i64} {
  func.func @ncf_kernel(%arg0: i32, %arg1: memref<256x1xi32, #tpu.memory_space<vmem>>, %arg2: memref<256x1xi32, #tpu.memory_space<vmem>>, %arg3: memref<104x16xf32, #tpu.memory_space<vmem>>, %arg4: memref<200x16xf32, #tpu.memory_space<vmem>>, %arg5: memref<104x16xf32, #tpu.memory_space<vmem>>, %arg6: memref<200x16xf32, #tpu.memory_space<vmem>>, %arg7: memref<16x128xf32, #tpu.memory_space<vmem>>, %arg8: memref<16x128xf32, #tpu.memory_space<vmem>>, %arg9: memref<1x128xf32, #tpu.memory_space<vmem>>, %arg10: memref<128x64xf32, #tpu.memory_space<vmem>>, %arg11: memref<1x64xf32, #tpu.memory_space<vmem>>, %arg12: memref<1x16xf32, #tpu.memory_space<vmem>>, %arg13: memref<1x64xf32, #tpu.memory_space<vmem>>, %arg14: memref<1x1xf32, #tpu.memory_space<smem>>, %arg15: memref<256x1xf32, #tpu.memory_space<vmem>>) attributes {dimension_semantics = [#tpu.dimension_semantics<parallel>], iteration_bounds = array<i64: 2>, scalar_prefetch = 0 : i64, scratch_operands = 0 : i64, tpu.core_type = #tpu.core_type<tc>, window_params = [{transform_indices = @transform_0, window_bounds = array<i64: 256, 1>}, {transform_indices = @transform_1, window_bounds = array<i64: 256, 1>}, {pipeline_mode = #tpu.pipeline_mode<synchronous>, transform_indices = @transform_2, window_bounds = array<i64: 104, 16>}, {pipeline_mode = #tpu.pipeline_mode<synchronous>, transform_indices = @transform_3, window_bounds = array<i64: 200, 16>}, {pipeline_mode = #tpu.pipeline_mode<synchronous>, transform_indices = @transform_4, window_bounds = array<i64: 104, 16>}, {pipeline_mode = #tpu.pipeline_mode<synchronous>, transform_indices = @transform_5, window_bounds = array<i64: 200, 16>}, {pipeline_mode = #tpu.pipeline_mode<synchronous>, transform_indices = @transform_6, window_bounds = array<i64: 16, 128>}, {pipeline_mode = #tpu.pipeline_mode<synchronous>, transform_indices = @transform_7, window_bounds = array<i64: 16, 128>}, {pipeline_mode = #tpu.pipeline_mode<synchronous>, transform_indices = @transform_8, window_bounds = array<i64: 1, 128>}, {pipeline_mode = #tpu.pipeline_mode<synchronous>, transform_indices = @transform_9, window_bounds = array<i64: 128, 64>}, {pipeline_mode = #tpu.pipeline_mode<synchronous>, transform_indices = @transform_10, window_bounds = array<i64: 1, 64>}, {pipeline_mode = #tpu.pipeline_mode<synchronous>, transform_indices = @transform_11, window_bounds = array<i64: 1, 16>}, {pipeline_mode = #tpu.pipeline_mode<synchronous>, transform_indices = @transform_12, window_bounds = array<i64: 1, 64>}, {transform_indices = @transform_13, window_bounds = array<i64: 1, 1>}, {transform_indices = @transform_14, window_bounds = array<i64: 256, 1>}]} {
    %c0 = arith.constant 0 : index
    %c0_0 = arith.constant 0 : index
    %0 = vector.load %arg1[%c0, %c0_0] : memref<256x1xi32, #tpu.memory_space<vmem>>, vector<256x1xi32>
    %c0_1 = arith.constant 0 : index
    %c0_2 = arith.constant 0 : index
    %1 = vector.load %arg2[%c0_1, %c0_2] : memref<256x1xi32, #tpu.memory_space<vmem>>, vector<256x1xi32>
    %2 = tpu.iota {dimensions = array<i32: 1>} : vector<256x104xi32>
    %3 = vector.broadcast %0 : vector<256x1xi32> to vector<256x104xi32>
    %4 = arith.cmpi eq, %3, %2 : vector<256x104xi32>
    %5 = arith.extui %4 : vector<256x104xi1> to vector<256x104xi32>
    %6 = arith.sitofp %5 : vector<256x104xi32> to vector<256x104xf32>
    %7 = tpu.iota {dimensions = array<i32: 1>} : vector<256x200xi32>
    %8 = vector.broadcast %1 : vector<256x1xi32> to vector<256x200xi32>
    %9 = arith.cmpi eq, %8, %7 : vector<256x200xi32>
    %10 = arith.extui %9 : vector<256x200xi1> to vector<256x200xi32>
    %11 = arith.sitofp %10 : vector<256x200xi32> to vector<256x200xf32>
    %c0_3 = arith.constant 0 : index
    %c0_4 = arith.constant 0 : index
    %12 = vector.load %arg3[%c0_3, %c0_4] : memref<104x16xf32, #tpu.memory_space<vmem>>, vector<104x16xf32>
    %cst = arith.constant dense<0.000000e+00> : vector<256x16xf32>
    %13 = tpu.matmul %6, %12, %cst {dimension_numbers = #tpu.dot_dimension_numbers<[1], [0], [0], [1], [0, 0, 1, 1], [], []>} : vector<256x104xf32>, vector<104x16xf32>, vector<256x16xf32> -> vector<256x16xf32>
    %c0_5 = arith.constant 0 : index
    %c0_6 = arith.constant 0 : index
    %14 = vector.load %arg4[%c0_5, %c0_6] : memref<200x16xf32, #tpu.memory_space<vmem>>, vector<200x16xf32>
    %cst_7 = arith.constant dense<0.000000e+00> : vector<256x16xf32>
    %15 = tpu.matmul %11, %14, %cst_7 {dimension_numbers = #tpu.dot_dimension_numbers<[1], [0], [0], [1], [0, 0, 1, 1], [], []>} : vector<256x200xf32>, vector<200x16xf32>, vector<256x16xf32> -> vector<256x16xf32>
    %c0_8 = arith.constant 0 : index
    %c0_9 = arith.constant 0 : index
    %16 = vector.load %arg5[%c0_8, %c0_9] : memref<104x16xf32, #tpu.memory_space<vmem>>, vector<104x16xf32>
    %cst_10 = arith.constant dense<0.000000e+00> : vector<256x16xf32>
    %17 = tpu.matmul %6, %16, %cst_10 {dimension_numbers = #tpu.dot_dimension_numbers<[1], [0], [0], [1], [0, 0, 1, 1], [], []>} : vector<256x104xf32>, vector<104x16xf32>, vector<256x16xf32> -> vector<256x16xf32>
    %c0_11 = arith.constant 0 : index
    %c0_12 = arith.constant 0 : index
    %18 = vector.load %arg6[%c0_11, %c0_12] : memref<200x16xf32, #tpu.memory_space<vmem>>, vector<200x16xf32>
    %cst_13 = arith.constant dense<0.000000e+00> : vector<256x16xf32>
    %19 = tpu.matmul %11, %18, %cst_13 {dimension_numbers = #tpu.dot_dimension_numbers<[1], [0], [0], [1], [0, 0, 1, 1], [], []>} : vector<256x200xf32>, vector<200x16xf32>, vector<256x16xf32> -> vector<256x16xf32>
    %20 = arith.mulf %13, %15 : vector<256x16xf32>
    %c0_14 = arith.constant 0 : index
    %c0_15 = arith.constant 0 : index
    %21 = vector.load %arg7[%c0_14, %c0_15] : memref<16x128xf32, #tpu.memory_space<vmem>>, vector<16x128xf32>
    %cst_16 = arith.constant dense<0.000000e+00> : vector<256x128xf32>
    %22 = tpu.matmul %17, %21, %cst_16 {dimension_numbers = #tpu.dot_dimension_numbers<[1], [0], [0], [1], [0, 0, 1, 1], [], []>} : vector<256x16xf32>, vector<16x128xf32>, vector<256x128xf32> -> vector<256x128xf32>
    %c0_17 = arith.constant 0 : index
    %c0_18 = arith.constant 0 : index
    %23 = vector.load %arg8[%c0_17, %c0_18] : memref<16x128xf32, #tpu.memory_space<vmem>>, vector<16x128xf32>
    %cst_19 = arith.constant dense<0.000000e+00> : vector<256x128xf32>
    %24 = tpu.matmul %19, %23, %cst_19 {dimension_numbers = #tpu.dot_dimension_numbers<[1], [0], [0], [1], [0, 0, 1, 1], [], []>} : vector<256x16xf32>, vector<16x128xf32>, vector<256x128xf32> -> vector<256x128xf32>
    %25 = arith.addf %22, %24 : vector<256x128xf32>
    %c0_20 = arith.constant 0 : index
    %c0_21 = arith.constant 0 : index
    %26 = vector.load %arg9[%c0_20, %c0_21] : memref<1x128xf32, #tpu.memory_space<vmem>>, vector<1x128xf32>
    %27 = vector.broadcast %26 : vector<1x128xf32> to vector<256x128xf32>
    %28 = arith.addf %25, %27 : vector<256x128xf32>
    %cst_22 = arith.constant 0.000000e+00 : f32
    %29 = vector.broadcast %cst_22 : f32 to vector<256x128xf32>
    %30 = arith.maximumf %28, %29 : vector<256x128xf32>
    %c0_23 = arith.constant 0 : index
    %c0_24 = arith.constant 0 : index
    %31 = vector.load %arg10[%c0_23, %c0_24] : memref<128x64xf32, #tpu.memory_space<vmem>>, vector<128x64xf32>
    %cst_25 = arith.constant dense<0.000000e+00> : vector<256x64xf32>
    %32 = tpu.matmul %30, %31, %cst_25 {dimension_numbers = #tpu.dot_dimension_numbers<[1], [0], [0], [1], [0, 0, 1, 1], [], []>} : vector<256x128xf32>, vector<128x64xf32>, vector<256x64xf32> -> vector<256x64xf32>
    %c0_26 = arith.constant 0 : index
    %c0_27 = arith.constant 0 : index
    %33 = vector.load %arg11[%c0_26, %c0_27] : memref<1x64xf32, #tpu.memory_space<vmem>>, vector<1x64xf32>
    %34 = vector.broadcast %33 : vector<1x64xf32> to vector<256x64xf32>
    %35 = arith.addf %32, %34 : vector<256x64xf32>
    %cst_28 = arith.constant 0.000000e+00 : f32
    %36 = vector.broadcast %cst_28 : f32 to vector<256x64xf32>
    %37 = arith.maximumf %35, %36 : vector<256x64xf32>
    %c0_29 = arith.constant 0 : index
    %c0_30 = arith.constant 0 : index
    %38 = vector.load %arg12[%c0_29, %c0_30] : memref<1x16xf32, #tpu.memory_space<vmem>>, vector<1x16xf32>
    %39 = vector.broadcast %38 : vector<1x16xf32> to vector<256x16xf32>
    %40 = arith.mulf %20, %39 : vector<256x16xf32>
    %cst_31 = arith.constant dense<0.000000e+00> : vector<256xf32>
    %41 = vector.multi_reduction <add>, %40, %cst_31 [1] : vector<256x16xf32> to vector<256xf32>
    %42 = vector.shape_cast %41 : vector<256xf32> to vector<256x1xf32>
    %c0_32 = arith.constant 0 : index
    %c0_33 = arith.constant 0 : index
    %43 = vector.load %arg13[%c0_32, %c0_33] : memref<1x64xf32, #tpu.memory_space<vmem>>, vector<1x64xf32>
    %44 = vector.broadcast %43 : vector<1x64xf32> to vector<256x64xf32>
    %45 = arith.mulf %37, %44 : vector<256x64xf32>
    %cst_34 = arith.constant dense<0.000000e+00> : vector<256xf32>
    %46 = vector.multi_reduction <add>, %45, %cst_34 [1] : vector<256x64xf32> to vector<256xf32>
    %47 = vector.shape_cast %46 : vector<256xf32> to vector<256x1xf32>
    %48 = arith.addf %42, %47 : vector<256x1xf32>
    %c0_35 = arith.constant 0 : index
    %c0_36 = arith.constant 0 : index
    %49 = memref.load %arg14[%c0_35, %c0_36] : memref<1x1xf32, #tpu.memory_space<smem>>
    %50 = vector.broadcast %49 : f32 to vector<256x1xf32>
    %51 = arith.addf %48, %50 : vector<256x1xf32>
    %52 = arith.negf %51 : vector<256x1xf32>
    %53 = math.exp %52 : vector<256x1xf32>
    %cst_37 = arith.constant 1.000000e+00 : f32
    %54 = vector.broadcast %cst_37 : f32 to vector<256x1xf32>
    %55 = arith.addf %54, %53 : vector<256x1xf32>
    %56 = arith.divf %54, %55 : vector<256x1xf32>
    %c0_38 = arith.constant 0 : index
    %c0_39 = arith.constant 0 : index
    %57 = vector.load %arg15[%c0_38, %c0_39] : memref<256x1xf32, #tpu.memory_space<vmem>>, vector<256x1xf32>
    tpu.vector_store %arg15[%c0_38, %c0_39], %56 {strides = array<i32>} : memref<256x1xf32, #tpu.memory_space<vmem>>, vector<256x1xf32>,
    return
  }
  func.func @transform_0(%arg0: i32) -> (i32, i32) {
    %c0_i32 = arith.constant 0 : i32
    %c0_i32_0 = arith.constant 0 : i32
    return %arg0, %c0_i32 : i32, i32
  }
  func.func @transform_1(%arg0: i32) -> (i32, i32) {
    %c0_i32 = arith.constant 0 : i32
    %c0_i32_0 = arith.constant 0 : i32
    return %arg0, %c0_i32 : i32, i32
  }
  func.func @transform_2(%arg0: i32) -> (i32, i32) {
    %c0_i32 = arith.constant 0 : i32
    %c0_i32_0 = arith.constant 0 : i32
    %c0_i32_1 = arith.constant 0 : i32
    return %c0_i32, %c0_i32_0 : i32, i32
  }
  func.func @transform_3(%arg0: i32) -> (i32, i32) {
    %c0_i32 = arith.constant 0 : i32
    %c0_i32_0 = arith.constant 0 : i32
    %c0_i32_1 = arith.constant 0 : i32
    return %c0_i32, %c0_i32_0 : i32, i32
  }
  func.func @transform_4(%arg0: i32) -> (i32, i32) {
    %c0_i32 = arith.constant 0 : i32
    %c0_i32_0 = arith.constant 0 : i32
    %c0_i32_1 = arith.constant 0 : i32
    return %c0_i32, %c0_i32_0 : i32, i32
  }
  func.func @transform_5(%arg0: i32) -> (i32, i32) {
    %c0_i32 = arith.constant 0 : i32
    %c0_i32_0 = arith.constant 0 : i32
    %c0_i32_1 = arith.constant 0 : i32
    return %c0_i32, %c0_i32_0 : i32, i32
  }
  func.func @transform_6(%arg0: i32) -> (i32, i32) {
    %c0_i32 = arith.constant 0 : i32
    %c0_i32_0 = arith.constant 0 : i32
    %c0_i32_1 = arith.constant 0 : i32
    return %c0_i32, %c0_i32_0 : i32, i32
  }
  func.func @transform_7(%arg0: i32) -> (i32, i32) {
    %c0_i32 = arith.constant 0 : i32
    %c0_i32_0 = arith.constant 0 : i32
    %c0_i32_1 = arith.constant 0 : i32
    return %c0_i32, %c0_i32_0 : i32, i32
  }
  func.func @transform_8(%arg0: i32) -> (i32, i32) {
    %c0_i32 = arith.constant 0 : i32
    %c0_i32_0 = arith.constant 0 : i32
    %c0_i32_1 = arith.constant 0 : i32
    return %c0_i32, %c0_i32_0 : i32, i32
  }
  func.func @transform_9(%arg0: i32) -> (i32, i32) {
    %c0_i32 = arith.constant 0 : i32
    %c0_i32_0 = arith.constant 0 : i32
    %c0_i32_1 = arith.constant 0 : i32
    return %c0_i32, %c0_i32_0 : i32, i32
  }
  func.func @transform_10(%arg0: i32) -> (i32, i32) {
    %c0_i32 = arith.constant 0 : i32
    %c0_i32_0 = arith.constant 0 : i32
    %c0_i32_1 = arith.constant 0 : i32
    return %c0_i32, %c0_i32_0 : i32, i32
  }
  func.func @transform_11(%arg0: i32) -> (i32, i32) {
    %c0_i32 = arith.constant 0 : i32
    %c0_i32_0 = arith.constant 0 : i32
    %c0_i32_1 = arith.constant 0 : i32
    return %c0_i32, %c0_i32_0 : i32, i32
  }
  func.func @transform_12(%arg0: i32) -> (i32, i32) {
    %c0_i32 = arith.constant 0 : i32
    %c0_i32_0 = arith.constant 0 : i32
    %c0_i32_1 = arith.constant 0 : i32
    return %c0_i32, %c0_i32_0 : i32, i32
  }
  func.func @transform_13(%arg0: i32) -> (i32, i32) {
    %c0_i32 = arith.constant 0 : i32
    %c0_i32_0 = arith.constant 0 : i32
    %c0_i32_1 = arith.constant 0 : i32
    return %c0_i32, %c0_i32_0 : i32, i32
  }
  func.func @transform_14(%arg0: i32) -> (i32, i32) {
    %c0_i32 = arith.constant 0 : i32
    %c0_i32_0 = arith.constant 0 : i32
    return %arg0, %c0_i32 : i32, i32
  }
}

</mosaic_0001>

<llo_original>
// kernel: tpu_custom_call.1
$region0: #{tpu_custom_call.1}
  #allocation0 [shape = 'u32[]', space=smem, size = 0x4, offset = 0x4, fixed_abs, tag = 'smem constant byte address 0x4 - core index']
  #allocation1 [shape = 'u32[144,128]{1,0:T(1,128)}', space=vmem, size = 0x12000, scoped, tag = 'internal scratch']
  #allocation2 [shape = 'f32[1,1]{1,0:T(1,128)S(6)}', space=smem, size = 0x200, scoped, tag = 'scoped memory for tpu_custom_call.1']
  %s0 = inlined_call_operand.vmem [shape: s32[512,1], index: 0, kind: input, shape index: {}]
  %s1 = inlined_call_operand.vmem [shape: s32[512,1], index: 1, kind: input, shape index: {}]
  %s2 = inlined_call_operand.vmem [shape: f32[104,16], index: 2, kind: input, shape index: {}]
  %s3 = inlined_call_operand.vmem [shape: f32[200,16], index: 3, kind: input, shape index: {}]
  %s4 = inlined_call_operand.vmem [shape: f32[104,16], index: 4, kind: input, shape index: {}]
  %s5 = inlined_call_operand.vmem [shape: f32[200,16], index: 5, kind: input, shape index: {}]
  %s6 = inlined_call_operand.vmem [shape: f32[16,128], index: 6, kind: input, shape index: {}]
  %s7 = inlined_call_operand.vmem [shape: f32[16,128], index: 7, kind: input, shape index: {}]
  %s8 = inlined_call_operand.vmem [shape: f32[1,128], index: 8, kind: input, shape index: {}]
  %s9 = inlined_call_operand.vmem [shape: f32[128,64], index: 9, kind: input, shape index: {}]
  %s10 = inlined_call_operand.vmem [shape: f32[1,64], index: 10, kind: input, shape index: {}]
  %s11 = inlined_call_operand.vmem [shape: f32[1,16], index: 11, kind: input, shape index: {}]
  %s12 = inlined_call_operand.vmem [shape: f32[1,64], index: 12, kind: input, shape index: {}]
  %s13 = inlined_call_operand.<no memory space> [shape: f32[1,1], index: 13, kind: input, shape index: {}]
  %s14 = inlined_call_operand.vmem [shape: f32[512,1], index: 14, kind: output, shape index: {}]
  %s15 = sld [smem:[#allocation0]]
  $region89: #{tpu_custom_call.1} parent=0
    _
  %s17 = ssub.s32 1, %s15
  %s18 = scalar_select 0, %s17, %s15
  %19 = sst [smem:[#allocation2]] %s13
  loop: start=0, step=1, limit=4
  $region2: #{tpu_custom_call.1} parent=0 // loop_pre_header
    _
  $region3: #{tpu_custom_call.1} parent=0 // loop_header
    %s21 = sphi 0, %s25
    %p22 = scmp.ge.s32.totalorder %s21, 4
    %s31 = sphi 0, %s33
    %s34 = sphi 0, %s31
    %s35 = sphi 0, %s34
    %s51 = sphi 0, %s35
    %s57 = sphi 0, %s59
    %s60 = sphi 0, %s57
    %s61 = sphi 0, %s60
    %s77 = sphi 0, %s61
    %s81 = sphi 0, %s81
    %s83 = sphi 0, %s81
    %s84 = sphi 0, %s83
    %s98 = sphi 0, %s84
    %s102 = sphi 0, %s102
    %s104 = sphi 0, %s102
    %s105 = sphi 0, %s104
    %s119 = sphi 0, %s105
    %s123 = sphi 0, %s123
    %s125 = sphi 0, %s123
    %s126 = sphi 0, %s125
    %s140 = sphi 0, %s126
    %s144 = sphi 0, %s144
    %s146 = sphi 0, %s144
    %s147 = sphi 0, %s146
    %s161 = sphi 0, %s147
    %s165 = sphi 0, %s165
    %s167 = sphi 0, %s165
    %s168 = sphi 0, %s167
    %s182 = sphi 0, %s168
    %s186 = sphi 0, %s186
    %s188 = sphi 0, %s186
    %s189 = sphi 0, %s188
    %s203 = sphi 0, %s189
    %s207 = sphi 0, %s207
    %s209 = sphi 0, %s207
    %s210 = sphi 0, %s209
    %s224 = sphi 0, %s210
    %s228 = sphi 0, %s228
    %s230 = sphi 0, %s228
    %s231 = sphi 0, %s230
    %s245 = sphi 0, %s231
    %s249 = sphi 0, %s249
    %s251 = sphi 0, %s249
    %s252 = sphi 0, %s251
    %s266 = sphi 0, %s252
    %s270 = sphi 0, %s270
    %s272 = sphi 0, %s270
    %s273 = sphi 0, %s272
    %s287 = sphi 0, %s273
    %s291 = sphi 0, %s291
    %s293 = sphi 0, %s291
    %s294 = sphi 0, %s293
    %s308 = sphi 0, %s294
    %s312 = sphi 0, %s312
    %s314 = sphi 0, %s312
    %s315 = sphi 0, %s314
    %s329 = sphi 0, %s315
    %s335 = sphi 0, %s337
    %s338 = sphi 0, %s335
    %s339 = sphi 0, %s338
    %s355 = sphi 0, %s339
  $region4: #{tpu_custom_call.1} parent=0 // loop_header_branch
    %24 = sbr.rel (%p22) target = $region8
  $region5: #{tpu_custom_call.1} parent=0 // loop_body
    %s26 = ssub.s32 %s21, 1
    %s27 = ssub.s32 %s21, 2
    %s28 = sadd.s32 %s21, 1
    %s29 = ssub.s32 %s21, %s28
    %p30 = scmp.eq.s32.totalorder %s29, 0
    %s32 = sadd.s32 %s31, 1
    %s33 = scalar_select %p30, %s31, %s32
    %p36 = pneg %p30
    %p37 = scmp.eq.s32.totalorder %s21, 1
    %p38 = por %p36, %p37
    %p39 = scmp.ne.s32.totalorder %s31, %s34
    %p40 = scmp.eq.s32.totalorder %s21, 0
    %p41 = por %p39, %p40
    %p42 = scmp.ne.s32.totalorder %s31, %s34
    %p43 = scmp.eq.s32.totalorder %s26, 1
    %p44 = por %p42, %p43
    %p45 = scmp.ne.s32.totalorder %s34, %s35
    %p46 = scmp.eq.s32.totalorder %s26, 0
    %p47 = por %p45, %p46
    %p48 = scmp.ne.s32.totalorder %s34, %s35
    %p49 = scmp.eq.s32.totalorder %s27, 1
    %p50 = por %p48, %p49
    %p52 = scmp.ne.s32.totalorder %s35, %s51
    %p53 = scmp.eq.s32.totalorder %s27, 0
    %p54 = por %p52, %p53
    %s55 = ssub.s32 %s21, %s28
    %p56 = scmp.eq.s32.totalorder %s55, 0
    %s58 = sadd.s32 %s57, 1
    %s59 = scalar_select %p56, %s57, %s58
    %p62 = pneg %p56
    %p63 = scmp.eq.s32.totalorder %s21, 1
    %p64 = por %p62, %p63
    %p65 = scmp.ne.s32.totalorder %s57, %s60
    %p66 = scmp.eq.s32.totalorder %s21, 0
    %p67 = por %p65, %p66
    %p68 = scmp.ne.s32.totalorder %s57, %s60
    %p69 = scmp.eq.s32.totalorder %s26, 1
    %p70 = por %p68, %p69
    %p71 = scmp.ne.s32.totalorder %s60, %s61
    %p72 = scmp.eq.s32.totalorder %s26, 0
    %p73 = por %p71, %p72
    %p74 = scmp.ne.s32.totalorder %s60, %s61
    %p75 = scmp.eq.s32.totalorder %s27, 1
    %p76 = por %p74, %p75
    %p78 = scmp.ne.s32.totalorder %s61, %s77
    %p79 = scmp.eq.s32.totalorder %s27, 0
    %p80 = por %p78, %p79
    %s82 = sadd.s32 %s81, 1
    %p85 = scmp.eq.s32.totalorder %s21, 1
    %p86 = scmp.ne.s32.totalorder %s81, %s83
    %p87 = scmp.eq.s32.totalorder %s21, 0
    %p88 = por %p86, %p87
    %p89 = scmp.ne.s32.totalorder %s81, %s83
    %p90 = scmp.eq.s32.totalorder %s26, 1
    %p91 = por %p89, %p90
    %p92 = scmp.ne.s32.totalorder %s83, %s84
    %p93 = scmp.eq.s32.totalorder %s26, 0
    %p94 = por %p92, %p93
    %p95 = scmp.ne.s32.totalorder %s83, %s84
    %p96 = scmp.eq.s32.totalorder %s27, 1
    %p97 = por %p95, %p96
    %p99 = scmp.ne.s32.totalorder %s84, %s98
    %p100 = scmp.eq.s32.totalorder %s27, 0
    %p101 = por %p99, %p100
    %s103 = sadd.s32 %s102, 1
    %p106 = scmp.eq.s32.totalorder %s21, 1
    %p107 = scmp.ne.s32.totalorder %s102, %s104
    %p108 = scmp.eq.s32.totalorder %s21, 0
    %p109 = por %p107, %p108
    %p110 = scmp.ne.s32.totalorder %s102, %s104
    %p111 = scmp.eq.s32.totalorder %s26, 1
    %p112 = por %p110, %p111
    %p113 = scmp.ne.s32.totalorder %s104, %s105
    %p114 = scmp.eq.s32.totalorder %s26, 0
    %p115 = por %p113, %p114
    %p116 = scmp.ne.s32.totalorder %s104, %s105
    %p117 = scmp.eq.s32.totalorder %s27, 1
    %p118 = por %p116, %p117
    %p120 = scmp.ne.s32.totalorder %s105, %s119
    %p121 = scmp.eq.s32.totalorder %s27, 0
    %p122 = por %p120, %p121
    %s124 = sadd.s32 %s123, 1
    %p127 = scmp.eq.s32.totalorder %s21, 1
    %p128 = scmp.ne.s32.totalorder %s123, %s125
    %p129 = scmp.eq.s32.totalorder %s21, 0
    %p130 = por %p128, %p129
    %p131 = scmp.ne.s32.totalorder %s123, %s125
    %p132 = scmp.eq.s32.totalorder %s26, 1
    %p133 = por %p131, %p132
    %p134 = scmp.ne.s32.totalorder %s125, %s126
    %p135 = scmp.eq.s32.totalorder %s26, 0
    %p136 = por %p134, %p135
    %p137 = scmp.ne.s32.totalorder %s125, %s126
    %p138 = scmp.eq.s32.totalorder %s27, 1
    %p139 = por %p137, %p138
    %p141 = scmp.ne.s32.totalorder %s126, %s140
    %p142 = scmp.eq.s32.totalorder %s27, 0
    %p143 = por %p141, %p142
    %s145 = sadd.s32 %s144, 1
    %p148 = scmp.eq.s32.totalorder %s21, 1
    %p149 = scmp.ne.s32.totalorder %s144, %s146
    %p150 = scmp.eq.s32.totalorder %s21, 0
    %p151 = por %p149, %p150
    %p152 = scmp.ne.s32.totalorder %s144, %s146
    %p153 = scmp.eq.s32.totalorder %s26, 1
    %p154 = por %p152, %p153
    %p155 = scmp.ne.s32.totalorder %s146, %s147
    %p156 = scmp.eq.s32.totalorder %s26, 0
    %p157 = por %p155, %p156
    %p158 = scmp.ne.s32.totalorder %s146, %s147
    %p159 = scmp.eq.s32.totalorder %s27, 1
    %p160 = por %p158, %p159
    %p162 = scmp.ne.s32.totalorder %s147, %s161
    %p163 = scmp.eq.s32.totalorder %s27, 0
    %p164 = por %p162, %p163
    %s166 = sadd.s32 %s165, 1
    %p169 = scmp.eq.s32.totalorder %s21, 1
    %p170 = scmp.ne.s32.totalorder %s165, %s167
    %p171 = scmp.eq.s32.totalorder %s21, 0
    %p172 = por %p170, %p171
    %p173 = scmp.ne.s32.totalorder %s165, %s167
    %p174 = scmp.eq.s32.totalorder %s26, 1
    %p175 = por %p173, %p174
    %p176 = scmp.ne.s32.totalorder %s167, %s168
    %p177 = scmp.eq.s32.totalorder %s26, 0
    %p178 = por %p176, %p177
    %p179 = scmp.ne.s32.totalorder %s167, %s168
    %p180 = scmp.eq.s32.totalorder %s27, 1
    %p181 = por %p179, %p180
    %p183 = scmp.ne.s32.totalorder %s168, %s182
    %p184 = scmp.eq.s32.totalorder %s27, 0
    %p185 = por %p183, %p184
    %s187 = sadd.s32 %s186, 1
    %p190 = scmp.eq.s32.totalorder %s21, 1
    %p191 = scmp.ne.s32.totalorder %s186, %s188
    %p192 = scmp.eq.s32.totalorder %s21, 0
    %p193 = por %p191, %p192
    %p194 = scmp.ne.s32.totalorder %s186, %s188
    %p195 = scmp.eq.s32.totalorder %s26, 1
    %p196 = por %p194, %p195
    %p197 = scmp.ne.s32.totalorder %s188, %s189
    %p198 = scmp.eq.s32.totalorder %s26, 0
    %p199 = por %p197, %p198
    %p200 = scmp.ne.s32.totalorder %s188, %s189
    %p201 = scmp.eq.s32.totalorder %s27, 1
    %p202 = por %p200, %p201
    %p204 = scmp.ne.s32.totalorder %s189, %s203
    %p205 = scmp.eq.s32.totalorder %s27, 0
    %p206 = por %p204, %p205
    %s208 = sadd.s32 %s207, 1
    %p211 = scmp.eq.s32.totalorder %s21, 1
    %p212 = scmp.ne.s32.totalorder %s207, %s209
    %p213 = scmp.eq.s32.totalorder %s21, 0
    %p214 = por %p212, %p213
    %p215 = scmp.ne.s32.totalorder %s207, %s209
    %p216 = scmp.eq.s32.totalorder %s26, 1
    %p217 = por %p215, %p216
    %p218 = scmp.ne.s32.totalorder %s209, %s210
    %p219 = scmp.eq.s32.totalorder %s26, 0
    %p220 = por %p218, %p219
    %p221 = scmp.ne.s32.totalorder %s209, %s210
    %p222 = scmp.eq.s32.totalorder %s27, 1
    %p223 = por %p221, %p222
    %p225 = scmp.ne.s32.totalorder %s210, %s224
    %p226 = scmp.eq.s32.totalorder %s27, 0
    %p227 = por %p225, %p226
    %s229 = sadd.s32 %s228, 1
    %p232 = scmp.eq.s32.totalorder %s21, 1
    %p233 = scmp.ne.s32.totalorder %s228, %s230
    %p234 = scmp.eq.s32.totalorder %s21, 0
    %p235 = por %p233, %p234
    %p236 = scmp.ne.s32.totalorder %s228, %s230
    %p237 = scmp.eq.s32.totalorder %s26, 1
    %p238 = por %p236, %p237
    %p239 = scmp.ne.s32.totalorder %s230, %s231
    %p240 = scmp.eq.s32.totalorder %s26, 0
    %p241 = por %p239, %p240
    %p242 = scmp.ne.s32.totalorder %s230, %s231
    %p243 = scmp.eq.s32.totalorder %s27, 1
    %p244 = por %p242, %p243
    %p246 = scmp.ne.s32.totalorder %s231, %s245
    %p247 = scmp.eq.s32.totalorder %s27, 0
    %p248 = por %p246, %p247
    %s250 = sadd.s32 %s249, 1
    %p253 = scmp.eq.s32.totalorder %s21, 1
    %p254 = scmp.ne.s32.totalorder %s249, %s251
    %p255 = scmp.eq.s32.totalorder %s21, 0
    %p256 = por %p254, %p255
    %p257 = scmp.ne.s32.totalorder %s249, %s251
    %p258 = scmp.eq.s32.totalorder %s26, 1
    %p259 = por %p257, %p258
    %p260 = scmp.ne.s32.totalorder %s251, %s252
    %p261 = scmp.eq.s32.totalorder %s26, 0
    %p262 = por %p260, %p261
    %p263 = scmp.ne.s32.totalorder %s251, %s252
    %p264 = scmp.eq.s32.totalorder %s27, 1
    %p265 = por %p263, %p264
    %p267 = scmp.ne.s32.totalorder %s252, %s266
    %p268 = scmp.eq.s32.totalorder %s27, 0
    %p269 = por %p267, %p268
    %s271 = sadd.s32 %s270, 1
    %p274 = scmp.eq.s32.totalorder %s21, 1
    %p275 = scmp.ne.s32.totalorder %s270, %s272
    %p276 = scmp.eq.s32.totalorder %s21, 0
    %p277 = por %p275, %p276
    %p278 = scmp.ne.s32.totalorder %s270, %s272
    %p279 = scmp.eq.s32.totalorder %s26, 1
    %p280 = por %p278, %p279
    %p281 = scmp.ne.s32.totalorder %s272, %s273
    %p282 = scmp.eq.s32.totalorder %s26, 0
    %p283 = por %p281, %p282
    %p284 = scmp.ne.s32.totalorder %s272, %s273
    %p285 = scmp.eq.s32.totalorder %s27, 1
    %p286 = por %p284, %p285
    %p288 = scmp.ne.s32.totalorder %s273, %s287
    %p289 = scmp.eq.s32.totalorder %s27, 0
    %p290 = por %p288, %p289
    %s292 = sadd.s32 %s291, 1
    %p295 = scmp.eq.s32.totalorder %s21, 1
    %p296 = scmp.ne.s32.totalorder %s291, %s293
    %p297 = scmp.eq.s32.totalorder %s21, 0
    %p298 = por %p296, %p297
    %p299 = scmp.ne.s32.totalorder %s291, %s293
    %p300 = scmp.eq.s32.totalorder %s26, 1
    %p301 = por %p299, %p300
    %p302 = scmp.ne.s32.totalorder %s293, %s294
    %p303 = scmp.eq.s32.totalorder %s26, 0
    %p304 = por %p302, %p303
    %p305 = scmp.ne.s32.totalorder %s293, %s294
    %p306 = scmp.eq.s32.totalorder %s27, 1
    %p307 = por %p305, %p306
    %p309 = scmp.ne.s32.totalorder %s294, %s308
    %p310 = scmp.eq.s32.totalorder %s27, 0
    %p311 = por %p309, %p310
    %s313 = sadd.s32 %s312, 1
    %p316 = scmp.eq.s32.totalorder %s21, 1
    %p317 = scmp.ne.s32.totalorder %s312, %s314
    %p318 = scmp.eq.s32.totalorder %s21, 0
    %p319 = por %p317, %p318
    %p320 = scmp.ne.s32.totalorder %s312, %s314
    %p321 = scmp.eq.s32.totalorder %s26, 1
    %p322 = por %p320, %p321
    %p323 = scmp.ne.s32.totalorder %s314, %s315
    %p324 = scmp.eq.s32.totalorder %s26, 0
    %p325 = por %p323, %p324
    %p326 = scmp.ne.s32.totalorder %s314, %s315
    %p327 = scmp.eq.s32.totalorder %s27, 1
    %p328 = por %p326, %p327
    %p330 = scmp.ne.s32.totalorder %s315, %s329
    %p331 = scmp.eq.s32.totalorder %s27, 0
    %p332 = por %p330, %p331
    %s333 = ssub.s32 %s21, %s28
    %p334 = scmp.eq.s32.totalorder %s333, 0
    %s336 = sadd.s32 %s335, 1
    %s337 = scalar_select %p334, %s335, %s336
    %p340 = pneg %p334
    %p341 = scmp.eq.s32.totalorder %s21, 1
    %p342 = por %p340, %p341
    %p343 = scmp.ne.s32.totalorder %s335, %s338
    %p344 = scmp.eq.s32.totalorder %s21, 0
    %p345 = por %p343, %p344
    %p346 = scmp.ne.s32.totalorder %s335, %s338
    %p347 = scmp.eq.s32.totalorder %s26, 1
    %p348 = por %p346, %p347
    %p349 = scmp.ne.s32.totalorder %s338, %s339
    %p350 = scmp.eq.s32.totalorder %s26, 0
    %p351 = por %p349, %p350
    %p352 = scmp.ne.s32.totalorder %s338, %s339
    %p353 = scmp.eq.s32.totalorder %s27, 1
    %p354 = por %p352, %p353
    %p356 = scmp.ne.s32.totalorder %s339, %s355
    %p357 = scmp.eq.s32.totalorder %s27, 0
    %p358 = por %p356, %p357
    %p359 = scmp.le.s32.totalorder 1, %s21
    %p360 = scmp.lt.s32.totalorder %s21, 3
    %p361 = pnand %p359, %p360
    %p362 = pneg %p361
    // Predicated region
    $region9: #{tpu_custom_call.1} parent=5 // pred_check
      _
    $region10: #{tpu_custom_call.1} parent=5 // pred_check_branch
      %364 = sbr.rel (%p361) target = $region12
    $region11: #{tpu_custom_call.1} parent=5 // pred_region
      %s365 = ssub.s32 %s21, 1
      // Predicated region
      $region13: #{tpu_custom_call.1} parent=11 // pred_check
        %p366 = pneg %p94
      $region14: #{tpu_custom_call.1} parent=11 // pred_check_branch
        %368 = sbr.rel (%p366) target = $region16
      $region15: #{tpu_custom_call.1} parent=11 // pred_region
        _
      $region16: #{tpu_custom_call.1} parent=11 // pred_fallthru
        _
      // Predicated region
      $region17: #{tpu_custom_call.1} parent=11 // pred_check
        %p369 = pneg %p115
      $region18: #{tpu_custom_call.1} parent=11 // pred_check_branch
        %371 = sbr.rel (%p369) target = $region20
      $region19: #{tpu_custom_call.1} parent=11 // pred_region
        _
      $region20: #{tpu_custom_call.1} parent=11 // pred_fallthru
        _
      // Predicated region
      $region21: #{tpu_custom_call.1} parent=11 // pred_check
        %p372 = pneg %p136
      $region22: #{tpu_custom_call.1} parent=11 // pred_check_branch
        %374 = sbr.rel (%p372) target = $region24
      $region23: #{tpu_custom_call.1} parent=11 // pred_region
        _
      $region24: #{tpu_custom_call.1} parent=11 // pred_fallthru
        _
      // Predicated region
      $region25: #{tpu_custom_call.1} parent=11 // pred_check
        %p375 = pneg %p157
      $region26: #{tpu_custom_call.1} parent=11 // pred_check_branch
        %377 = sbr.rel (%p375) target = $region28
      $region27: #{tpu_custom_call.1} parent=11 // pred_region
        _
      $region28: #{tpu_custom_call.1} parent=11 // pred_fallthru
        _
      // Predicated region
      $region29: #{tpu_custom_call.1} parent=11 // pred_check
        %p378 = pneg %p178
      $region30: #{tpu_custom_call.1} parent=11 // pred_check_branch
        %380 = sbr.rel (%p378) target = $region32
      $region31: #{tpu_custom_call.1} parent=11 // pred_region
        _
      $region32: #{tpu_custom_call.1} parent=11 // pred_fallthru
        _
      // Predicated region
      $region33: #{tpu_custom_call.1} parent=11 // pred_check
        %p381 = pneg %p199
      $region34: #{tpu_custom_call.1} parent=11 // pred_check_branch
        %383 = sbr.rel (%p381) target = $region36
      $region35: #{tpu_custom_call.1} parent=11 // pred_region
        _
      $region36: #{tpu_custom_call.1} parent=11 // pred_fallthru
        _
      // Predicated region
      $region37: #{tpu_custom_call.1} parent=11 // pred_check
        %p384 = pneg %p220
      $region38: #{tpu_custom_call.1} parent=11 // pred_check_branch
        %386 = sbr.rel (%p384) target = $region40
      $region39: #{tpu_custom_call.1} parent=11 // pred_region
        _
      $region40: #{tpu_custom_call.1} parent=11 // pred_fallthru
        _
      // Predicated region
      $region41: #{tpu_custom_call.1} parent=11 // pred_check
        %p387 = pneg %p241
      $region42: #{tpu_custom_call.1} parent=11 // pred_check_branch
        %389 = sbr.rel (%p387) target = $region44
      $region43: #{tpu_custom_call.1} parent=11 // pred_region
        _
      $region44: #{tpu_custom_call.1} parent=11 // pred_fallthru
        _
      // Predicated region
      $region45: #{tpu_custom_call.1} parent=11 // pred_check
        %p390 = pneg %p262
      $region46: #{tpu_custom_call.1} parent=11 // pred_check_branch
        %392 = sbr.rel (%p390) target = $region48
      $region47: #{tpu_custom_call.1} parent=11 // pred_region
        _
      $region48: #{tpu_custom_call.1} parent=11 // pred_fallthru
        _
      // Predicated region
      $region49: #{tpu_custom_call.1} parent=11 // pred_check
        %p393 = pneg %p283
      $region50: #{tpu_custom_call.1} parent=11 // pred_check_branch
        %395 = sbr.rel (%p393) target = $region52
      $region51: #{tpu_custom_call.1} parent=11 // pred_region
        _
      $region52: #{tpu_custom_call.1} parent=11 // pred_fallthru
        _
      // Predicated region
      $region53: #{tpu_custom_call.1} parent=11 // pred_check
        %p396 = pneg %p304
      $region54: #{tpu_custom_call.1} parent=11 // pred_check_branch
        %398 = sbr.rel (%p396) target = $region56
      $region55: #{tpu_custom_call.1} parent=11 // pred_region
        _
      $region56: #{tpu_custom_call.1} parent=11 // pred_fallthru
        _
      // Predicated region
      $region57: #{tpu_custom_call.1} parent=11 // pred_check
        %p399 = pneg %p325
      $region58: #{tpu_custom_call.1} parent=11 // pred_check_branch
        %401 = sbr.rel (%p399) target = $region60
      $region59: #{tpu_custom_call.1} parent=11 // pred_region
        _
      $region60: #{tpu_custom_call.1} parent=11 // pred_fallthru
        _
    $region12: #{tpu_custom_call.1} parent=5 // pred_fallthru
      _
    %p402 = scmp.lt.s32.totalorder %s21, 2
    // Predicated region
    $region61: #{tpu_custom_call.1} parent=5 // pred_check
      %p403 = pneg %p402
    $region62: #{tpu_custom_call.1} parent=5 // pred_check_branch
      %405 = sbr.rel (%p403) target = $region64
    $region63: #{tpu_custom_call.1} parent=5 // pred_region
      // Predicated region
      $region65: #{tpu_custom_call.1} parent=63 // pred_check
        %p406 = pneg %p41
      $region66: #{tpu_custom_call.1} parent=63 // pred_check_branch
        %408 = sbr.rel (%p406) target = $region68
      $region67: #{tpu_custom_call.1} parent=63 // pred_region
        %s409 = smul.u32 32, %s21
        %p410 = scmp.lt.s32.totalorder %s409, 63
        %s411 = scalar_select %p410, %s409, 63
        %s412 = smul.addr %s411, 8
        %s413 = scalar_lea.vmem %s0, %s412
        %s414 = smul.u32 32, %s21
      $region68: #{tpu_custom_call.1} parent=63 // pred_fallthru
        _
      // Predicated region
      $region69: #{tpu_custom_call.1} parent=63 // pred_check
        %p415 = pneg %p67
      $region70: #{tpu_custom_call.1} parent=63 // pred_check_branch
        %417 = sbr.rel (%p415) target = $region72
      $region71: #{tpu_custom_call.1} parent=63 // pred_region
        %s418 = smul.u32 32, %s21
        %p419 = scmp.lt.s32.totalorder %s418, 63
        %s420 = scalar_select %p419, %s418, 63
        %s421 = smul.addr %s420, 8
        %s422 = scalar_lea.vmem %s1, %s421
        %s423 = smul.u32 32, %s21
      $region72: #{tpu_custom_call.1} parent=63 // pred_fallthru
        _
    $region64: #{tpu_custom_call.1} parent=5 // pred_fallthru
      _
    %p424 = scmp.le.s32.totalorder 1, %s21
    %p425 = scmp.lt.s32.totalorder %s21, 3
    %p426 = pnand %p424, %p425
    %p427 = pneg %p426
    // Predicated region
    $region73: #{tpu_custom_call.1} parent=5 // pred_check
      _
    $region74: #{tpu_custom_call.1} parent=5 // pred_check_branch
      %429 = sbr.rel (%p426) target = $region76
    $region75: #{tpu_custom_call.1} parent=5 // pred_region
      %s430 = ssub.s32 %s21, 1
      %s431 = smul.u32 32, %s26
      %p432 = scmp.lt.s32.totalorder %s431, 63
      %s433 = scalar_select %p432, %s431, 63
      %s434 = smul.addr %s433, 8
      %s435 = scalar_lea.vmem %s0, %s434
      %p436 = pneg %p47
      %p437 = pneg %p44
      %s438 = smul.u32 32, %s26
      %p439 = scmp.lt.s32.totalorder %s438, 63
      %s440 = scalar_select %p439, %s438, 63
      %s441 = smul.addr %s440, 8
      %s442 = scalar_lea.vmem %s1, %s441
      %p443 = pneg %p73
      %p444 = pneg %p70
      %p445 = pneg %p94
      %p446 = pneg %p91
      %p447 = pneg %p115
      %p448 = pneg %p112
      %p449 = pneg %p136
      %p450 = pneg %p133
      %p451 = pneg %p157
      %p452 = pneg %p154
      %p453 = pneg %p178
      %p454 = pneg %p175
      %p455 = pneg %p199
      %p456 = pneg %p196
      %p457 = pneg %p220
      %p458 = pneg %p217
      %p459 = pneg %p241
      %p460 = pneg %p238
      %p461 = pneg %p262
      %p462 = pneg %p259
      %p463 = pneg %p283
      %p464 = pneg %p280
      %p465 = pneg %p304
      %p466 = pneg %p301
      %p467 = pneg %p325
      %p468 = pneg %p322
      %p469 = pneg %p351
      %p470 = pneg %p348
      %s471 = smul.u32 32, %s26
      %p472 = scmp.lt.s32.totalorder %s471, 63
      %s473 = scalar_select %p472, %s471, 63
      %s474 = smul.addr %s473, 8
      %s475 = scalar_lea.vmem %s14, %s474
      %s476 = smul.u32 32, %s26
      %p477 = scmp.lt.s32.totalorder %s476, 63
      %s478 = scalar_select %p477, %s476, 63
      %s479 = smul.addr %s478, 8
      %s480 = scalar_lea.vmem %s0, %s479
      %s481 = smul.u32 32, %s26
      %s482 = smul.u32 32, %s26
      %p483 = scmp.lt.s32.totalorder %s482, 63
      %s484 = scalar_select %p483, %s482, 63
      %s485 = smul.addr %s484, 8
      %s486 = scalar_lea.vmem %s1, %s485
      %s487 = smul.u32 32, %s26
      %s488 = smul.u32 32, %s26
      %p489 = scmp.lt.s32.totalorder %s488, 63
      %s490 = scalar_select %p489, %s488, 63
      %s491 = smul.addr %s490, 8
      %s492 = scalar_lea.vmem %s14, %s491
      %s493 = smul.u32 32, %s26
      %v494 = vld [vmem:[%s480] sm:$0xff]
      %v495 = vld [vmem:[%s480 + $0x8] sm:$0xff]
      %v496 = vld [vmem:[%s480 + $0x10] sm:$0xff]
      %v497 = vld [vmem:[%s480 + $0x18] sm:$0xff]
      %v498 = vld [vmem:[%s480 + $0x20] sm:$0xff]
      %v499 = vld [vmem:[%s480 + $0x28] sm:$0xff]
      %v500 = vld [vmem:[%s480 + $0x30] sm:$0xff]
      %v501 = vld [vmem:[%s480 + $0x38] sm:$0xff]
      %v502 = vld [vmem:[%s480 + $0x40] sm:$0xff]
      %v503 = vld [vmem:[%s480 + $0x48] sm:$0xff]
      %v504 = vld [vmem:[%s480 + $0x50] sm:$0xff]
      %v505 = vld [vmem:[%s480 + $0x58] sm:$0xff]
      %v506 = vld [vmem:[%s480 + $0x60] sm:$0xff]
      %v507 = vld [vmem:[%s480 + $0x68] sm:$0xff]
      %v508 = vld [vmem:[%s480 + $0x70] sm:$0xff]
      %v509 = vld [vmem:[%s480 + $0x78] sm:$0xff]
      %v510 = vld [vmem:[%s480 + $0x80] sm:$0xff]
      %v511 = vld [vmem:[%s480 + $0x88] sm:$0xff]
      %v512 = vld [vmem:[%s480 + $0x90] sm:$0xff]
      %v513 = vld [vmem:[%s480 + $0x98] sm:$0xff]
      %v514 = vld [vmem:[%s480 + $0xa0] sm:$0xff]
      %v515 = vld [vmem:[%s480 + $0xa8] sm:$0xff]
      %v516 = vld [vmem:[%s480 + $0xb0] sm:$0xff]
      %v517 = vld [vmem:[%s480 + $0xb8] sm:$0xff]
      %v518 = vld [vmem:[%s480 + $0xc0] sm:$0xff]
      %v519 = vld [vmem:[%s480 + $0xc8] sm:$0xff]
      %v520 = vld [vmem:[%s480 + $0xd0] sm:$0xff]
      %v521 = vld [vmem:[%s480 + $0xd8] sm:$0xff]
      %v522 = vld [vmem:[%s480 + $0xe0] sm:$0xff]
      %v523 = vld [vmem:[%s480 + $0xe8] sm:$0xff]
      %v524 = vld [vmem:[%s480 + $0xf0] sm:$0xff]
      %v525 = vld [vmem:[%s480 + $0xf8] sm:$0xff]
      %v526 = vld [vmem:[%s486] sm:$0xff]
      %v527 = vld [vmem:[%s486 + $0x8] sm:$0xff]
      %v528 = vld [vmem:[%s486 + $0x10] sm:$0xff]
      %v529 = vld [vmem:[%s486 + $0x18] sm:$0xff]
      %v530 = vld [vmem:[%s486 + $0x20] sm:$0xff]
      %v531 = vld [vmem:[%s486 + $0x28] sm:$0xff]
      %v532 = vld [vmem:[%s486 + $0x30] sm:$0xff]
      %v533 = vld [vmem:[%s486 + $0x38] sm:$0xff]
      %v534 = vld [vmem:[%s486 + $0x40] sm:$0xff]
      %v535 = vld [vmem:[%s486 + $0x48] sm:$0xff]
      %v536 = vld [vmem:[%s486 + $0x50] sm:$0xff]
      %v537 = vld [vmem:[%s486 + $0x58] sm:$0xff]
      %v538 = vld [vmem:[%s486 + $0x60] sm:$0xff]
      %v539 = vld [vmem:[%s486 + $0x68] sm:$0xff]
      %v540 = vld [vmem:[%s486 + $0x70] sm:$0xff]
      %v541 = vld [vmem:[%s486 + $0x78] sm:$0xff]
      %v542 = vld [vmem:[%s486 + $0x80] sm:$0xff]
      %v543 = vld [vmem:[%s486 + $0x88] sm:$0xff]
      %v544 = vld [vmem:[%s486 + $0x90] sm:$0xff]
      %v545 = vld [vmem:[%s486 + $0x98] sm:$0xff]
      %v546 = vld [vmem:[%s486 + $0xa0] sm:$0xff]
      %v547 = vld [vmem:[%s486 + $0xa8] sm:$0xff]
      %v548 = vld [vmem:[%s486 + $0xb0] sm:$0xff]
      %v549 = vld [vmem:[%s486 + $0xb8] sm:$0xff]
      %v550 = vld [vmem:[%s486 + $0xc0] sm:$0xff]
      %v551 = vld [vmem:[%s486 + $0xc8] sm:$0xff]
      %v552 = vld [vmem:[%s486 + $0xd0] sm:$0xff]
      %v553 = vld [vmem:[%s486 + $0xd8] sm:$0xff]
      %v554 = vld [vmem:[%s486 + $0xe0] sm:$0xff]
      %v555 = vld [vmem:[%s486 + $0xe8] sm:$0xff]
      %v556 = vld [vmem:[%s486 + $0xf0] sm:$0xff]
      %v557 = vld [vmem:[%s486 + $0xf8] sm:$0xff]
      %v558 = vlaneseq
      %v559 = vand.u32 %v558, 127
      %560 = vset.pattern.permute.xlu0 0
      %561 = vperm.xlu0 %560, %v494
      %v562 = vpop.permute.xlu0 %561
      %563 = vset.pattern.permute.xlu0 0
      %564 = vperm.xlu0 %563, %v495
      %v565 = vpop.permute.xlu0 %564
      %566 = vset.pattern.permute.xlu0 0
      %567 = vperm.xlu0 %566, %v496
      %v568 = vpop.permute.xlu0 %567
      %569 = vset.pattern.permute.xlu0 0
      %570 = vperm.xlu0 %569, %v497
      %v571 = vpop.permute.xlu0 %570
      %572 = vset.pattern.permute.xlu0 0
      %573 = vperm.xlu0 %572, %v498
      %v574 = vpop.permute.xlu0 %573
      %575 = vset.pattern.permute.xlu0 0
      %576 = vperm.xlu0 %575, %v499
      %v577 = vpop.permute.xlu0 %576
      %578 = vset.pattern.permute.xlu0 0
      %579 = vperm.xlu0 %578, %v500
      %v580 = vpop.permute.xlu0 %579
      %581 = vset.pattern.permute.xlu0 0
      %582 = vperm.xlu0 %581, %v501
      %v583 = vpop.permute.xlu0 %582
      %584 = vset.pattern.permute.xlu0 0
      %585 = vperm.xlu0 %584, %v502
      %v586 = vpop.permute.xlu0 %585
      %587 = vset.pattern.permute.xlu0 0
      %588 = vperm.xlu0 %587, %v503
      %v589 = vpop.permute.xlu0 %588
      %590 = vset.pattern.permute.xlu0 0
      %591 = vperm.xlu0 %590, %v504
      %v592 = vpop.permute.xlu0 %591
      %593 = vset.pattern.permute.xlu0 0
      %594 = vperm.xlu0 %593, %v505
      %v595 = vpop.permute.xlu0 %594
      %596 = vset.pattern.permute.xlu0 0
      %597 = vperm.xlu0 %596, %v506
      %v598 = vpop.permute.xlu0 %597
      %599 = vset.pattern.permute.xlu0 0
      %600 = vperm.xlu0 %599, %v507
      %v601 = vpop.permute.xlu0 %600
      %602 = vset.pattern.permute.xlu0 0
      %603 = vperm.xlu0 %602, %v508
      %v604 = vpop.permute.xlu0 %603
      %605 = vset.pattern.permute.xlu0 0
      %606 = vperm.xlu0 %605, %v509
      %v607 = vpop.permute.xlu0 %606
      %608 = vset.pattern.permute.xlu0 0
      %609 = vperm.xlu0 %608, %v510
      %v610 = vpop.permute.xlu0 %609
      %611 = vset.pattern.permute.xlu0 0
      %612 = vperm.xlu0 %611, %v511
      %v613 = vpop.permute.xlu0 %612
      %614 = vset.pattern.permute.xlu0 0
      %615 = vperm.xlu0 %614, %v512
      %v616 = vpop.permute.xlu0 %615
      %617 = vset.pattern.permute.xlu0 0
      %618 = vperm.xlu0 %617, %v513
      %v619 = vpop.permute.xlu0 %618
      %620 = vset.pattern.permute.xlu0 0
      %621 = vperm.xlu0 %620, %v514
      %v622 = vpop.permute.xlu0 %621
      %623 = vset.pattern.permute.xlu0 0
      %624 = vperm.xlu0 %623, %v515
      %v625 = vpop.permute.xlu0 %624
      %626 = vset.pattern.permute.xlu0 0
      %627 = vperm.xlu0 %626, %v516
      %v628 = vpop.permute.xlu0 %627
      %629 = vset.pattern.permute.xlu0 0
      %630 = vperm.xlu0 %629, %v517
      %v631 = vpop.permute.xlu0 %630
      %632 = vset.pattern.permute.xlu0 0
      %633 = vperm.xlu0 %632, %v518
      %v634 = vpop.permute.xlu0 %633
      %635 = vset.pattern.permute.xlu0 0
      %636 = vperm.xlu0 %635, %v519
      %v637 = vpop.permute.xlu0 %636
      %638 = vset.pattern.permute.xlu0 0
      %639 = vperm.xlu0 %638, %v520
      %v640 = vpop.permute.xlu0 %639
      %641 = vset.pattern.permute.xlu0 0
      %642 = vperm.xlu0 %641, %v521
      %v643 = vpop.permute.xlu0 %642
      %644 = vset.pattern.permute.xlu0 0
      %645 = vperm.xlu0 %644, %v522
      %v646 = vpop.permute.xlu0 %645
      %647 = vset.pattern.permute.xlu0 0
      %648 = vperm.xlu0 %647, %v523
      %v649 = vpop.permute.xlu0 %648
      %650 = vset.pattern.permute.xlu0 0
      %651 = vperm.xlu0 %650, %v524
      %v652 = vpop.permute.xlu0 %651
      %653 = vset.pattern.permute.xlu0 0
      %654 = vperm.xlu0 %653, %v525
      %v655 = vpop.permute.xlu0 %654
      %vm656 = vcmp.eq.s32.totalorder %v562, %v559
      %vm657 = vcmp.eq.s32.totalorder %v565, %v559
      %vm658 = vcmp.eq.s32.totalorder %v568, %v559
      %vm659 = vcmp.eq.s32.totalorder %v571, %v559
      %vm660 = vcmp.eq.s32.totalorder %v574, %v559
      %vm661 = vcmp.eq.s32.totalorder %v577, %v559
      %vm662 = vcmp.eq.s32.totalorder %v580, %v559
      %vm663 = vcmp.eq.s32.totalorder %v583, %v559
      %vm664 = vcmp.eq.s32.totalorder %v586, %v559
      %vm665 = vcmp.eq.s32.totalorder %v589, %v559
      %vm666 = vcmp.eq.s32.totalorder %v592, %v559
      %vm667 = vcmp.eq.s32.totalorder %v595, %v559
      %vm668 = vcmp.eq.s32.totalorder %v598, %v559
      %vm669 = vcmp.eq.s32.totalorder %v601, %v559
      %vm670 = vcmp.eq.s32.totalorder %v604, %v559
      %vm671 = vcmp.eq.s32.totalorder %v607, %v559
      %vm672 = vcmp.eq.s32.totalorder %v610, %v559
      %vm673 = vcmp.eq.s32.totalorder %v613, %v559
      %vm674 = vcmp.eq.s32.totalorder %v616, %v559
      %vm675 = vcmp.eq.s32.totalorder %v619, %v559
      %vm676 = vcmp.eq.s32.totalorder %v622, %v559
      %vm677 = vcmp.eq.s32.totalorder %v625, %v559
      %vm678 = vcmp.eq.s32.totalorder %v628, %v559
      %vm679 = vcmp.eq.s32.totalorder %v631, %v559
      %vm680 = vcmp.eq.s32.totalorder %v634, %v559
      %vm681 = vcmp.eq.s32.totalorder %v637, %v559
      %vm682 = vcmp.eq.s32.totalorder %v640, %v559
      %vm683 = vcmp.eq.s32.totalorder %v643, %v559
      %vm684 = vcmp.eq.s32.totalorder %v646, %v559
      %vm685 = vcmp.eq.s32.totalorder %v649, %v559
      %vm686 = vcmp.eq.s32.totalorder %v652, %v559
      %vm687 = vcmp.eq.s32.totalorder %v655, %v559
      %v688 = vsel %vm656, 1, 0
      %v689 = vsel %vm657, 1, 0
      %v690 = vsel %vm658, 1, 0
      %v691 = vsel %vm659, 1, 0
      %v692 = vsel %vm660, 1, 0
      %v693 = vsel %vm661, 1, 0
      %v694 = vsel %vm662, 1, 0
      %v695 = vsel %vm663, 1, 0
      %v696 = vsel %vm664, 1, 0
      %v697 = vsel %vm665, 1, 0
      %v698 = vsel %vm666, 1, 0
      %v699 = vsel %vm667, 1, 0
      %v700 = vsel %vm668, 1, 0
      %v701 = vsel %vm669, 1, 0
      %v702 = vsel %vm670, 1, 0
      %v703 = vsel %vm671, 1, 0
      %v704 = vsel %vm672, 1, 0
      %v705 = vsel %vm673, 1, 0
      %v706 = vsel %vm674, 1, 0
      %v707 = vsel %vm675, 1, 0
      %v708 = vsel %vm676, 1, 0
      %v709 = vsel %vm677, 1, 0
      %v710 = vsel %vm678, 1, 0
      %v711 = vsel %vm679, 1, 0
      %v712 = vsel %vm680, 1, 0
      %v713 = vsel %vm681, 1, 0
      %v714 = vsel %vm682, 1, 0
      %v715 = vsel %vm683, 1, 0
      %v716 = vsel %vm684, 1, 0
      %v717 = vsel %vm685, 1, 0
      %v718 = vsel %vm686, 1, 0
      %v719 = vsel %vm687, 1, 0
      %v720 = vcvt.s32.f32 %v688
      %v721 = vcvt.s32.f32 %v689
      %v722 = vcvt.s32.f32 %v690
      %v723 = vcvt.s32.f32 %v691
      %v724 = vcvt.s32.f32 %v692
      %v725 = vcvt.s32.f32 %v693
      %v726 = vcvt.s32.f32 %v694
      %v727 = vcvt.s32.f32 %v695
      %v728 = vcvt.s32.f32 %v696
      %v729 = vcvt.s32.f32 %v697
      %v730 = vcvt.s32.f32 %v698
      %v731 = vcvt.s32.f32 %v699
      %v732 = vcvt.s32.f32 %v700
      %v733 = vcvt.s32.f32 %v701
      %v734 = vcvt.s32.f32 %v702
      %v735 = vcvt.s32.f32 %v703
      %v736 = vcvt.s32.f32 %v704
      %v737 = vcvt.s32.f32 %v705
      %v738 = vcvt.s32.f32 %v706
      %v739 = vcvt.s32.f32 %v707
      %v740 = vcvt.s32.f32 %v708
      %v741 = vcvt.s32.f32 %v709
      %v742 = vcvt.s32.f32 %v710
      %v743 = vcvt.s32.f32 %v711
      %v744 = vcvt.s32.f32 %v712
      %v745 = vcvt.s32.f32 %v713
      %v746 = vcvt.s32.f32 %v714
      %v747 = vcvt.s32.f32 %v715
      %v748 = vcvt.s32.f32 %v716
      %v749 = vcvt.s32.f32 %v717
      %v750 = vcvt.s32.f32 %v718
      %v751 = vcvt.s32.f32 %v719
      %v752 = vadd.s32 %v559, 128
      %753 = vset.pattern.permute.xlu0 0
      %754 = vperm.xlu0 %753, %v526
      %v755 = vpop.permute.xlu0 %754
      %756 = vset.pattern.permute.xlu0 0
      %757 = vperm.xlu0 %756, %v527
      %v758 = vpop.permute.xlu0 %757
      %759 = vset.pattern.permute.xlu0 0
      %760 = vperm.xlu0 %759, %v528
      %v761 = vpop.permute.xlu0 %760
      %762 = vset.pattern.permute.xlu0 0
      %763 = vperm.xlu0 %762, %v529
      %v764 = vpop.permute.xlu0 %763
      %765 = vset.pattern.permute.xlu0 0
      %766 = vperm.xlu0 %765, %v530
      %v767 = vpop.permute.xlu0 %766
      %768 = vset.pattern.permute.xlu0 0
      %769 = vperm.xlu0 %768, %v531
      %v770 = vpop.permute.xlu0 %769
      %771 = vset.pattern.permute.xlu0 0
      %772 = vperm.xlu0 %771, %v532
      %v773 = vpop.permute.xlu0 %772
      %774 = vset.pattern.permute.xlu0 0
      %775 = vperm.xlu0 %774, %v533
      %v776 = vpop.permute.xlu0 %775
      %777 = vset.pattern.permute.xlu0 0
      %778 = vperm.xlu0 %777, %v534
      %v779 = vpop.permute.xlu0 %778
      %780 = vset.pattern.permute.xlu0 0
      %781 = vperm.xlu0 %780, %v535
      %v782 = vpop.permute.xlu0 %781
      %783 = vset.pattern.permute.xlu0 0
      %784 = vperm.xlu0 %783, %v536
      %v785 = vpop.permute.xlu0 %784
      %786 = vset.pattern.permute.xlu0 0
      %787 = vperm.xlu0 %786, %v537
      %v788 = vpop.permute.xlu0 %787
      %789 = vset.pattern.permute.xlu0 0
      %790 = vperm.xlu0 %789, %v538
      %v791 = vpop.permute.xlu0 %790
      %792 = vset.pattern.permute.xlu0 0
      %793 = vperm.xlu0 %792, %v539
      %v794 = vpop.permute.xlu0 %793
      %795 = vset.pattern.permute.xlu0 0
      %796 = vperm.xlu0 %795, %v540
      %v797 = vpop.permute.xlu0 %796
      %798 = vset.pattern.permute.xlu0 0
      %799 = vperm.xlu0 %798, %v541
      %v800 = vpop.permute.xlu0 %799
      %801 = vset.pattern.permute.xlu0 0
      %802 = vperm.xlu0 %801, %v542
      %v803 = vpop.permute.xlu0 %802
      %804 = vset.pattern.permute.xlu0 0
      %805 = vperm.xlu0 %804, %v543
      %v806 = vpop.permute.xlu0 %805
      %807 = vset.pattern.permute.xlu0 0
      %808 = vperm.xlu0 %807, %v544
      %v809 = vpop.permute.xlu0 %808
      %810 = vset.pattern.permute.xlu0 0
      %811 = vperm.xlu0 %810, %v545
      %v812 = vpop.permute.xlu0 %811
      %813 = vset.pattern.permute.xlu0 0
      %814 = vperm.xlu0 %813, %v546
      %v815 = vpop.permute.xlu0 %814
      %816 = vset.pattern.permute.xlu0 0
      %817 = vperm.xlu0 %816, %v547
      %v818 = vpop.permute.xlu0 %817
      %819 = vset.pattern.permute.xlu0 0
      %820 = vperm.xlu0 %819, %v548
      %v821 = vpop.permute.xlu0 %820
      %822 = vset.pattern.permute.xlu0 0
      %823 = vperm.xlu0 %822, %v549
      %v824 = vpop.permute.xlu0 %823
      %825 = vset.pattern.permute.xlu0 0
      %826 = vperm.xlu0 %825, %v550
      %v827 = vpop.permute.xlu0 %826
      %828 = vset.pattern.permute.xlu0 0
      %829 = vperm.xlu0 %828, %v551
      %v830 = vpop.permute.xlu0 %829
      %831 = vset.pattern.permute.xlu0 0
      %832 = vperm.xlu0 %831, %v552
      %v833 = vpop.permute.xlu0 %832
      %834 = vset.pattern.permute.xlu0 0
      %835 = vperm.xlu0 %834, %v553
      %v836 = vpop.permute.xlu0 %835
      %837 = vset.pattern.permute.xlu0 0
      %838 = vperm.xlu0 %837, %v554
      %v839 = vpop.permute.xlu0 %838
      %840 = vset.pattern.permute.xlu0 0
      %841 = vperm.xlu0 %840, %v555
      %v842 = vpop.permute.xlu0 %841
      %843 = vset.pattern.permute.xlu0 0
      %844 = vperm.xlu0 %843, %v556
      %v845 = vpop.permute.xlu0 %844
      %846 = vset.pattern.permute.xlu0 0
      %847 = vperm.xlu0 %846, %v557
      %v848 = vpop.permute.xlu0 %847
      %vm849 = vcmp.eq.s32.totalorder %v755, %v559
      %vm850 = vcmp.eq.s32.totalorder %v755, %v752
      %vm851 = vcmp.eq.s32.totalorder %v758, %v559
      %vm852 = vcmp.eq.s32.totalorder %v758, %v752
      %vm853 = vcmp.eq.s32.totalorder %v761, %v559
      %vm854 = vcmp.eq.s32.totalorder %v761, %v752
      %vm855 = vcmp.eq.s32.totalorder %v764, %v559
      %vm856 = vcmp.eq.s32.totalorder %v764, %v752
      %vm857 = vcmp.eq.s32.totalorder %v767, %v559
      %vm858 = vcmp.eq.s32.totalorder %v767, %v752
      %vm859 = vcmp.eq.s32.totalorder %v770, %v559
      %vm860 = vcmp.eq.s32.totalorder %v770, %v752
      %vm861 = vcmp.eq.s32.totalorder %v773, %v559
      %vm862 = vcmp.eq.s32.totalorder %v773, %v752
      %vm863 = vcmp.eq.s32.totalorder %v776, %v559
      %vm864 = vcmp.eq.s32.totalorder %v776, %v752
      %vm865 = vcmp.eq.s32.totalorder %v779, %v559
      %vm866 = vcmp.eq.s32.totalorder %v779, %v752
      %vm867 = vcmp.eq.s32.totalorder %v782, %v559
      %vm868 = vcmp.eq.s32.totalorder %v782, %v752
      %vm869 = vcmp.eq.s32.totalorder %v785, %v559
      %vm870 = vcmp.eq.s32.totalorder %v785, %v752
      %vm871 = vcmp.eq.s32.totalorder %v788, %v559
      %vm872 = vcmp.eq.s32.totalorder %v788, %v752
      %vm873 = vcmp.eq.s32.totalorder %v791, %v559
      %vm874 = vcmp.eq.s32.totalorder %v791, %v752
      %vm875 = vcmp.eq.s32.totalorder %v794, %v559
      %vm876 = vcmp.eq.s32.totalorder %v794, %v752
      %vm877 = vcmp.eq.s32.totalorder %v797, %v559
      %vm878 = vcmp.eq.s32.totalorder %v797, %v752
      %vm879 = vcmp.eq.s32.totalorder %v800, %v559
      %vm880 = vcmp.eq.s32.totalorder %v800, %v752
      %vm881 = vcmp.eq.s32.totalorder %v803, %v559
      %vm882 = vcmp.eq.s32.totalorder %v803, %v752
      %vm883 = vcmp.eq.s32.totalorder %v806, %v559
      %vm884 = vcmp.eq.s32.totalorder %v806, %v752
      %vm885 = vcmp.eq.s32.totalorder %v809, %v559
      %vm886 = vcmp.eq.s32.totalorder %v809, %v752
      %vm887 = vcmp.eq.s32.totalorder %v812, %v559
      %vm888 = vcmp.eq.s32.totalorder %v812, %v752
      %vm889 = vcmp.eq.s32.totalorder %v815, %v559
      %vm890 = vcmp.eq.s32.totalorder %v815, %v752
      %vm891 = vcmp.eq.s32.totalorder %v818, %v559
      %vm892 = vcmp.eq.s32.totalorder %v818, %v752
      %vm893 = vcmp.eq.s32.totalorder %v821, %v559
      %vm894 = vcmp.eq.s32.totalorder %v821, %v752
      %vm895 = vcmp.eq.s32.totalorder %v824, %v559
      %vm896 = vcmp.eq.s32.totalorder %v824, %v752
      %vm897 = vcmp.eq.s32.totalorder %v827, %v559
      %vm898 = vcmp.eq.s32.totalorder %v827, %v752
      %vm899 = vcmp.eq.s32.totalorder %v830, %v559
      %vm900 = vcmp.eq.s32.totalorder %v830, %v752
      %vm901 = vcmp.eq.s32.totalorder %v833, %v559
      %vm902 = vcmp.eq.s32.totalorder %v833, %v752
      %vm903 = vcmp.eq.s32.totalorder %v836, %v559
      %vm904 = vcmp.eq.s32.totalorder %v836, %v752
      %vm905 = vcmp.eq.s32.totalorder %v839, %v559
      %vm906 = vcmp.eq.s32.totalorder %v839, %v752
      %vm907 = vcmp.eq.s32.totalorder %v842, %v559
      %vm908 = vcmp.eq.s32.totalorder %v842, %v752
      %vm909 = vcmp.eq.s32.totalorder %v845, %v559
      %vm910 = vcmp.eq.s32.totalorder %v845, %v752
      %vm911 = vcmp.eq.s32.totalorder %v848, %v559
      %vm912 = vcmp.eq.s32.totalorder %v848, %v752
      %v913 = vsel %vm849, 1, 0
      %v914 = vsel %vm850, 1, 0
      %v915 = vsel %vm851, 1, 0
      %v916 = vsel %vm852, 1, 0
      %v917 = vsel %vm853, 1, 0
      %v918 = vsel %vm854, 1, 0
      %v919 = vsel %vm855, 1, 0
      %v920 = vsel %vm856, 1, 0
      %v921 = vsel %vm857, 1, 0
      %v922 = vsel %vm858, 1, 0
      %v923 = vsel %vm859, 1, 0
      %v924 = vsel %vm860, 1, 0
      %v925 = vsel %vm861, 1, 0
      %v926 = vsel %vm862, 1, 0
      %v927 = vsel %vm863, 1, 0
      %v928 = vsel %vm864, 1, 0
      %v929 = vsel %vm865, 1, 0
      %v930 = vsel %vm866, 1, 0
      %v931 = vsel %vm867, 1, 0
      %v932 = vsel %vm868, 1, 0
      %v933 = vsel %vm869, 1, 0
      %v934 = vsel %vm870, 1, 0
      %v935 = vsel %vm871, 1, 0
      %v936 = vsel %vm872, 1, 0
      %v937 = vsel %vm873, 1, 0
      %v938 = vsel %vm874, 1, 0
      %v939 = vsel %vm875, 1, 0
      %v940 = vsel %vm876, 1, 0
      %v941 = vsel %vm877, 1, 0
      %v942 = vsel %vm878, 1, 0
      %v943 = vsel %vm879, 1, 0
      %v944 = vsel %vm880, 1, 0
      %v945 = vsel %vm881, 1, 0
      %v946 = vsel %vm882, 1, 0
      %v947 = vsel %vm883, 1, 0
      %v948 = vsel %vm884, 1, 0
      %v949 = vsel %vm885, 1, 0
      %v950 = vsel %vm886, 1, 0
      %v951 = vsel %vm887, 1, 0
      %v952 = vsel %vm888, 1, 0
      %v953 = vsel %vm889, 1, 0
      %v954 = vsel %vm890, 1, 0
      %v955 = vsel %vm891, 1, 0
      %v956 = vsel %vm892, 1, 0
      %v957 = vsel %vm893, 1, 0
      %v958 = vsel %vm894, 1, 0
      %v959 = vsel %vm895, 1, 0
      %v960 = vsel %vm896, 1, 0
      %v961 = vsel %vm897, 1, 0
      %v962 = vsel %vm898, 1, 0
      %v963 = vsel %vm899, 1, 0
      %v964 = vsel %vm900, 1, 0
      %v965 = vsel %vm901, 1, 0
      %v966 = vsel %vm902, 1, 0
      %v967 = vsel %vm903, 1, 0
      %v968 = vsel %vm904, 1, 0
      %v969 = vsel %vm905, 1, 0
      %v970 = vsel %vm906, 1, 0
      %v971 = vsel %vm907, 1, 0
      %v972 = vsel %vm908, 1, 0
      %v973 = vsel %vm909, 1, 0
      %v974 = vsel %vm910, 1, 0
      %v975 = vsel %vm911, 1, 0
      %v976 = vsel %vm912, 1, 0
      %v977 = vcvt.s32.f32 %v913
      %v978 = vcvt.s32.f32 %v914
      %v979 = vcvt.s32.f32 %v915
      %v980 = vcvt.s32.f32 %v916
      %v981 = vcvt.s32.f32 %v917
      %v982 = vcvt.s32.f32 %v918
      %v983 = vcvt.s32.f32 %v919
      %v984 = vcvt.s32.f32 %v920
      %v985 = vcvt.s32.f32 %v921
      %v986 = vcvt.s32.f32 %v922
      %v987 = vcvt.s32.f32 %v923
      %v988 = vcvt.s32.f32 %v924
      %v989 = vcvt.s32.f32 %v925
      %v990 = vcvt.s32.f32 %v926
      %v991 = vcvt.s32.f32 %v927
      %v992 = vcvt.s32.f32 %v928
      %v993 = vcvt.s32.f32 %v929
      %v994 = vcvt.s32.f32 %v930
      %v995 = vcvt.s32.f32 %v931
      %v996 = vcvt.s32.f32 %v932
      %v997 = vcvt.s32.f32 %v933
      %v998 = vcvt.s32.f32 %v934
      %v999 = vcvt.s32.f32 %v935
      %v1000 = vcvt.s32.f32 %v936
      %v1001 = vcvt.s32.f32 %v937
      %v1002 = vcvt.s32.f32 %v938
      %v1003 = vcvt.s32.f32 %v939
      %v1004 = vcvt.s32.f32 %v940
      %v1005 = vcvt.s32.f32 %v941
      %v1006 = vcvt.s32.f32 %v942
      %v1007 = vcvt.s32.f32 %v943
      %v1008 = vcvt.s32.f32 %v944
      %v1009 = vcvt.s32.f32 %v945
      %v1010 = vcvt.s32.f32 %v946
      %v1011 = vcvt.s32.f32 %v947
      %v1012 = vcvt.s32.f32 %v948
      %v1013 = vcvt.s32.f32 %v949
      %v1014 = vcvt.s32.f32 %v950
      %v1015 = vcvt.s32.f32 %v951
      %v1016 = vcvt.s32.f32 %v952
      %v1017 = vcvt.s32.f32 %v953
      %v1018 = vcvt.s32.f32 %v954
      %v1019 = vcvt.s32.f32 %v955
      %v1020 = vcvt.s32.f32 %v956
      %v1021 = vcvt.s32.f32 %v957
      %v1022 = vcvt.s32.f32 %v958
      %v1023 = vcvt.s32.f32 %v959
      %v1024 = vcvt.s32.f32 %v960
      %v1025 = vcvt.s32.f32 %v961
      %v1026 = vcvt.s32.f32 %v962
      %v1027 = vcvt.s32.f32 %v963
      %v1028 = vcvt.s32.f32 %v964
      %v1029 = vcvt.s32.f32 %v965
      %v1030 = vcvt.s32.f32 %v966
      %v1031 = vcvt.s32.f32 %v967
      %v1032 = vcvt.s32.f32 %v968
      %v1033 = vcvt.s32.f32 %v969
      %v1034 = vcvt.s32.f32 %v970
      %v1035 = vcvt.s32.f32 %v971
      %v1036 = vcvt.s32.f32 %v972
      %v1037 = vcvt.s32.f32 %v973
      %v1038 = vcvt.s32.f32 %v974
      %v1039 = vcvt.s32.f32 %v975
      %v1040 = vcvt.s32.f32 %v976
      %v1041 = vld [vmem:[%s2] sm:$0xff]
      %v1042 = vld [vmem:[%s2 + $0x8] sm:$0xff]
      %v1043 = vld [vmem:[%s2 + $0x10] sm:$0xff]
      %v1044 = vld [vmem:[%s2 + $0x18] sm:$0xff]
      %v1045 = vld [vmem:[%s2 + $0x20] sm:$0xff]
      %v1046 = vld [vmem:[%s2 + $0x28] sm:$0xff]
      %v1047 = vld [vmem:[%s2 + $0x30] sm:$0xff]
      %v1048 = vld [vmem:[%s2 + $0x38] sm:$0xff]
      %v1049 = vld [vmem:[%s2 + $0x40] sm:$0xff]
      %v1050 = vld [vmem:[%s2 + $0x48] sm:$0xff]
      %v1051 = vld [vmem:[%s2 + $0x50] sm:$0xff]
      %v1052 = vld [vmem:[%s2 + $0x58] sm:$0xff]
      %v1053 = vld [vmem:[%s2 + $0x60] sm:$0xff]
      %vm1054 = vcmask 850944
      %v1056 = vsel %vm1054, %v720, 0
      %v1059 = vsel %vm1054, %v721, 0
      %v1062 = vsel %vm1054, %v722, 0
      %v1065 = vsel %vm1054, %v723, 0
      %v1068 = vsel %vm1054, %v724, 0
      %v1071 = vsel %vm1054, %v725, 0
      %v1074 = vsel %vm1054, %v726, 0
      %v1077 = vsel %vm1054, %v727, 0
      %v1080 = vsel %vm1054, %v728, 0
      %v1083 = vsel %vm1054, %v729, 0
      %v1086 = vsel %vm1054, %v730, 0
      %v1089 = vsel %vm1054, %v731, 0
      %v1092 = vsel %vm1054, %v732, 0
      %v1095 = vsel %vm1054, %v733, 0
      %v1098 = vsel %vm1054, %v734, 0
      %v1101 = vsel %vm1054, %v735, 0
      %v1104 = vsel %vm1054, %v736, 0
      %v1107 = vsel %vm1054, %v737, 0
      %v1110 = vsel %vm1054, %v738, 0
      %v1113 = vsel %vm1054, %v739, 0
      %v1116 = vsel %vm1054, %v740, 0
      %v1119 = vsel %vm1054, %v741, 0
      %v1122 = vsel %vm1054, %v742, 0
      %v1125 = vsel %vm1054, %v743, 0
      %v1128 = vsel %vm1054, %v744, 0
      %v1131 = vsel %vm1054, %v745, 0
      %v1134 = vsel %vm1054, %v746, 0
      %v1137 = vsel %vm1054, %v747, 0
      %v1140 = vsel %vm1054, %v748, 0
      %v1143 = vsel %vm1054, %v749, 0
      %v1146 = vsel %vm1054, %v750, 0
      %v1149 = vsel %vm1054, %v751, 0
      %1151 = vmatprep.subr.mxu0 0.0
      %1152 = vmatpush1.msra.mxu0 %v1041
      %1153 = vmatprep.subr.mxu0 0.0
      %1154 = vmatpush1.msra.mxu0 %v1042
      %1155 = vmatprep.subr.mxu0 0.0
      %1156 = vmatpush1.msra.mxu0 %v1043
      %1157 = vmatprep.subr.mxu0 0.0
      %1158 = vmatpush1.msra.mxu0 %v1044
      %1159 = vmatprep.subr.mxu0 0.0
      %1160 = vmatpush1.msra.mxu0 %v1045
      %1161 = vmatprep.subr.mxu0 0.0
      %1162 = vmatpush1.msra.mxu0 %v1046
      %1163 = vmatprep.subr.mxu0 0.0
      %1164 = vmatpush1.msra.mxu0 %v1047
      %1165 = vmatprep.subr.mxu0 0.0
      %1166 = vmatpush1.msra.mxu0 %v1048
      %1167 = vmatprep.subr.mxu0 0.0
      %1168 = vmatpush1.msra.mxu0 %v1049
      %1169 = vmatprep.subr.mxu0 0.0
      %1170 = vmatpush1.msra.mxu0 %v1050
      %1171 = vmatprep.subr.mxu0 0.0
      %1172 = vmatpush1.msra.mxu0 %v1051
      %1173 = vmatprep.subr.mxu0 0.0
      %1174 = vmatpush1.msra.mxu0 %v1052
      %1175 = vmatprep.subr.mxu0 0.0
      %1176 = vmatpush1.msra.mxu0 %v1053
      %1177 = vmatprep.subr.mxu0 0.0
      %1178 = vmatpush1.msra.mxu0 0.0
      %1179 = vmatprep.subr.mxu0 0.0
      %1180 = vmatpush1.msra.mxu0 0.0
      %1181 = vmatprep.subr.mxu0 0.0
      %1182 = vmatpush1.msra.mxu0 0.0
      %1183 = vmatprep.subr.mxu0 0.0
      %1184 = vmatpush1.msra.mxu0 0.0
      %1185 = vmatprep.subr.mxu0 0.0
      %1186 = vmatpush1.msra.mxu0 0.0
      %1187 = vmatprep.subr.mxu0 0.0
      %1188 = vmatpush1.msra.mxu0 0.0
      %1189 = vmatprep.subr.mxu0 0.0
      %1190 = vmatpush1.msra.mxu0 0.0
      %1191 = vmatprep.subr.mxu0 0.0
      %1192 = vmatpush1.msra.mxu0 0.0
      %1193 = vmatprep.subr.mxu0 0.0
      %1194 = vmatpush1.msra.mxu0 0.0
      %1195 = vmatprep.subr.mxu0 0.0
      %1196 = vmatpush1.msra.mxu0 0.0
      %1197 = vmatprep.subr.mxu0 0.0
      %1198 = vmatpush1.msra.mxu0 0.0
      %1199 = vmatprep.subr.mxu0 0.0
      %1200 = vmatpush1.msra.mxu0 0.0
      %1201 = vmatprep.subr.mxu0 0.0
      %1202 = vmatpush1.msra.mxu0 0.0
      %1203 = vmatprep.subr.mxu0 0.0
      %1204 = vmatpush1.msra.mxu0 0.0
      %1205 = vmatprep.subr.mxu0 0.0
      %1206 = vmatpush1.msra.mxu0 0.0
      %1207 = vmatprep.subr.mxu0 0.0
      %1208 = vmatpush1.msra.mxu0 0.0
      %1209 = vmatprep.subr.mxu0 0.0
      %1210 = vmatpush1.msra.mxu0 0.0
      %1211 = vmatprep.subr.mxu0 0.0
      %1212 = vmatpush1.msra.mxu0 0.0
      %1213 = vmatprep.subr.mxu0 0.0
      %1214 = vmatpush1.msra.mxu0 0.0
      %1215 = vmatprep.mubr.f32.mxu0 0.0
      %1216 = vmatmul.mubr.f32.gmra.mrb[0].mxu0 %v1056
      %v1217 = vpop.f32.mrb[0].mxu0
      %v1218 = vadd.f32 0.0, %v1217
      %v1219 = vpop.f32.mrb[0].mxu0
      %1220 = vmatprep.mubr.f32.mxu0 0.0
      %1221 = vmatmul.mubr.f32.gmra.mrb[0].mxu0 %v1059
      %v1222 = vpop.f32.mrb[0].mxu0
      %v1223 = vadd.f32 0.0, %v1222
      %v1224 = vpop.f32.mrb[0].mxu0
      %1225 = vmatprep.mubr.f32.mxu0 0.0
      %1226 = vmatmul.mubr.f32.gmra.mrb[0].mxu0 %v1062
      %v1227 = vpop.f32.mrb[0].mxu0
      %v1228 = vadd.f32 0.0, %v1227
      %v1229 = vpop.f32.mrb[0].mxu0
      %1230 = vmatprep.mubr.f32.mxu0 0.0
      %1231 = vmatmul.mubr.f32.gmra.mrb[0].mxu0 %v1065
      %v1232 = vpop.f32.mrb[0].mxu0
      %v1233 = vadd.f32 0.0, %v1232
      %v1234 = vpop.f32.mrb[0].mxu0
      %1235 = vmatprep.mubr.f32.mxu0 0.0
      %1236 = vmatmul.mubr.f32.gmra.mrb[0].mxu0 %v1068
      %v1237 = vpop.f32.mrb[0].mxu0
      %v1238 = vadd.f32 0.0, %v1237
      %v1239 = vpop.f32.mrb[0].mxu0
      %1240 = vmatprep.mubr.f32.mxu0 0.0
      %1241 = vmatmul.mubr.f32.gmra.mrb[0].mxu0 %v1071
      %v1242 = vpop.f32.mrb[0].mxu0
      %v1243 = vadd.f32 0.0, %v1242
      %v1244 = vpop.f32.mrb[0].mxu0
      %1245 = vmatprep.mubr.f32.mxu0 0.0
      %1246 = vmatmul.mubr.f32.gmra.mrb[0].mxu0 %v1074
      %v1247 = vpop.f32.mrb[0].mxu0
      %v1248 = vadd.f32 0.0, %v1247
      %v1249 = vpop.f32.mrb[0].mxu0
      %1250 = vmatprep.mubr.f32.mxu0 0.0
      %1251 = vmatmul.mubr.f32.gmra.mrb[0].mxu0 %v1077
      %v1252 = vpop.f32.mrb[0].mxu0
      %v1253 = vadd.f32 0.0, %v1252
      %v1254 = vpop.f32.mrb[0].mxu0
      %1255 = vmatprep.mubr.f32.mxu0 0.0
      %1256 = vmatmul.mubr.f32.gmra.mrb[0].mxu0 %v1080
      %v1257 = vpop.f32.mrb[0].mxu0
      %v1258 = vadd.f32 0.0, %v1257
      %v1259 = vpop.f32.mrb[0].mxu0
      %1260 = vmatprep.mubr.f32.mxu0 0.0
      %1261 = vmatmul.mubr.f32.gmra.mrb[0].mxu0 %v1083
      %v1262 = vpop.f32.mrb[0].mxu0
      %v1263 = vadd.f32 0.0, %v1262
      %v1264 = vpop.f32.mrb[0].mxu0
      %1265 = vmatprep.mubr.f32.mxu0 0.0
      %1266 = vmatmul.mubr.f32.gmra.mrb[0].mxu0 %v1086
      %v1267 = vpop.f32.mrb[0].mxu0
      %v1268 = vadd.f32 0.0, %v1267
      %v1269 = vpop.f32.mrb[0].mxu0
      %1270 = vmatprep.mubr.f32.mxu0 0.0
      %1271 = vmatmul.mubr.f32.gmra.mrb[0].mxu0 %v1089
      %v1272 = vpop.f32.mrb[0].mxu0
      %v1273 = vadd.f32 0.0, %v1272
      %v1274 = vpop.f32.mrb[0].mxu0
      %1275 = vmatprep.mubr.f32.mxu0 0.0
      %1276 = vmatmul.mubr.f32.gmra.mrb[0].mxu0 %v1092
      %v1277 = vpop.f32.mrb[0].mxu0
      %v1278 = vadd.f32 0.0, %v1277
      %v1279 = vpop.f32.mrb[0].mxu0
      %1280 = vmatprep.mubr.f32.mxu0 0.0
      %1281 = vmatmul.mubr.f32.gmra.mrb[0].mxu0 %v1095
      %v1282 = vpop.f32.mrb[0].mxu0
      %v1283 = vadd.f32 0.0, %v1282
      %v1284 = vpop.f32.mrb[0].mxu0
      %1285 = vmatprep.mubr.f32.mxu0 0.0
      %1286 = vmatmul.mubr.f32.gmra.mrb[0].mxu0 %v1098
      %v1287 = vpop.f32.mrb[0].mxu0
      %v1288 = vadd.f32 0.0, %v1287
      %v1289 = vpop.f32.mrb[0].mxu0
      %1290 = vmatprep.mubr.f32.mxu0 0.0
      %1291 = vmatmul.mubr.f32.gmra.mrb[0].mxu0 %v1101
      %v1292 = vpop.f32.mrb[0].mxu0
      %v1293 = vadd.f32 0.0, %v1292
      %v1294 = vpop.f32.mrb[0].mxu0
      %1295 = vmatprep.mubr.f32.mxu0 0.0
      %1296 = vmatmul.mubr.f32.gmra.mrb[0].mxu0 %v1104
      %v1297 = vpop.f32.mrb[0].mxu0
      %v1298 = vadd.f32 0.0, %v1297
      %v1299 = vpop.f32.mrb[0].mxu0
      %1300 = vmatprep.mubr.f32.mxu0 0.0
      %1301 = vmatmul.mubr.f32.gmra.mrb[0].mxu0 %v1107
      %v1302 = vpop.f32.mrb[0].mxu0
      %v1303 = vadd.f32 0.0, %v1302
      %v1304 = vpop.f32.mrb[0].mxu0
      %1305 = vmatprep.mubr.f32.mxu0 0.0
      %1306 = vmatmul.mubr.f32.gmra.mrb[0].mxu0 %v1110
      %v1307 = vpop.f32.mrb[0].mxu0
      %v1308 = vadd.f32 0.0, %v1307
      %v1309 = vpop.f32.mrb[0].mxu0
      %1310 = vmatprep.mubr.f32.mxu0 0.0
      %1311 = vmatmul.mubr.f32.gmra.mrb[0].mxu0 %v1113
      %v1312 = vpop.f32.mrb[0].mxu0
      %v1313 = vadd.f32 0.0, %v1312
      %v1314 = vpop.f32.mrb[0].mxu0
      %1315 = vmatprep.mubr.f32.mxu0 0.0
      %1316 = vmatmul.mubr.f32.gmra.mrb[0].mxu0 %v1116
      %v1317 = vpop.f32.mrb[0].mxu0
      %v1318 = vadd.f32 0.0, %v1317
      %v1319 = vpop.f32.mrb[0].mxu0
      %1320 = vmatprep.mubr.f32.mxu0 0.0
      %1321 = vmatmul.mubr.f32.gmra.mrb[0].mxu0 %v1119
      %v1322 = vpop.f32.mrb[0].mxu0
      %v1323 = vadd.f32 0.0, %v1322
      %v1324 = vpop.f32.mrb[0].mxu0
      %1325 = vmatprep.mubr.f32.mxu0 0.0
      %1326 = vmatmul.mubr.f32.gmra.mrb[0].mxu0 %v1122
      %v1327 = vpop.f32.mrb[0].mxu0
      %v1328 = vadd.f32 0.0, %v1327
      %v1329 = vpop.f32.mrb[0].mxu0
      %1330 = vmatprep.mubr.f32.mxu0 0.0
      %1331 = vmatmul.mubr.f32.gmra.mrb[0].mxu0 %v1125
      %v1332 = vpop.f32.mrb[0].mxu0
      %v1333 = vadd.f32 0.0, %v1332
      %v1334 = vpop.f32.mrb[0].mxu0
      %1335 = vmatprep.mubr.f32.mxu0 0.0
      %1336 = vmatmul.mubr.f32.gmra.mrb[0].mxu0 %v1128
      %v1337 = vpop.f32.mrb[0].mxu0
      %v1338 = vadd.f32 0.0, %v1337
      %v1339 = vpop.f32.mrb[0].mxu0
      %1340 = vmatprep.mubr.f32.mxu0 0.0
      %1341 = vmatmul.mubr.f32.gmra.mrb[0].mxu0 %v1131
      %v1342 = vpop.f32.mrb[0].mxu0
      %v1343 = vadd.f32 0.0, %v1342
      %v1344 = vpop.f32.mrb[0].mxu0
      %1345 = vmatprep.mubr.f32.mxu0 0.0
      %1346 = vmatmul.mubr.f32.gmra.mrb[0].mxu0 %v1134
      %v1347 = vpop.f32.mrb[0].mxu0
      %v1348 = vadd.f32 0.0, %v1347
      %v1349 = vpop.f32.mrb[0].mxu0
      %1350 = vmatprep.mubr.f32.mxu0 0.0
      %1351 = vmatmul.mubr.f32.gmra.mrb[0].mxu0 %v1137
      %v1352 = vpop.f32.mrb[0].mxu0
      %v1353 = vadd.f32 0.0, %v1352
      %v1354 = vpop.f32.mrb[0].mxu0
      %1355 = vmatprep.mubr.f32.mxu0 0.0
      %1356 = vmatmul.mubr.f32.gmra.mrb[0].mxu0 %v1140
      %v1357 = vpop.f32.mrb[0].mxu0
      %v1358 = vadd.f32 0.0, %v1357
      %v1359 = vpop.f32.mrb[0].mxu0
      %1360 = vmatprep.mubr.f32.mxu0 0.0
      %1361 = vmatmul.mubr.f32.gmra.mrb[0].mxu0 %v1143
      %v1362 = vpop.f32.mrb[0].mxu0
      %v1363 = vadd.f32 0.0, %v1362
      %v1364 = vpop.f32.mrb[0].mxu0
      %1365 = vmatprep.mubr.f32.mxu0 0.0
      %1366 = vmatmul.mubr.f32.gmra.mrb[0].mxu0 %v1146
      %v1367 = vpop.f32.mrb[0].mxu0
      %v1368 = vadd.f32 0.0, %v1367
      %v1369 = vpop.f32.mrb[0].mxu0
      %1370 = vmatprep.mubr.f32.mxu0 0.0
      %1371 = vmatmul.mubr.f32.gmra.mrb[0].mxu0 %v1149
      %v1372 = vpop.f32.mrb[0].mxu0
      %v1373 = vadd.f32 0.0, %v1372
      %v1374 = vpop.f32.mrb[0].mxu0
      %1375 = vdwg.mxu0
      %v1376 = vld [vmem:[%s3] sm:$0xff]
      %v1377 = vld [vmem:[%s3 + $0x8] sm:$0xff]
      %v1378 = vld [vmem:[%s3 + $0x10] sm:$0xff]
      %v1379 = vld [vmem:[%s3 + $0x18] sm:$0xff]
      %v1380 = vld [vmem:[%s3 + $0x20] sm:$0xff]
      %v1381 = vld [vmem:[%s3 + $0x28] sm:$0xff]
      %v1382 = vld [vmem:[%s3 + $0x30] sm:$0xff]
      %v1383 = vld [vmem:[%s3 + $0x38] sm:$0xff]
      %v1384 = vld [vmem:[%s3 + $0x40] sm:$0xff]
      %v1385 = vld [vmem:[%s3 + $0x48] sm:$0xff]
      %v1386 = vld [vmem:[%s3 + $0x50] sm:$0xff]
      %v1387 = vld [vmem:[%s3 + $0x58] sm:$0xff]
      %v1388 = vld [vmem:[%s3 + $0x60] sm:$0xff]
      %v1389 = vld [vmem:[%s3 + $0x68] sm:$0xff]
      %v1390 = vld [vmem:[%s3 + $0x70] sm:$0xff]
      %v1391 = vld [vmem:[%s3 + $0x78] sm:$0xff]
      %v1392 = vld [vmem:[%s3 + $0x80] sm:$0xff]
      %v1393 = vld [vmem:[%s3 + $0x88] sm:$0xff]
      %v1394 = vld [vmem:[%s3 + $0x90] sm:$0xff]
      %v1395 = vld [vmem:[%s3 + $0x98] sm:$0xff]
      %v1396 = vld [vmem:[%s3 + $0xa0] sm:$0xff]
      %v1397 = vld [vmem:[%s3 + $0xa8] sm:$0xff]
      %v1398 = vld [vmem:[%s3 + $0xb0] sm:$0xff]
      %v1399 = vld [vmem:[%s3 + $0xb8] sm:$0xff]
      %v1400 = vld [vmem:[%s3 + $0xc0] sm:$0xff]
      %vm1401 = vcmask 588800
      %v1403 = vsel %vm1401, %v978, 0
      %v1406 = vsel %vm1401, %v980, 0
      %v1409 = vsel %vm1401, %v982, 0
      %v1412 = vsel %vm1401, %v984, 0
      %v1415 = vsel %vm1401, %v986, 0
      %v1418 = vsel %vm1401, %v988, 0
      %v1421 = vsel %vm1401, %v990, 0
      %v1424 = vsel %vm1401, %v992, 0
      %v1427 = vsel %vm1401, %v994, 0
      %v1430 = vsel %vm1401, %v996, 0
      %v1433 = vsel %vm1401, %v998, 0
      %v1436 = vsel %vm1401, %v1000, 0
      %v1439 = vsel %vm1401, %v1002, 0
      %v1442 = vsel %vm1401, %v1004, 0
      %v1445 = vsel %vm1401, %v1006, 0
      %v1448 = vsel %vm1401, %v1008, 0
      %v1451 = vsel %vm1401, %v1010, 0
      %v1454 = vsel %vm1401, %v1012, 0
      %v1457 = vsel %vm1401, %v1014, 0
      %v1460 = vsel %vm1401, %v1016, 0
      %v1463 = vsel %vm1401, %v1018, 0
      %v1466 = vsel %vm1401, %v1020, 0
      %v1469 = vsel %vm1401, %v1022, 0
      %v1472 = vsel %vm1401, %v1024, 0
      %v1475 = vsel %vm1401, %v1026, 0
      %v1478 = vsel %vm1401, %v1028, 0
      %v1481 = vsel %vm1401, %v1030, 0
      %v1484 = vsel %vm1401, %v1032, 0
      %v1487 = vsel %vm1401, %v1034, 0
      %v1490 = vsel %vm1401, %v1036, 0
      %v1493 = vsel %vm1401, %v1038, 0
      %v1496 = vsel %vm1401, %v1040, 0
      %1498 = vmatprep.subr.mxu0 0.0
      %1499 = vmatpush1.msra.mxu0 %v1376
      %1500 = vmatprep.subr.mxu0 0.0
      %1501 = vmatpush1.msra.mxu0 %v1377
      %1502 = vmatprep.subr.mxu0 0.0
      %1503 = vmatpush1.msra.mxu0 %v1378
      %1504 = vmatprep.subr.mxu0 0.0
      %1505 = vmatpush1.msra.mxu0 %v1379
      %1506 = vmatprep.subr.mxu0 0.0
      %1507 = vmatpush1.msra.mxu0 %v1380
      %1508 = vmatprep.subr.mxu0 0.0
      %1509 = vmatpush1.msra.mxu0 %v1381
      %1510 = vmatprep.subr.mxu0 0.0
      %1511 = vmatpush1.msra.mxu0 %v1382
      %1512 = vmatprep.subr.mxu0 0.0
      %1513 = vmatpush1.msra.mxu0 %v1383
      %1514 = vmatprep.subr.mxu0 0.0
      %1515 = vmatpush1.msra.mxu0 %v1384
      %1516 = vmatprep.subr.mxu0 0.0
      %1517 = vmatpush1.msra.mxu0 %v1385
      %1518 = vmatprep.subr.mxu0 0.0
      %1519 = vmatpush1.msra.mxu0 %v1386
      %1520 = vmatprep.subr.mxu0 0.0
      %1521 = vmatpush1.msra.mxu0 %v1387
      %1522 = vmatprep.subr.mxu0 0.0
      %1523 = vmatpush1.msra.mxu0 %v1388
      %1524 = vmatprep.subr.mxu0 0.0
      %1525 = vmatpush1.msra.mxu0 %v1389
      %1526 = vmatprep.subr.mxu0 0.0
      %1527 = vmatpush1.msra.mxu0 %v1390
      %1528 = vmatprep.subr.mxu0 0.0
      %1529 = vmatpush1.msra.mxu0 %v1391
      %1530 = vmatprep.subr.mxu0 0.0
      %1531 = vmatpush1.msra.mxu0 %v1392
      %1532 = vmatprep.subr.mxu0 0.0
      %1533 = vmatpush1.msra.mxu0 %v1393
      %1534 = vmatprep.subr.mxu0 0.0
      %1535 = vmatpush1.msra.mxu0 %v1394
      %1536 = vmatprep.subr.mxu0 0.0
      %1537 = vmatpush1.msra.mxu0 %v1395
      %1538 = vmatprep.subr.mxu0 0.0
      %1539 = vmatpush1.msra.mxu0 %v1396
      %1540 = vmatprep.subr.mxu0 0.0
      %1541 = vmatpush1.msra.mxu0 %v1397
      %1542 = vmatprep.subr.mxu0 0.0
      %1543 = vmatpush1.msra.mxu0 %v1398
      %1544 = vmatprep.subr.mxu0 0.0
      %1545 = vmatpush1.msra.mxu0 %v1399
      %1546 = vmatprep.subr.mxu0 0.0
      %1547 = vmatpush1.msra.mxu0 %v1400
      %1548 = vmatprep.subr.mxu0 0.0
      %1549 = vmatpush1.msra.mxu0 0.0
      %1550 = vmatprep.subr.mxu0 0.0
      %1551 = vmatpush1.msra.mxu0 0.0
      %1552 = vmatprep.subr.mxu0 0.0
      %1553 = vmatpush1.msra.mxu0 0.0
      %1554 = vmatprep.subr.mxu0 0.0
      %1555 = vmatpush1.msra.mxu0 0.0
      %1556 = vmatprep.subr.mxu0 0.0
      %1557 = vmatpush1.msra.mxu0 0.0
      %1558 = vmatprep.subr.mxu0 0.0
      %1559 = vmatpush1.msra.mxu0 0.0
      %1560 = vmatprep.subr.mxu0 0.0
      %1561 = vmatpush1.msra.mxu0 0.0
      %1562 = vmatprep.mubr.f32.mxu0 %v1403
      %1563 = vmatmul.mubr.f32.gmra.mrb[0].mxu0 %v977
      %v1564 = vpop.f32.mrb[0].mxu0
      %v1565 = vadd.f32 0.0, %v1564
      %v1566 = vpop.f32.mrb[0].mxu0
      %1567 = vmatprep.mubr.f32.mxu0 %v1406
      %1568 = vmatmul.mubr.f32.gmra.mrb[0].mxu0 %v979
      %v1569 = vpop.f32.mrb[0].mxu0
      %v1570 = vadd.f32 0.0, %v1569
      %v1571 = vpop.f32.mrb[0].mxu0
      %1572 = vmatprep.mubr.f32.mxu0 %v1409
      %1573 = vmatmul.mubr.f32.gmra.mrb[0].mxu0 %v981
      %v1574 = vpop.f32.mrb[0].mxu0
      %v1575 = vadd.f32 0.0, %v1574
      %v1576 = vpop.f32.mrb[0].mxu0
      %1577 = vmatprep.mubr.f32.mxu0 %v1412
      %1578 = vmatmul.mubr.f32.gmra.mrb[0].mxu0 %v983
      %v1579 = vpop.f32.mrb[0].mxu0
      %v1580 = vadd.f32 0.0, %v1579
      %v1581 = vpop.f32.mrb[0].mxu0
      %1582 = vmatprep.mubr.f32.mxu0 %v1415
      %1583 = vmatmul.mubr.f32.gmra.mrb[0].mxu0 %v985
      %v1584 = vpop.f32.mrb[0].mxu0
      %v1585 = vadd.f32 0.0, %v1584
      %v1586 = vpop.f32.mrb[0].mxu0
      %1587 = vmatprep.mubr.f32.mxu0 %v1418
      %1588 = vmatmul.mubr.f32.gmra.mrb[0].mxu0 %v987
      %v1589 = vpop.f32.mrb[0].mxu0
      %v1590 = vadd.f32 0.0, %v1589
      %v1591 = vpop.f32.mrb[0].mxu0
      %1592 = vmatprep.mubr.f32.mxu0 %v1421
      %1593 = vmatmul.mubr.f32.gmra.mrb[0].mxu0 %v989
      %v1594 = vpop.f32.mrb[0].mxu0
      %v1595 = vadd.f32 0.0, %v1594
      %v1596 = vpop.f32.mrb[0].mxu0
      %1597 = vmatprep.mubr.f32.mxu0 %v1424
      %1598 = vmatmul.mubr.f32.gmra.mrb[0].mxu0 %v991
      %v1599 = vpop.f32.mrb[0].mxu0
      %v1600 = vadd.f32 0.0, %v1599
      %v1601 = vpop.f32.mrb[0].mxu0
      %1602 = vmatprep.mubr.f32.mxu0 %v1427
      %1603 = vmatmul.mubr.f32.gmra.mrb[0].mxu0 %v993
      %v1604 = vpop.f32.mrb[0].mxu0
      %v1605 = vadd.f32 0.0, %v1604
      %v1606 = vpop.f32.mrb[0].mxu0
      %1607 = vmatprep.mubr.f32.mxu0 %v1430
      %1608 = vmatmul.mubr.f32.gmra.mrb[0].mxu0 %v995
      %v1609 = vpop.f32.mrb[0].mxu0
      %v1610 = vadd.f32 0.0, %v1609
      %v1611 = vpop.f32.mrb[0].mxu0
      %1612 = vmatprep.mubr.f32.mxu0 %v1433
      %1613 = vmatmul.mubr.f32.gmra.mrb[0].mxu0 %v997
      %v1614 = vpop.f32.mrb[0].mxu0
      %v1615 = vadd.f32 0.0, %v1614
      %v1616 = vpop.f32.mrb[0].mxu0
      %1617 = vmatprep.mubr.f32.mxu0 %v1436
      %1618 = vmatmul.mubr.f32.gmra.mrb[0].mxu0 %v999
      %v1619 = vpop.f32.mrb[0].mxu0
      %v1620 = vadd.f32 0.0, %v1619
      %v1621 = vpop.f32.mrb[0].mxu0
      %1622 = vmatprep.mubr.f32.mxu0 %v1439
      %1623 = vmatmul.mubr.f32.gmra.mrb[0].mxu0 %v1001
      %v1624 = vpop.f32.mrb[0].mxu0
      %v1625 = vadd.f32 0.0, %v1624
      %v1626 = vpop.f32.mrb[0].mxu0
      %1627 = vmatprep.mubr.f32.mxu0 %v1442
      %1628 = vmatmul.mubr.f32.gmra.mrb[0].mxu0 %v1003
      %v1629 = vpop.f32.mrb[0].mxu0
      %v1630 = vadd.f32 0.0, %v1629
      %v1631 = vpop.f32.mrb[0].mxu0
      %1632 = vmatprep.mubr.f32.mxu0 %v1445
      %1633 = vmatmul.mubr.f32.gmra.mrb[0].mxu0 %v1005
      %v1634 = vpop.f32.mrb[0].mxu0
      %v1635 = vadd.f32 0.0, %v1634
      %v1636 = vpop.f32.mrb[0].mxu0
      %1637 = vmatprep.mubr.f32.mxu0 %v1448
      %1638 = vmatmul.mubr.f32.gmra.mrb[0].mxu0 %v1007
      %v1639 = vpop.f32.mrb[0].mxu0
      %v1640 = vadd.f32 0.0, %v1639
      %v1641 = vpop.f32.mrb[0].mxu0
      %1642 = vmatprep.mubr.f32.mxu0 %v1451
      %1643 = vmatmul.mubr.f32.gmra.mrb[0].mxu0 %v1009
      %v1644 = vpop.f32.mrb[0].mxu0
      %v1645 = vadd.f32 0.0, %v1644
      %v1646 = vpop.f32.mrb[0].mxu0
      %1647 = vmatprep.mubr.f32.mxu0 %v1454
      %1648 = vmatmul.mubr.f32.gmra.mrb[0].mxu0 %v1011
      %v1649 = vpop.f32.mrb[0].mxu0
      %v1650 = vadd.f32 0.0, %v1649
      %v1651 = vpop.f32.mrb[0].mxu0
      %1652 = vmatprep.mubr.f32.mxu0 %v1457
      %1653 = vmatmul.mubr.f32.gmra.mrb[0].mxu0 %v1013
      %v1654 = vpop.f32.mrb[0].mxu0
      %v1655 = vadd.f32 0.0, %v1654
      %v1656 = vpop.f32.mrb[0].mxu0
      %1657 = vmatprep.mubr.f32.mxu0 %v1460
      %1658 = vmatmul.mubr.f32.gmra.mrb[0].mxu0 %v1015
      %v1659 = vpop.f32.mrb[0].mxu0
      %v1660 = vadd.f32 0.0, %v1659
      %v1661 = vpop.f32.mrb[0].mxu0
      %1662 = vmatprep.mubr.f32.mxu0 %v1463
      %1663 = vmatmul.mubr.f32.gmra.mrb[0].mxu0 %v1017
      %v1664 = vpop.f32.mrb[0].mxu0
      %v1665 = vadd.f32 0.0, %v1664
      %v1666 = vpop.f32.mrb[0].mxu0
      %1667 = vmatprep.mubr.f32.mxu0 %v1466
      %1668 = vmatmul.mubr.f32.gmra.mrb[0].mxu0 %v1019
      %v1669 = vpop.f32.mrb[0].mxu0
      %v1670 = vadd.f32 0.0, %v1669
      %v1671 = vpop.f32.mrb[0].mxu0
      %1672 = vmatprep.mubr.f32.mxu0 %v1469
      %1673 = vmatmul.mubr.f32.gmra.mrb[0].mxu0 %v1021
      %v1674 = vpop.f32.mrb[0].mxu0
      %v1675 = vadd.f32 0.0, %v1674
      %v1676 = vpop.f32.mrb[0].mxu0
      %1677 = vmatprep.mubr.f32.mxu0 %v1472
      %1678 = vmatmul.mubr.f32.gmra.mrb[0].mxu0 %v1023
      %v1679 = vpop.f32.mrb[0].mxu0
      %v1680 = vadd.f32 0.0, %v1679
      %v1681 = vpop.f32.mrb[0].mxu0
      %1682 = vmatprep.mubr.f32.mxu0 %v1475
      %1683 = vmatmul.mubr.f32.gmra.mrb[0].mxu0 %v1025
      %v1684 = vpop.f32.mrb[0].mxu0
      %v1685 = vadd.f32 0.0, %v1684
      %v1686 = vpop.f32.mrb[0].mxu0
      %1687 = vmatprep.mubr.f32.mxu0 %v1478
      %1688 = vmatmul.mubr.f32.gmra.mrb[0].mxu0 %v1027
      %v1689 = vpop.f32.mrb[0].mxu0
      %v1690 = vadd.f32 0.0, %v1689
      %v1691 = vpop.f32.mrb[0].mxu0
      %1692 = vmatprep.mubr.f32.mxu0 %v1481
      %1693 = vmatmul.mubr.f32.gmra.mrb[0].mxu0 %v1029
      %v1694 = vpop.f32.mrb[0].mxu0
      %v1695 = vadd.f32 0.0, %v1694
      %v1696 = vpop.f32.mrb[0].mxu0
      %1697 = vmatprep.mubr.f32.mxu0 %v1484
      %1698 = vmatmul.mubr.f32.gmra.mrb[0].mxu0 %v1031
      %v1699 = vpop.f32.mrb[0].mxu0
      %v1700 = vadd.f32 0.0, %v1699
      %v1701 = vpop.f32.mrb[0].mxu0
      %1702 = vmatprep.mubr.f32.mxu0 %v1487
      %1703 = vmatmul.mubr.f32.gmra.mrb[0].mxu0 %v1033
      %v1704 = vpop.f32.mrb[0].mxu0
      %v1705 = vadd.f32 0.0, %v1704
      %v1706 = vpop.f32.mrb[0].mxu0
      %1707 = vmatprep.mubr.f32.mxu0 %v1490
      %1708 = vmatmul.mubr.f32.gmra.mrb[0].mxu0 %v1035
      %v1709 = vpop.f32.mrb[0].mxu0
      %v1710 = vadd.f32 0.0, %v1709
      %v1711 = vpop.f32.mrb[0].mxu0
      %1712 = vmatprep.mubr.f32.mxu0 %v1493
      %1713 = vmatmul.mubr.f32.gmra.mrb[0].mxu0 %v1037
      %v1714 = vpop.f32.mrb[0].mxu0
      %v1715 = vadd.f32 0.0, %v1714
      %v1716 = vpop.f32.mrb[0].mxu0
      %1717 = vmatprep.mubr.f32.mxu0 %v1496
      %1718 = vmatmul.mubr.f32.gmra.mrb[0].mxu0 %v1039
      %v1719 = vpop.f32.mrb[0].mxu0
      %v1720 = vadd.f32 0.0, %v1719
      %v1721 = vpop.f32.mrb[0].mxu0
      %1722 = vdwg.mxu0
      %v1723 = vld [vmem:[%s4] sm:$0xff]
      %v1724 = vld [vmem:[%s4 + $0x8] sm:$0xff]
      %v1725 = vld [vmem:[%s4 + $0x10] sm:$0xff]
      %v1726 = vld [vmem:[%s4 + $0x18] sm:$0xff]
      %v1727 = vld [vmem:[%s4 + $0x20] sm:$0xff]
      %v1728 = vld [vmem:[%s4 + $0x28] sm:$0xff]
      %v1729 = vld [vmem:[%s4 + $0x30] sm:$0xff]
      %v1730 = vld [vmem:[%s4 + $0x38] sm:$0xff]
      %v1731 = vld [vmem:[%s4 + $0x40] sm:$0xff]
      %v1732 = vld [vmem:[%s4 + $0x48] sm:$0xff]
      %v1733 = vld [vmem:[%s4 + $0x50] sm:$0xff]
      %v1734 = vld [vmem:[%s4 + $0x58] sm:$0xff]
      %v1735 = vld [vmem:[%s4 + $0x60] sm:$0xff]
      %1736 = vmatprep.subr.mxu0 0.0
      %1737 = vmatpush1.msra.mxu0 %v1723
      %1738 = vmatprep.subr.mxu0 0.0
      %1739 = vmatpush1.msra.mxu0 %v1724
      %1740 = vmatprep.subr.mxu0 0.0
      %1741 = vmatpush1.msra.mxu0 %v1725
      %1742 = vmatprep.subr.mxu0 0.0
      %1743 = vmatpush1.msra.mxu0 %v1726
      %1744 = vmatprep.subr.mxu0 0.0
      %1745 = vmatpush1.msra.mxu0 %v1727
      %1746 = vmatprep.subr.mxu0 0.0
      %1747 = vmatpush1.msra.mxu0 %v1728
      %1748 = vmatprep.subr.mxu0 0.0
      %1749 = vmatpush1.msra.mxu0 %v1729
      %1750 = vmatprep.subr.mxu0 0.0
      %1751 = vmatpush1.msra.mxu0 %v1730
      %1752 = vmatprep.subr.mxu0 0.0
      %1753 = vmatpush1.msra.mxu0 %v1731
      %1754 = vmatprep.subr.mxu0 0.0
      %1755 = vmatpush1.msra.mxu0 %v1732
      %1756 = vmatprep.subr.mxu0 0.0
      %1757 = vmatpush1.msra.mxu0 %v1733
      %1758 = vmatprep.subr.mxu0 0.0
      %1759 = vmatpush1.msra.mxu0 %v1734
      %1760 = vmatprep.subr.mxu0 0.0
      %1761 = vmatpush1.msra.mxu0 %v1735
      %1762 = vmatprep.subr.mxu0 0.0
      %1763 = vmatpush1.msra.mxu0 0.0
      %1764 = vmatprep.subr.mxu0 0.0
      %1765 = vmatpush1.msra.mxu0 0.0
      %1766 = vmatprep.subr.mxu0 0.0
      %1767 = vmatpush1.msra.mxu0 0.0
      %1768 = vmatprep.subr.mxu0 0.0
      %1769 = vmatpush1.msra.mxu0 0.0
      %1770 = vmatprep.subr.mxu0 0.0
      %1771 = vmatpush1.msra.mxu0 0.0
      %1772 = vmatprep.subr.mxu0 0.0
      %1773 = vmatpush1.msra.mxu0 0.0
      %1774 = vmatprep.subr.mxu0 0.0
      %1775 = vmatpush1.msra.mxu0 0.0
      %1776 = vmatprep.subr.mxu0 0.0
      %1777 = vmatpush1.msra.mxu0 0.0
      %1778 = vmatprep.subr.mxu0 0.0
      %1779 = vmatpush1.msra.mxu0 0.0
      %1780 = vmatprep.subr.mxu0 0.0
      %1781 = vmatpush1.msra.mxu0 0.0
      %1782 = vmatprep.subr.mxu0 0.0
      %1783 = vmatpush1.msra.mxu0 0.0
      %1784 = vmatprep.subr.mxu0 0.0
      %1785 = vmatpush1.msra.mxu0 0.0
      %1786 = vmatprep.subr.mxu0 0.0
      %1787 = vmatpush1.msra.mxu0 0.0
      %1788 = vmatprep.subr.mxu0 0.0
      %1789 = vmatpush1.msra.mxu0 0.0
      %1790 = vmatprep.subr.mxu0 0.0
      %1791 = vmatpush1.msra.mxu0 0.0
      %1792 = vmatprep.subr.mxu0 0.0
      %1793 = vmatpush1.msra.mxu0 0.0
      %1794 = vmatprep.subr.mxu0 0.0
      %1795 = vmatpush1.msra.mxu0 0.0
      %1796 = vmatprep.subr.mxu0 0.0
      %1797 = vmatpush1.msra.mxu0 0.0
      %1798 = vmatprep.subr.mxu0 0.0
      %1799 = vmatpush1.msra.mxu0 0.0
      %1800 = vmatprep.mubr.f32.mxu0 0.0
      %1801 = vmatmul.mubr.f32.gmra.mrb[0].mxu0 %v1056
      %v1802 = vpop.f32.mrb[0].mxu0
      %v1803 = vadd.f32 0.0, %v1802
      %v1804 = vpop.f32.mrb[0].mxu0
      %1805 = vmatprep.mubr.f32.mxu0 0.0
      %1806 = vmatmul.mubr.f32.gmra.mrb[0].mxu0 %v1059
      %v1807 = vpop.f32.mrb[0].mxu0
      %v1808 = vadd.f32 0.0, %v1807
      %v1809 = vpop.f32.mrb[0].mxu0
      %1810 = vmatprep.mubr.f32.mxu0 0.0
      %1811 = vmatmul.mubr.f32.gmra.mrb[0].mxu0 %v1062
      %v1812 = vpop.f32.mrb[0].mxu0
      %v1813 = vadd.f32 0.0, %v1812
      %v1814 = vpop.f32.mrb[0].mxu0
      %1815 = vmatprep.mubr.f32.mxu0 0.0
      %1816 = vmatmul.mubr.f32.gmra.mrb[0].mxu0 %v1065
      %v1817 = vpop.f32.mrb[0].mxu0
      %v1818 = vadd.f32 0.0, %v1817
      %v1819 = vpop.f32.mrb[0].mxu0
      %1820 = vmatprep.mubr.f32.mxu0 0.0
      %1821 = vmatmul.mubr.f32.gmra.mrb[0].mxu0 %v1068
      %v1822 = vpop.f32.mrb[0].mxu0
      %v1823 = vadd.f32 0.0, %v1822
      %v1824 = vpop.f32.mrb[0].mxu0
      %1825 = vmatprep.mubr.f32.mxu0 0.0
      %1826 = vmatmul.mubr.f32.gmra.mrb[0].mxu0 %v1071
      %v1827 = vpop.f32.mrb[0].mxu0
      %v1828 = vadd.f32 0.0, %v1827
      %v1829 = vpop.f32.mrb[0].mxu0
      %1830 = vmatprep.mubr.f32.mxu0 0.0
      %1831 = vmatmul.mubr.f32.gmra.mrb[0].mxu0 %v1074
      %v1832 = vpop.f32.mrb[0].mxu0
      %v1833 = vadd.f32 0.0, %v1832
      %v1834 = vpop.f32.mrb[0].mxu0
      %1835 = vmatprep.mubr.f32.mxu0 0.0
      %1836 = vmatmul.mubr.f32.gmra.mrb[0].mxu0 %v1077
      %v1837 = vpop.f32.mrb[0].mxu0
      %v1838 = vadd.f32 0.0, %v1837
      %v1839 = vpop.f32.mrb[0].mxu0
      %1840 = vmatprep.mubr.f32.mxu0 0.0
      %1841 = vmatmul.mubr.f32.gmra.mrb[0].mxu0 %v1080
      %v1842 = vpop.f32.mrb[0].mxu0
      %v1843 = vadd.f32 0.0, %v1842
      %v1844 = vpop.f32.mrb[0].mxu0
      %1845 = vmatprep.mubr.f32.mxu0 0.0
      %1846 = vmatmul.mubr.f32.gmra.mrb[0].mxu0 %v1083
      %v1847 = vpop.f32.mrb[0].mxu0
      %v1848 = vadd.f32 0.0, %v1847
      %v1849 = vpop.f32.mrb[0].mxu0
      %1850 = vmatprep.mubr.f32.mxu0 0.0
      %1851 = vmatmul.mubr.f32.gmra.mrb[0].mxu0 %v1086
      %v1852 = vpop.f32.mrb[0].mxu0
      %v1853 = vadd.f32 0.0, %v1852
      %v1854 = vpop.f32.mrb[0].mxu0
      %1855 = vmatprep.mubr.f32.mxu0 0.0
      %1856 = vmatmul.mubr.f32.gmra.mrb[0].mxu0 %v1089
      %v1857 = vpop.f32.mrb[0].mxu0
      %v1858 = vadd.f32 0.0, %v1857
      %v1859 = vpop.f32.mrb[0].mxu0
      %1860 = vmatprep.mubr.f32.mxu0 0.0
      %1861 = vmatmul.mubr.f32.gmra.mrb[0].mxu0 %v1092
      %v1862 = vpop.f32.mrb[0].mxu0
      %v1863 = vadd.f32 0.0, %v1862
      %v1864 = vpop.f32.mrb[0].mxu0
      %1865 = vmatprep.mubr.f32.mxu0 0.0
      %1866 = vmatmul.mubr.f32.gmra.mrb[0].mxu0 %v1095
      %v1867 = vpop.f32.mrb[0].mxu0
      %v1868 = vadd.f32 0.0, %v1867
      %v1869 = vpop.f32.mrb[0].mxu0
      %1870 = vmatprep.mubr.f32.mxu0 0.0
      %1871 = vmatmul.mubr.f32.gmra.mrb[0].mxu0 %v1098
      %v1872 = vpop.f32.mrb[0].mxu0
      %v1873 = vadd.f32 0.0, %v1872
      %v1874 = vpop.f32.mrb[0].mxu0
      %1875 = vmatprep.mubr.f32.mxu0 0.0
      %1876 = vmatmul.mubr.f32.gmra.mrb[0].mxu0 %v1101
      %v1877 = vpop.f32.mrb[0].mxu0
      %v1878 = vadd.f32 0.0, %v1877
      %v1879 = vpop.f32.mrb[0].mxu0
      %1880 = vmatprep.mubr.f32.mxu0 0.0
      %1881 = vmatmul.mubr.f32.gmra.mrb[0].mxu0 %v1104
      %v1882 = vpop.f32.mrb[0].mxu0
      %v1883 = vadd.f32 0.0, %v1882
      %v1884 = vpop.f32.mrb[0].mxu0
      %1885 = vmatprep.mubr.f32.mxu0 0.0
      %1886 = vmatmul.mubr.f32.gmra.mrb[0].mxu0 %v1107
      %v1887 = vpop.f32.mrb[0].mxu0
      %v1888 = vadd.f32 0.0, %v1887
      %v1889 = vpop.f32.mrb[0].mxu0
      %1890 = vmatprep.mubr.f32.mxu0 0.0
      %1891 = vmatmul.mubr.f32.gmra.mrb[0].mxu0 %v1110
      %v1892 = vpop.f32.mrb[0].mxu0
      %v1893 = vadd.f32 0.0, %v1892
      %v1894 = vpop.f32.mrb[0].mxu0
      %1895 = vmatprep.mubr.f32.mxu0 0.0
      %1896 = vmatmul.mubr.f32.gmra.mrb[0].mxu0 %v1113
      %v1897 = vpop.f32.mrb[0].mxu0
      %v1898 = vadd.f32 0.0, %v1897
      %v1899 = vpop.f32.mrb[0].mxu0
      %1900 = vmatprep.mubr.f32.mxu0 0.0
      %1901 = vmatmul.mubr.f32.gmra.mrb[0].mxu0 %v1116
      %v1902 = vpop.f32.mrb[0].mxu0
      %v1903 = vadd.f32 0.0, %v1902
      %v1904 = vpop.f32.mrb[0].mxu0
      %1905 = vmatprep.mubr.f32.mxu0 0.0
      %1906 = vmatmul.mubr.f32.gmra.mrb[0].mxu0 %v1119
      %v1907 = vpop.f32.mrb[0].mxu0
      %v1908 = vadd.f32 0.0, %v1907
      %v1909 = vpop.f32.mrb[0].mxu0
      %1910 = vmatprep.mubr.f32.mxu0 0.0
      %1911 = vmatmul.mubr.f32.gmra.mrb[0].mxu0 %v1122
      %v1912 = vpop.f32.mrb[0].mxu0
      %v1913 = vadd.f32 0.0, %v1912
      %v1914 = vpop.f32.mrb[0].mxu0
      %1915 = vmatprep.mubr.f32.mxu0 0.0
      %1916 = vmatmul.mubr.f32.gmra.mrb[0].mxu0 %v1125
      %v1917 = vpop.f32.mrb[0].mxu0
      %v1918 = vadd.f32 0.0, %v1917
      %v1919 = vpop.f32.mrb[0].mxu0
      %1920 = vmatprep.mubr.f32.mxu0 0.0
      %1921 = vmatmul.mubr.f32.gmra.mrb[0].mxu0 %v1128
      %v1922 = vpop.f32.mrb[0].mxu0
      %v1923 = vadd.f32 0.0, %v1922
      %v1924 = vpop.f32.mrb[0].mxu0
      %1925 = vmatprep.mubr.f32.mxu0 0.0
      %1926 = vmatmul.mubr.f32.gmra.mrb[0].mxu0 %v1131
      %v1927 = vpop.f32.mrb[0].mxu0
      %v1928 = vadd.f32 0.0, %v1927
      %v1929 = vpop.f32.mrb[0].mxu0
      %1930 = vmatprep.mubr.f32.mxu0 0.0
      %1931 = vmatmul.mubr.f32.gmra.mrb[0].mxu0 %v1134
      %v1932 = vpop.f32.mrb[0].mxu0
      %v1933 = vadd.f32 0.0, %v1932
      %v1934 = vpop.f32.mrb[0].mxu0
      %1935 = vmatprep.mubr.f32.mxu0 0.0
      %1936 = vmatmul.mubr.f32.gmra.mrb[0].mxu0 %v1137
      %v1937 = vpop.f32.mrb[0].mxu0
      %v1938 = vadd.f32 0.0, %v1937
      %v1939 = vpop.f32.mrb[0].mxu0
      %1940 = vmatprep.mubr.f32.mxu0 0.0
      %1941 = vmatmul.mubr.f32.gmra.mrb[0].mxu0 %v1140
      %v1942 = vpop.f32.mrb[0].mxu0
      %v1943 = vadd.f32 0.0, %v1942
      %v1944 = vpop.f32.mrb[0].mxu0
      %1945 = vmatprep.mubr.f32.mxu0 0.0
      %1946 = vmatmul.mubr.f32.gmra.mrb[0].mxu0 %v1143
      %v1947 = vpop.f32.mrb[0].mxu0
      %v1948 = vadd.f32 0.0, %v1947
      %v1949 = vpop.f32.mrb[0].mxu0
      %1950 = vmatprep.mubr.f32.mxu0 0.0
      %1951 = vmatmul.mubr.f32.gmra.mrb[0].mxu0 %v1146
      %v1952 = vpop.f32.mrb[0].mxu0
      %v1953 = vadd.f32 0.0, %v1952
      %v1954 = vpop.f32.mrb[0].mxu0
      %1955 = vmatprep.mubr.f32.mxu0 0.0
      %1956 = vmatmul.mubr.f32.gmra.mrb[0].mxu0 %v1149
      %v1957 = vpop.f32.mrb[0].mxu0
      %v1958 = vadd.f32 0.0, %v1957
      %v1959 = vpop.f32.mrb[0].mxu0
      %1960 = vdwg.mxu0
      %v1961 = vld [vmem:[%s5] sm:$0xff]
      %v1962 = vld [vmem:[%s5 + $0x8] sm:$0xff]
      %v1963 = vld [vmem:[%s5 + $0x10] sm:$0xff]
      %v1964 = vld [vmem:[%s5 + $0x18] sm:$0xff]
      %v1965 = vld [vmem:[%s5 + $0x20] sm:$0xff]
      %v1966 = vld [vmem:[%s5 + $0x28] sm:$0xff]
      %v1967 = vld [vmem:[%s5 + $0x30] sm:$0xff]
      %v1968 = vld [vmem:[%s5 + $0x38] sm:$0xff]
      %v1969 = vld [vmem:[%s5 + $0x40] sm:$0xff]
      %v1970 = vld [vmem:[%s5 + $0x48] sm:$0xff]
      %v1971 = vld [vmem:[%s5 + $0x50] sm:$0xff]
      %v1972 = vld [vmem:[%s5 + $0x58] sm:$0xff]
      %v1973 = vld [vmem:[%s5 + $0x60] sm:$0xff]
      %v1974 = vld [vmem:[%s5 + $0x68] sm:$0xff]
      %v1975 = vld [vmem:[%s5 + $0x70] sm:$0xff]
      %v1976 = vld [vmem:[%s5 + $0x78] sm:$0xff]
      %v1977 = vld [vmem:[%s5 + $0x80] sm:$0xff]
      %v1978 = vld [vmem:[%s5 + $0x88] sm:$0xff]
      %v1979 = vld [vmem:[%s5 + $0x90] sm:$0xff]
      %v1980 = vld [vmem:[%s5 + $0x98] sm:$0xff]
      %v1981 = vld [vmem:[%s5 + $0xa0] sm:$0xff]
      %v1982 = vld [vmem:[%s5 + $0xa8] sm:$0xff]
      %v1983 = vld [vmem:[%s5 + $0xb0] sm:$0xff]
      %v1984 = vld [vmem:[%s5 + $0xb8] sm:$0xff]
      %v1985 = vld [vmem:[%s5 + $0xc0] sm:$0xff]
      %1986 = vmatprep.subr.mxu0 0.0
      %1987 = vmatpush1.msra.mxu0 %v1961
      %1988 = vmatprep.subr.mxu0 0.0
      %1989 = vmatpush1.msra.mxu0 %v1962
      %1990 = vmatprep.subr.mxu0 0.0
      %1991 = vmatpush1.msra.mxu0 %v1963
      %1992 = vmatprep.subr.mxu0 0.0
      %1993 = vmatpush1.msra.mxu0 %v1964
      %1994 = vmatprep.subr.mxu0 0.0
      %1995 = vmatpush1.msra.mxu0 %v1965
      %1996 = vmatprep.subr.mxu0 0.0
      %1997 = vmatpush1.msra.mxu0 %v1966
      %1998 = vmatprep.subr.mxu0 0.0
      %1999 = vmatpush1.msra.mxu0 %v1967
      %2000 = vmatprep.subr.mxu0 0.0
      %2001 = vmatpush1.msra.mxu0 %v1968
      %2002 = vmatprep.subr.mxu0 0.0
      %2003 = vmatpush1.msra.mxu0 %v1969
      %2004 = vmatprep.subr.mxu0 0.0
      %2005 = vmatpush1.msra.mxu0 %v1970
      %2006 = vmatprep.subr.mxu0 0.0
      %2007 = vmatpush1.msra.mxu0 %v1971
      %2008 = vmatprep.subr.mxu0 0.0
      %2009 = vmatpush1.msra.mxu0 %v1972
      %2010 = vmatprep.subr.mxu0 0.0
      %2011 = vmatpush1.msra.mxu0 %v1973
      %2012 = vmatprep.subr.mxu0 0.0
      %2013 = vmatpush1.msra.mxu0 %v1974
      %2014 = vmatprep.subr.mxu0 0.0
      %2015 = vmatpush1.msra.mxu0 %v1975
      %2016 = vmatprep.subr.mxu0 0.0
      %2017 = vmatpush1.msra.mxu0 %v1976
      %2018 = vmatprep.subr.mxu0 0.0
      %2019 = vmatpush1.msra.mxu0 %v1977
      %2020 = vmatprep.subr.mxu0 0.0
      %2021 = vmatpush1.msra.mxu0 %v1978
      %2022 = vmatprep.subr.mxu0 0.0
      %2023 = vmatpush1.msra.mxu0 %v1979
      %2024 = vmatprep.subr.mxu0 0.0
      %2025 = vmatpush1.msra.mxu0 %v1980
      %2026 = vmatprep.subr.mxu0 0.0
      %2027 = vmatpush1.msra.mxu0 %v1981
      %2028 = vmatprep.subr.mxu0 0.0
      %2029 = vmatpush1.msra.mxu0 %v1982
      %2030 = vmatprep.subr.mxu0 0.0
      %2031 = vmatpush1.msra.mxu0 %v1983
      %2032 = vmatprep.subr.mxu0 0.0
      %2033 = vmatpush1.msra.mxu0 %v1984
      %2034 = vmatprep.subr.mxu0 0.0
      %2035 = vmatpush1.msra.mxu0 %v1985
      %2036 = vmatprep.subr.mxu0 0.0
      %2037 = vmatpush1.msra.mxu0 0.0
      %2038 = vmatprep.subr.mxu0 0.0
      %2039 = vmatpush1.msra.mxu0 0.0
      %2040 = vmatprep.subr.mxu0 0.0
      %2041 = vmatpush1.msra.mxu0 0.0
      %2042 = vmatprep.subr.mxu0 0.0
      %2043 = vmatpush1.msra.mxu0 0.0
      %2044 = vmatprep.subr.mxu0 0.0
      %2045 = vmatpush1.msra.mxu0 0.0
      %2046 = vmatprep.subr.mxu0 0.0
      %2047 = vmatpush1.msra.mxu0 0.0
      %2048 = vmatprep.subr.mxu0 0.0
      %2049 = vmatpush1.msra.mxu0 0.0
      %2050 = vmatprep.mubr.f32.mxu0 %v1403
      %2051 = vmatmul.mubr.f32.gmra.mrb[0].mxu0 %v977
      %v2052 = vpop.f32.mrb[0].mxu0
      %v2053 = vadd.f32 0.0, %v2052
      %v2054 = vpop.f32.mrb[0].mxu0
      %2055 = vmatprep.mubr.f32.mxu0 %v1406
      %2056 = vmatmul.mubr.f32.gmra.mrb[0].mxu0 %v979
      %v2057 = vpop.f32.mrb[0].mxu0
      %v2058 = vadd.f32 0.0, %v2057
      %v2059 = vpop.f32.mrb[0].mxu0
      %2060 = vmatprep.mubr.f32.mxu0 %v1409
      %2061 = vmatmul.mubr.f32.gmra.mrb[0].mxu0 %v981
      %v2062 = vpop.f32.mrb[0].mxu0
      %v2063 = vadd.f32 0.0, %v2062
      %v2064 = vpop.f32.mrb[0].mxu0
      %2065 = vmatprep.mubr.f32.mxu0 %v1412
      %2066 = vmatmul.mubr.f32.gmra.mrb[0].mxu0 %v983
      %v2067 = vpop.f32.mrb[0].mxu0
      %v2068 = vadd.f32 0.0, %v2067
      %v2069 = vpop.f32.mrb[0].mxu0
      %2070 = vmatprep.mubr.f32.mxu0 %v1415
      %2071 = vmatmul.mubr.f32.gmra.mrb[0].mxu0 %v985
      %v2072 = vpop.f32.mrb[0].mxu0
      %v2073 = vadd.f32 0.0, %v2072
      %v2074 = vpop.f32.mrb[0].mxu0
      %2075 = vmatprep.mubr.f32.mxu0 %v1418
      %2076 = vmatmul.mubr.f32.gmra.mrb[0].mxu0 %v987
      %v2077 = vpop.f32.mrb[0].mxu0
      %v2078 = vadd.f32 0.0, %v2077
      %v2079 = vpop.f32.mrb[0].mxu0
      %2080 = vmatprep.mubr.f32.mxu0 %v1421
      %2081 = vmatmul.mubr.f32.gmra.mrb[0].mxu0 %v989
      %v2082 = vpop.f32.mrb[0].mxu0
      %v2083 = vadd.f32 0.0, %v2082
      %v2084 = vpop.f32.mrb[0].mxu0
      %2085 = vmatprep.mubr.f32.mxu0 %v1424
      %2086 = vmatmul.mubr.f32.gmra.mrb[0].mxu0 %v991
      %v2087 = vpop.f32.mrb[0].mxu0
      %v2088 = vadd.f32 0.0, %v2087
      %v2089 = vpop.f32.mrb[0].mxu0
      %2090 = vmatprep.mubr.f32.mxu0 %v1427
      %2091 = vmatmul.mubr.f32.gmra.mrb[0].mxu0 %v993
      %v2092 = vpop.f32.mrb[0].mxu0
      %v2093 = vadd.f32 0.0, %v2092
      %v2094 = vpop.f32.mrb[0].mxu0
      %2095 = vmatprep.mubr.f32.mxu0 %v1430
      %2096 = vmatmul.mubr.f32.gmra.mrb[0].mxu0 %v995
      %v2097 = vpop.f32.mrb[0].mxu0
      %v2098 = vadd.f32 0.0, %v2097
      %v2099 = vpop.f32.mrb[0].mxu0
      %2100 = vmatprep.mubr.f32.mxu0 %v1433
      %2101 = vmatmul.mubr.f32.gmra.mrb[0].mxu0 %v997
      %v2102 = vpop.f32.mrb[0].mxu0
      %v2103 = vadd.f32 0.0, %v2102
      %v2104 = vpop.f32.mrb[0].mxu0
      %2105 = vmatprep.mubr.f32.mxu0 %v1436
      %2106 = vmatmul.mubr.f32.gmra.mrb[0].mxu0 %v999
      %v2107 = vpop.f32.mrb[0].mxu0
      %v2108 = vadd.f32 0.0, %v2107
      %v2109 = vpop.f32.mrb[0].mxu0
      %2110 = vmatprep.mubr.f32.mxu0 %v1439
      %2111 = vmatmul.mubr.f32.gmra.mrb[0].mxu0 %v1001
      %v2112 = vpop.f32.mrb[0].mxu0
      %v2113 = vadd.f32 0.0, %v2112
      %v2114 = vpop.f32.mrb[0].mxu0
      %2115 = vmatprep.mubr.f32.mxu0 %v1442
      %2116 = vmatmul.mubr.f32.gmra.mrb[0].mxu0 %v1003
      %v2117 = vpop.f32.mrb[0].mxu0
      %v2118 = vadd.f32 0.0, %v2117
      %v2119 = vpop.f32.mrb[0].mxu0
      %2120 = vmatprep.mubr.f32.mxu0 %v1445
      %2121 = vmatmul.mubr.f32.gmra.mrb[0].mxu0 %v1005
      %v2122 = vpop.f32.mrb[0].mxu0
      %v2123 = vadd.f32 0.0, %v2122
      %v2124 = vpop.f32.mrb[0].mxu0
      %2125 = vmatprep.mubr.f32.mxu0 %v1448
      %2126 = vmatmul.mubr.f32.gmra.mrb[0].mxu0 %v1007
      %v2127 = vpop.f32.mrb[0].mxu0
      %v2128 = vadd.f32 0.0, %v2127
      %v2129 = vpop.f32.mrb[0].mxu0
      %2130 = vmatprep.mubr.f32.mxu0 %v1451
      %2131 = vmatmul.mubr.f32.gmra.mrb[0].mxu0 %v1009
      %v2132 = vpop.f32.mrb[0].mxu0
      %v2133 = vadd.f32 0.0, %v2132
      %v2134 = vpop.f32.mrb[0].mxu0
      %2135 = vmatprep.mubr.f32.mxu0 %v1454
      %2136 = vmatmul.mubr.f32.gmra.mrb[0].mxu0 %v1011
      %v2137 = vpop.f32.mrb[0].mxu0
      %v2138 = vadd.f32 0.0, %v2137
      %v2139 = vpop.f32.mrb[0].mxu0
      %2140 = vmatprep.mubr.f32.mxu0 %v1457
      %2141 = vmatmul.mubr.f32.gmra.mrb[0].mxu0 %v1013
      %v2142 = vpop.f32.mrb[0].mxu0
      %v2143 = vadd.f32 0.0, %v2142
      %v2144 = vpop.f32.mrb[0].mxu0
      %2145 = vmatprep.mubr.f32.mxu0 %v1460
      %2146 = vmatmul.mubr.f32.gmra.mrb[0].mxu0 %v1015
      %v2147 = vpop.f32.mrb[0].mxu0
      %v2148 = vadd.f32 0.0, %v2147
      %v2149 = vpop.f32.mrb[0].mxu0
      %2150 = vmatprep.mubr.f32.mxu0 %v1463
      %2151 = vmatmul.mubr.f32.gmra.mrb[0].mxu0 %v1017
      %v2152 = vpop.f32.mrb[0].mxu0
      %v2153 = vadd.f32 0.0, %v2152
      %v2154 = vpop.f32.mrb[0].mxu0
      %2155 = vmatprep.mubr.f32.mxu0 %v1466
      %2156 = vmatmul.mubr.f32.gmra.mrb[0].mxu0 %v1019
      %v2157 = vpop.f32.mrb[0].mxu0
      %v2158 = vadd.f32 0.0, %v2157
      %v2159 = vpop.f32.mrb[0].mxu0
      %2160 = vmatprep.mubr.f32.mxu0 %v1469
      %2161 = vmatmul.mubr.f32.gmra.mrb[0].mxu0 %v1021
      %v2162 = vpop.f32.mrb[0].mxu0
      %v2163 = vadd.f32 0.0, %v2162
      %v2164 = vpop.f32.mrb[0].mxu0
      %2165 = vmatprep.mubr.f32.mxu0 %v1472
      %2166 = vmatmul.mubr.f32.gmra.mrb[0].mxu0 %v1023
      %v2167 = vpop.f32.mrb[0].mxu0
      %v2168 = vadd.f32 0.0, %v2167
      %v2169 = vpop.f32.mrb[0].mxu0
      %2170 = vmatprep.mubr.f32.mxu0 %v1475
      %2171 = vmatmul.mubr.f32.gmra.mrb[0].mxu0 %v1025
      %v2172 = vpop.f32.mrb[0].mxu0
      %v2173 = vadd.f32 0.0, %v2172
      %v2174 = vpop.f32.mrb[0].mxu0
      %2175 = vmatprep.mubr.f32.mxu0 %v1478
      %2176 = vmatmul.mubr.f32.gmra.mrb[0].mxu0 %v1027
      %v2177 = vpop.f32.mrb[0].mxu0
      %v2178 = vadd.f32 0.0, %v2177
      %v2179 = vpop.f32.mrb[0].mxu0
      %2180 = vmatprep.mubr.f32.mxu0 %v1481
      %2181 = vmatmul.mubr.f32.gmra.mrb[0].mxu0 %v1029
      %v2182 = vpop.f32.mrb[0].mxu0
      %v2183 = vadd.f32 0.0, %v2182
      %v2184 = vpop.f32.mrb[0].mxu0
      %2185 = vmatprep.mubr.f32.mxu0 %v1484
      %2186 = vmatmul.mubr.f32.gmra.mrb[0].mxu0 %v1031
      %v2187 = vpop.f32.mrb[0].mxu0
      %v2188 = vadd.f32 0.0, %v2187
      %v2189 = vpop.f32.mrb[0].mxu0
      %2190 = vmatprep.mubr.f32.mxu0 %v1487
      %2191 = vmatmul.mubr.f32.gmra.mrb[0].mxu0 %v1033
      %v2192 = vpop.f32.mrb[0].mxu0
      %v2193 = vadd.f32 0.0, %v2192
      %v2194 = vpop.f32.mrb[0].mxu0
      %2195 = vmatprep.mubr.f32.mxu0 %v1490
      %2196 = vmatmul.mubr.f32.gmra.mrb[0].mxu0 %v1035
      %v2197 = vpop.f32.mrb[0].mxu0
      %v2198 = vadd.f32 0.0, %v2197
      %v2199 = vpop.f32.mrb[0].mxu0
      %2200 = vmatprep.mubr.f32.mxu0 %v1493
      %2201 = vmatmul.mubr.f32.gmra.mrb[0].mxu0 %v1037
      %v2202 = vpop.f32.mrb[0].mxu0
      %v2203 = vadd.f32 0.0, %v2202
      %v2204 = vpop.f32.mrb[0].mxu0
      %2205 = vmatprep.mubr.f32.mxu0 %v1496
      %2206 = vmatmul.mubr.f32.gmra.mrb[0].mxu0 %v1039
      %v2207 = vpop.f32.mrb[0].mxu0
      %v2208 = vadd.f32 0.0, %v2207
      %v2209 = vpop.f32.mrb[0].mxu0
      %2210 = vdwg.mxu0
      %v2211 = vmul.f32 %v1218, %v1565
      %v2212 = vmul.f32 %v1223, %v1570
      %v2213 = vmul.f32 %v1228, %v1575
      %v2214 = vmul.f32 %v1233, %v1580
      %v2215 = vmul.f32 %v1238, %v1585
      %v2216 = vmul.f32 %v1243, %v1590
      %v2217 = vmul.f32 %v1248, %v1595
      %v2218 = vmul.f32 %v1253, %v1600
      %v2219 = vmul.f32 %v1258, %v1605
      %v2220 = vmul.f32 %v1263, %v1610
      %v2221 = vmul.f32 %v1268, %v1615
      %v2222 = vmul.f32 %v1273, %v1620
      %v2223 = vmul.f32 %v1278, %v1625
      %v2224 = vmul.f32 %v1283, %v1630
      %v2225 = vmul.f32 %v1288, %v1635
      %v2226 = vmul.f32 %v1293, %v1640
      %v2227 = vmul.f32 %v1298, %v1645
      %v2228 = vmul.f32 %v1303, %v1650
      %v2229 = vmul.f32 %v1308, %v1655
      %v2230 = vmul.f32 %v1313, %v1660
      %v2231 = vmul.f32 %v1318, %v1665
      %v2232 = vmul.f32 %v1323, %v1670
      %v2233 = vmul.f32 %v1328, %v1675
      %v2234 = vmul.f32 %v1333, %v1680
      %v2235 = vmul.f32 %v1338, %v1685
      %v2236 = vmul.f32 %v1343, %v1690
      %v2237 = vmul.f32 %v1348, %v1695
      %v2238 = vmul.f32 %v1353, %v1700
      %v2239 = vmul.f32 %v1358, %v1705
      %v2240 = vmul.f32 %v1363, %v1710
      %v2241 = vmul.f32 %v1368, %v1715
      %v2242 = vmul.f32 %v1373, %v1720
      %v2243 = vld [vmem:[%s6] sm:$0xff]
      %v2244 = vld [vmem:[%s6 + $0x8] sm:$0xff]
      %v2245 = vld [vmem:[%s7] sm:$0xff]
      %v2246 = vld [vmem:[%s7 + $0x8] sm:$0xff]
      %vm2247 = vcmask 130048
      %v2249 = vsel %vm2247, %v2053, 0
      %v2252 = vsel %vm2247, %v2058, 0
      %v2255 = vsel %vm2247, %v2063, 0
      %v2258 = vsel %vm2247, %v2068, 0
      %v2261 = vsel %vm2247, %v2073, 0
      %v2264 = vsel %vm2247, %v2078, 0
      %v2267 = vsel %vm2247, %v2083, 0
      %v2270 = vsel %vm2247, %v2088, 0
      %v2273 = vsel %vm2247, %v2093, 0
      %v2276 = vsel %vm2247, %v2098, 0
      %v2279 = vsel %vm2247, %v2103, 0
      %v2282 = vsel %vm2247, %v2108, 0
      %v2285 = vsel %vm2247, %v2113, 0
      %v2288 = vsel %vm2247, %v2118, 0
      %v2291 = vsel %vm2247, %v2123, 0
      %v2294 = vsel %vm2247, %v2128, 0
      %v2297 = vsel %vm2247, %v2133, 0
      %v2300 = vsel %vm2247, %v2138, 0
      %v2303 = vsel %vm2247, %v2143, 0
      %v2306 = vsel %vm2247, %v2148, 0
      %v2309 = vsel %vm2247, %v2153, 0
      %v2312 = vsel %vm2247, %v2158, 0
      %v2315 = vsel %vm2247, %v2163, 0
      %v2318 = vsel %vm2247, %v2168, 0
      %v2321 = vsel %vm2247, %v2173, 0
      %v2324 = vsel %vm2247, %v2178, 0
      %v2327 = vsel %vm2247, %v2183, 0
      %v2330 = vsel %vm2247, %v2188, 0
      %v2333 = vsel %vm2247, %v2193, 0
      %v2336 = vsel %vm2247, %v2198, 0
      %v2339 = vsel %vm2247, %v2203, 0
      %v2342 = vsel %vm2247, %v2208, 0
      %2344 = vmatprep.subr.mxu0 0.0
      %2345 = vmatpush1.msra.mxu0 %v2245
      %2346 = vmatprep.subr.mxu0 0.0
      %2347 = vmatpush1.msra.mxu0 %v2246
      %2348 = vmatprep.subr.mxu0 0.0
      %2349 = vmatpush1.msra.mxu0 0.0
      %2350 = vmatprep.subr.mxu0 0.0
      %2351 = vmatpush1.msra.mxu0 0.0
      %2352 = vmatprep.subr.mxu0 0.0
      %2353 = vmatpush1.msra.mxu0 0.0
      %2354 = vmatprep.subr.mxu0 0.0
      %2355 = vmatpush1.msra.mxu0 0.0
      %2356 = vmatprep.subr.mxu0 0.0
      %2357 = vmatpush1.msra.mxu0 0.0
      %2358 = vmatprep.subr.mxu0 0.0
      %2359 = vmatpush1.msra.mxu0 0.0
      %2360 = vmatprep.subr.mxu0 0.0
      %2361 = vmatpush1.msra.mxu0 0.0
      %2362 = vmatprep.subr.mxu0 0.0
      %2363 = vmatpush1.msra.mxu0 0.0
      %2364 = vmatprep.subr.mxu0 0.0
      %2365 = vmatpush1.msra.mxu0 0.0
      %2366 = vmatprep.subr.mxu0 0.0
      %2367 = vmatpush1.msra.mxu0 0.0
      %2368 = vmatprep.subr.mxu0 0.0
      %2369 = vmatpush1.msra.mxu0 0.0
      %2370 = vmatprep.subr.mxu0 0.0
      %2371 = vmatpush1.msra.mxu0 0.0
      %2372 = vmatprep.subr.mxu0 0.0
      %2373 = vmatpush1.msra.mxu0 0.0
      %2374 = vmatprep.subr.mxu0 0.0
      %2375 = vmatpush1.msra.mxu0 0.0
      %2376 = vmatprep.subr.mxu0 0.0
      %2377 = vmatpush1.msra.mxu0 0.0
      %2378 = vmatprep.subr.mxu0 0.0
      %2379 = vmatpush1.msra.mxu0 0.0
      %2380 = vmatprep.subr.mxu0 0.0
      %2381 = vmatpush1.msra.mxu0 0.0
      %2382 = vmatprep.subr.mxu0 0.0
      %2383 = vmatpush1.msra.mxu0 0.0
      %2384 = vmatprep.subr.mxu0 0.0
      %2385 = vmatpush1.msra.mxu0 0.0
      %2386 = vmatprep.subr.mxu0 0.0
      %2387 = vmatpush1.msra.mxu0 0.0
      %2388 = vmatprep.subr.mxu0 0.0
      %2389 = vmatpush1.msra.mxu0 0.0
      %2390 = vmatprep.subr.mxu0 0.0
      %2391 = vmatpush1.msra.mxu0 0.0
      %2392 = vmatprep.subr.mxu0 0.0
      %2393 = vmatpush1.msra.mxu0 0.0
      %2394 = vmatprep.subr.mxu0 0.0
      %2395 = vmatpush1.msra.mxu0 0.0
      %2396 = vmatprep.subr.mxu0 0.0
      %2397 = vmatpush1.msra.mxu0 0.0
      %2398 = vmatprep.subr.mxu0 0.0
      %2399 = vmatpush1.msra.mxu0 0.0
      %2400 = vmatprep.subr.mxu0 0.0
      %2401 = vmatpush1.msra.mxu0 0.0
      %2402 = vmatprep.subr.mxu0 0.0
      %2403 = vmatpush1.msra.mxu0 0.0
      %2404 = vmatprep.subr.mxu0 0.0
      %2405 = vmatpush1.msra.mxu0 0.0
      %2406 = vmatprep.subr.mxu0 0.0
      %2407 = vmatpush1.msra.mxu0 0.0
      %2408 = vmatprep.mubr.f32.mxu0 0.0
      %2409 = vmatmul.mubr.f32.gmra.mrb[0].mxu0 %v2249
      %v2410 = vpop.f32.mrb[0].mxu0
      %v2411 = vadd.f32 0.0, %v2410
      %v2412 = vpop.f32.mrb[0].mxu0
      %2413 = vmatprep.mubr.f32.mxu0 0.0
      %2414 = vmatmul.mubr.f32.gmra.mrb[0].mxu0 %v2252
      %v2415 = vpop.f32.mrb[0].mxu0
      %v2416 = vadd.f32 0.0, %v2415
      %v2417 = vpop.f32.mrb[0].mxu0
      %2418 = vmatprep.mubr.f32.mxu0 0.0
      %2419 = vmatmul.mubr.f32.gmra.mrb[0].mxu0 %v2255
      %v2420 = vpop.f32.mrb[0].mxu0
      %v2421 = vadd.f32 0.0, %v2420
      %v2422 = vpop.f32.mrb[0].mxu0
      %2423 = vmatprep.mubr.f32.mxu0 0.0
      %2424 = vmatmul.mubr.f32.gmra.mrb[0].mxu0 %v2258
      %v2425 = vpop.f32.mrb[0].mxu0
      %v2426 = vadd.f32 0.0, %v2425
      %v2427 = vpop.f32.mrb[0].mxu0
      %2428 = vmatprep.mubr.f32.mxu0 0.0
      %2429 = vmatmul.mubr.f32.gmra.mrb[0].mxu0 %v2261
      %v2430 = vpop.f32.mrb[0].mxu0
      %v2431 = vadd.f32 0.0, %v2430
      %v2432 = vpop.f32.mrb[0].mxu0
      %2433 = vmatprep.mubr.f32.mxu0 0.0
      %2434 = vmatmul.mubr.f32.gmra.mrb[0].mxu0 %v2264
      %v2435 = vpop.f32.mrb[0].mxu0
      %v2436 = vadd.f32 0.0, %v2435
      %v2437 = vpop.f32.mrb[0].mxu0
      %2438 = vmatprep.mubr.f32.mxu0 0.0
      %2439 = vmatmul.mubr.f32.gmra.mrb[0].mxu0 %v2267
      %v2440 = vpop.f32.mrb[0].mxu0
      %v2441 = vadd.f32 0.0, %v2440
      %v2442 = vpop.f32.mrb[0].mxu0
      %2443 = vmatprep.mubr.f32.mxu0 0.0
      %2444 = vmatmul.mubr.f32.gmra.mrb[0].mxu0 %v2270
      %v2445 = vpop.f32.mrb[0].mxu0
      %v2446 = vadd.f32 0.0, %v2445
      %v2447 = vpop.f32.mrb[0].mxu0
      %2448 = vmatprep.mubr.f32.mxu0 0.0
      %2449 = vmatmul.mubr.f32.gmra.mrb[0].mxu0 %v2273
      %v2450 = vpop.f32.mrb[0].mxu0
      %v2451 = vadd.f32 0.0, %v2450
      %v2452 = vpop.f32.mrb[0].mxu0
      %2453 = vmatprep.mubr.f32.mxu0 0.0
      %2454 = vmatmul.mubr.f32.gmra.mrb[0].mxu0 %v2276
      %v2455 = vpop.f32.mrb[0].mxu0
      %v2456 = vadd.f32 0.0, %v2455
      %v2457 = vpop.f32.mrb[0].mxu0
      %2458 = vmatprep.mubr.f32.mxu0 0.0
      %2459 = vmatmul.mubr.f32.gmra.mrb[0].mxu0 %v2279
      %v2460 = vpop.f32.mrb[0].mxu0
      %v2461 = vadd.f32 0.0, %v2460
      %v2462 = vpop.f32.mrb[0].mxu0
      %2463 = vmatprep.mubr.f32.mxu0 0.0
      %2464 = vmatmul.mubr.f32.gmra.mrb[0].mxu0 %v2282
      %v2465 = vpop.f32.mrb[0].mxu0
      %v2466 = vadd.f32 0.0, %v2465
      %v2467 = vpop.f32.mrb[0].mxu0
      %2468 = vmatprep.mubr.f32.mxu0 0.0
      %2469 = vmatmul.mubr.f32.gmra.mrb[0].mxu0 %v2285
      %v2470 = vpop.f32.mrb[0].mxu0
      %v2471 = vadd.f32 0.0, %v2470
      %v2472 = vpop.f32.mrb[0].mxu0
      %2473 = vmatprep.mubr.f32.mxu0 0.0
      %2474 = vmatmul.mubr.f32.gmra.mrb[0].mxu0 %v2288
      %v2475 = vpop.f32.mrb[0].mxu0
      %v2476 = vadd.f32 0.0, %v2475
      %v2477 = vpop.f32.mrb[0].mxu0
      %2478 = vmatprep.mubr.f32.mxu0 0.0
      %2479 = vmatmul.mubr.f32.gmra.mrb[0].mxu0 %v2291
      %v2480 = vpop.f32.mrb[0].mxu0
      %v2481 = vadd.f32 0.0, %v2480
      %v2482 = vpop.f32.mrb[0].mxu0
      %2483 = vmatprep.mubr.f32.mxu0 0.0
      %2484 = vmatmul.mubr.f32.gmra.mrb[0].mxu0 %v2294
      %v2485 = vpop.f32.mrb[0].mxu0
      %v2486 = vadd.f32 0.0, %v2485
      %v2487 = vpop.f32.mrb[0].mxu0
      %2488 = vmatprep.mubr.f32.mxu0 0.0
      %2489 = vmatmul.mubr.f32.gmra.mrb[0].mxu0 %v2297
      %v2490 = vpop.f32.mrb[0].mxu0
      %v2491 = vadd.f32 0.0, %v2490
      %v2492 = vpop.f32.mrb[0].mxu0
      %2493 = vmatprep.mubr.f32.mxu0 0.0
      %2494 = vmatmul.mubr.f32.gmra.mrb[0].mxu0 %v2300
      %v2495 = vpop.f32.mrb[0].mxu0
      %v2496 = vadd.f32 0.0, %v2495
      %v2497 = vpop.f32.mrb[0].mxu0
      %2498 = vmatprep.mubr.f32.mxu0 0.0
      %2499 = vmatmul.mubr.f32.gmra.mrb[0].mxu0 %v2303
      %v2500 = vpop.f32.mrb[0].mxu0
      %v2501 = vadd.f32 0.0, %v2500
      %v2502 = vpop.f32.mrb[0].mxu0
      %2503 = vmatprep.mubr.f32.mxu0 0.0
      %2504 = vmatmul.mubr.f32.gmra.mrb[0].mxu0 %v2306
      %v2505 = vpop.f32.mrb[0].mxu0
      %v2506 = vadd.f32 0.0, %v2505
      %v2507 = vpop.f32.mrb[0].mxu0
      %2508 = vmatprep.mubr.f32.mxu0 0.0
      %2509 = vmatmul.mubr.f32.gmra.mrb[0].mxu0 %v2309
      %v2510 = vpop.f32.mrb[0].mxu0
      %v2511 = vadd.f32 0.0, %v2510
      %v2512 = vpop.f32.mrb[0].mxu0
      %2513 = vmatprep.mubr.f32.mxu0 0.0
      %2514 = vmatmul.mubr.f32.gmra.mrb[0].mxu0 %v2312
      %v2515 = vpop.f32.mrb[0].mxu0
      %v2516 = vadd.f32 0.0, %v2515
      %v2517 = vpop.f32.mrb[0].mxu0
      %2518 = vmatprep.mubr.f32.mxu0 0.0
      %2519 = vmatmul.mubr.f32.gmra.mrb[0].mxu0 %v2315
      %v2520 = vpop.f32.mrb[0].mxu0
      %v2521 = vadd.f32 0.0, %v2520
      %v2522 = vpop.f32.mrb[0].mxu0
      %2523 = vmatprep.mubr.f32.mxu0 0.0
      %2524 = vmatmul.mubr.f32.gmra.mrb[0].mxu0 %v2318
      %v2525 = vpop.f32.mrb[0].mxu0
      %v2526 = vadd.f32 0.0, %v2525
      %v2527 = vpop.f32.mrb[0].mxu0
      %2528 = vmatprep.mubr.f32.mxu0 0.0
      %2529 = vmatmul.mubr.f32.gmra.mrb[0].mxu0 %v2321
      %v2530 = vpop.f32.mrb[0].mxu0
      %v2531 = vadd.f32 0.0, %v2530
      %v2532 = vpop.f32.mrb[0].mxu0
      %2533 = vmatprep.mubr.f32.mxu0 0.0
      %2534 = vmatmul.mubr.f32.gmra.mrb[0].mxu0 %v2324
      %v2535 = vpop.f32.mrb[0].mxu0
      %v2536 = vadd.f32 0.0, %v2535
      %v2537 = vpop.f32.mrb[0].mxu0
      %2538 = vmatprep.mubr.f32.mxu0 0.0
      %2539 = vmatmul.mubr.f32.gmra.mrb[0].mxu0 %v2327
      %v2540 = vpop.f32.mrb[0].mxu0
      %v2541 = vadd.f32 0.0, %v2540
      %v2542 = vpop.f32.mrb[0].mxu0
      %2543 = vmatprep.mubr.f32.mxu0 0.0
      %2544 = vmatmul.mubr.f32.gmra.mrb[0].mxu0 %v2330
      %v2545 = vpop.f32.mrb[0].mxu0
      %v2546 = vadd.f32 0.0, %v2545
      %v2547 = vpop.f32.mrb[0].mxu0
      %2548 = vmatprep.mubr.f32.mxu0 0.0
      %2549 = vmatmul.mubr.f32.gmra.mrb[0].mxu0 %v2333
      %v2550 = vpop.f32.mrb[0].mxu0
      %v2551 = vadd.f32 0.0, %v2550
      %v2552 = vpop.f32.mrb[0].mxu0
      %2553 = vmatprep.mubr.f32.mxu0 0.0
      %2554 = vmatmul.mubr.f32.gmra.mrb[0].mxu0 %v2336
      %v2555 = vpop.f32.mrb[0].mxu0
      %v2556 = vadd.f32 0.0, %v2555
      %v2557 = vpop.f32.mrb[0].mxu0
      %2558 = vmatprep.mubr.f32.mxu0 0.0
      %2559 = vmatmul.mubr.f32.gmra.mrb[0].mxu0 %v2339
      %v2560 = vpop.f32.mrb[0].mxu0
      %v2561 = vadd.f32 0.0, %v2560
      %v2562 = vpop.f32.mrb[0].mxu0
      %2563 = vmatprep.mubr.f32.mxu0 0.0
      %2564 = vmatmul.mubr.f32.gmra.mrb[0].mxu0 %v2342
      %v2565 = vpop.f32.mrb[0].mxu0
      %v2566 = vadd.f32 0.0, %v2565
      %v2567 = vpop.f32.mrb[0].mxu0
      %2568 = vdwg.mxu0
      %v2570 = vsel %vm2247, %v1803, 0
      %v2573 = vsel %vm2247, %v1808, 0
      %v2576 = vsel %vm2247, %v1813, 0
      %v2579 = vsel %vm2247, %v1818, 0
      %v2582 = vsel %vm2247, %v1823, 0
      %v2585 = vsel %vm2247, %v1828, 0
      %v2588 = vsel %vm2247, %v1833, 0
      %v2591 = vsel %vm2247, %v1838, 0
      %v2594 = vsel %vm2247, %v1843, 0
      %v2597 = vsel %vm2247, %v1848, 0
      %v2600 = vsel %vm2247, %v1853, 0
      %v2603 = vsel %vm2247, %v1858, 0
      %v2606 = vsel %vm2247, %v1863, 0
      %v2609 = vsel %vm2247, %v1868, 0
      %v2612 = vsel %vm2247, %v1873, 0
      %v2615 = vsel %vm2247, %v1878, 0
      %v2618 = vsel %vm2247, %v1883, 0
      %v2621 = vsel %vm2247, %v1888, 0
      %v2624 = vsel %vm2247, %v1893, 0
      %v2627 = vsel %vm2247, %v1898, 0
      %v2630 = vsel %vm2247, %v1903, 0
      %v2633 = vsel %vm2247, %v1908, 0
      %v2636 = vsel %vm2247, %v1913, 0
      %v2639 = vsel %vm2247, %v1918, 0
      %v2642 = vsel %vm2247, %v1923, 0
      %v2645 = vsel %vm2247, %v1928, 0
      %v2648 = vsel %vm2247, %v1933, 0
      %v2651 = vsel %vm2247, %v1938, 0
      %v2654 = vsel %vm2247, %v1943, 0
      %v2657 = vsel %vm2247, %v1948, 0
      %v2660 = vsel %vm2247, %v1953, 0
      %v2663 = vsel %vm2247, %v1958, 0
      %2665 = vmatprep.subr.mxu0 0.0
      %2666 = vmatpush1.msra.mxu0 %v2243
      %2667 = vmatprep.subr.mxu0 0.0
      %2668 = vmatpush1.msra.mxu0 %v2244
      %2669 = vmatprep.subr.mxu0 0.0
      %2670 = vmatpush1.msra.mxu0 0.0
      %2671 = vmatprep.subr.mxu0 0.0
      %2672 = vmatpush1.msra.mxu0 0.0
      %2673 = vmatprep.subr.mxu0 0.0
      %2674 = vmatpush1.msra.mxu0 0.0
      %2675 = vmatprep.subr.mxu0 0.0
      %2676 = vmatpush1.msra.mxu0 0.0
      %2677 = vmatprep.subr.mxu0 0.0
      %2678 = vmatpush1.msra.mxu0 0.0
      %2679 = vmatprep.subr.mxu0 0.0
      %2680 = vmatpush1.msra.mxu0 0.0
      %2681 = vmatprep.subr.mxu0 0.0
      %2682 = vmatpush1.msra.mxu0 0.0
      %2683 = vmatprep.subr.mxu0 0.0
      %2684 = vmatpush1.msra.mxu0 0.0
      %2685 = vmatprep.subr.mxu0 0.0
      %2686 = vmatpush1.msra.mxu0 0.0
      %2687 = vmatprep.subr.mxu0 0.0
      %2688 = vmatpush1.msra.mxu0 0.0
      %2689 = vmatprep.subr.mxu0 0.0
      %2690 = vmatpush1.msra.mxu0 0.0
      %2691 = vmatprep.subr.mxu0 0.0
      %2692 = vmatpush1.msra.mxu0 0.0
      %2693 = vmatprep.subr.mxu0 0.0
      %2694 = vmatpush1.msra.mxu0 0.0
      %2695 = vmatprep.subr.mxu0 0.0
      %2696 = vmatpush1.msra.mxu0 0.0
      %2697 = vmatprep.subr.mxu0 0.0
      %2698 = vmatpush1.msra.mxu0 0.0
      %2699 = vmatprep.subr.mxu0 0.0
      %2700 = vmatpush1.msra.mxu0 0.0
      %2701 = vmatprep.subr.mxu0 0.0
      %2702 = vmatpush1.msra.mxu0 0.0
      %2703 = vmatprep.subr.mxu0 0.0
      %2704 = vmatpush1.msra.mxu0 0.0
      %2705 = vmatprep.subr.mxu0 0.0
      %2706 = vmatpush1.msra.mxu0 0.0
      %2707 = vmatprep.subr.mxu0 0.0
      %2708 = vmatpush1.msra.mxu0 0.0
      %2709 = vmatprep.subr.mxu0 0.0
      %2710 = vmatpush1.msra.mxu0 0.0
      %2711 = vmatprep.subr.mxu0 0.0
      %2712 = vmatpush1.msra.mxu0 0.0
      %2713 = vmatprep.subr.mxu0 0.0
      %2714 = vmatpush1.msra.mxu0 0.0
      %2715 = vmatprep.subr.mxu0 0.0
      %2716 = vmatpush1.msra.mxu0 0.0
      %2717 = vmatprep.subr.mxu0 0.0
      %2718 = vmatpush1.msra.mxu0 0.0
      %2719 = vmatprep.subr.mxu0 0.0
      %2720 = vmatpush1.msra.mxu0 0.0
      %2721 = vmatprep.subr.mxu0 0.0
      %2722 = vmatpush1.msra.mxu0 0.0
      %2723 = vmatprep.subr.mxu0 0.0
      %2724 = vmatpush1.msra.mxu0 0.0
      %2725 = vmatprep.subr.mxu0 0.0
      %2726 = vmatpush1.msra.mxu0 0.0
      %2727 = vmatprep.subr.mxu0 0.0
      %2728 = vmatpush1.msra.mxu0 0.0
      %2729 = vmatprep.mubr.f32.mxu0 0.0
      %2730 = vmatmul.mubr.f32.gmra.mrb[0].mxu0 %v2570
      %v2731 = vpop.f32.mrb[0].mxu0
      %v2732 = vadd.f32 %v2411, %v2731
      %v2733 = vpop.f32.mrb[0].mxu0
      %2734 = vmatprep.mubr.f32.mxu0 0.0
      %2735 = vmatmul.mubr.f32.gmra.mrb[0].mxu0 %v2573
      %v2736 = vpop.f32.mrb[0].mxu0
      %v2737 = vadd.f32 %v2416, %v2736
      %v2738 = vpop.f32.mrb[0].mxu0
      %2739 = vmatprep.mubr.f32.mxu0 0.0
      %2740 = vmatmul.mubr.f32.gmra.mrb[0].mxu0 %v2576
      %v2741 = vpop.f32.mrb[0].mxu0
      %v2742 = vadd.f32 %v2421, %v2741
      %v2743 = vpop.f32.mrb[0].mxu0
      %2744 = vmatprep.mubr.f32.mxu0 0.0
      %2745 = vmatmul.mubr.f32.gmra.mrb[0].mxu0 %v2579
      %v2746 = vpop.f32.mrb[0].mxu0
      %v2747 = vadd.f32 %v2426, %v2746
      %v2748 = vpop.f32.mrb[0].mxu0
      %2749 = vmatprep.mubr.f32.mxu0 0.0
      %2750 = vmatmul.mubr.f32.gmra.mrb[0].mxu0 %v2582
      %v2751 = vpop.f32.mrb[0].mxu0
      %v2752 = vadd.f32 %v2431, %v2751
      %v2753 = vpop.f32.mrb[0].mxu0
      %2754 = vmatprep.mubr.f32.mxu0 0.0
      %2755 = vmatmul.mubr.f32.gmra.mrb[0].mxu0 %v2585
      %v2756 = vpop.f32.mrb[0].mxu0
      %v2757 = vadd.f32 %v2436, %v2756
      %v2758 = vpop.f32.mrb[0].mxu0
      %2759 = vmatprep.mubr.f32.mxu0 0.0
      %2760 = vmatmul.mubr.f32.gmra.mrb[0].mxu0 %v2588
      %v2761 = vpop.f32.mrb[0].mxu0
      %v2762 = vadd.f32 %v2441, %v2761
      %v2763 = vpop.f32.mrb[0].mxu0
      %2764 = vmatprep.mubr.f32.mxu0 0.0
      %2765 = vmatmul.mubr.f32.gmra.mrb[0].mxu0 %v2591
      %v2766 = vpop.f32.mrb[0].mxu0
      %v2767 = vadd.f32 %v2446, %v2766
      %v2768 = vpop.f32.mrb[0].mxu0
      %2769 = vmatprep.mubr.f32.mxu0 0.0
      %2770 = vmatmul.mubr.f32.gmra.mrb[0].mxu0 %v2594
      %v2771 = vpop.f32.mrb[0].mxu0
      %v2772 = vadd.f32 %v2451, %v2771
      %v2773 = vpop.f32.mrb[0].mxu0
      %2774 = vmatprep.mubr.f32.mxu0 0.0
      %2775 = vmatmul.mubr.f32.gmra.mrb[0].mxu0 %v2597
      %v2776 = vpop.f32.mrb[0].mxu0
      %v2777 = vadd.f32 %v2456, %v2776
      %v2778 = vpop.f32.mrb[0].mxu0
      %2779 = vmatprep.mubr.f32.mxu0 0.0
      %2780 = vmatmul.mubr.f32.gmra.mrb[0].mxu0 %v2600
      %v2781 = vpop.f32.mrb[0].mxu0
      %v2782 = vadd.f32 %v2461, %v2781
      %v2783 = vpop.f32.mrb[0].mxu0
      %2784 = vmatprep.mubr.f32.mxu0 0.0
      %2785 = vmatmul.mubr.f32.gmra.mrb[0].mxu0 %v2603
      %v2786 = vpop.f32.mrb[0].mxu0
      %v2787 = vadd.f32 %v2466, %v2786
      %v2788 = vpop.f32.mrb[0].mxu0
      %2789 = vmatprep.mubr.f32.mxu0 0.0
      %2790 = vmatmul.mubr.f32.gmra.mrb[0].mxu0 %v2606
      %v2791 = vpop.f32.mrb[0].mxu0
      %v2792 = vadd.f32 %v2471, %v2791
      %v2793 = vpop.f32.mrb[0].mxu0
      %2794 = vmatprep.mubr.f32.mxu0 0.0
      %2795 = vmatmul.mubr.f32.gmra.mrb[0].mxu0 %v2609
      %v2796 = vpop.f32.mrb[0].mxu0
      %v2797 = vadd.f32 %v2476, %v2796
      %v2798 = vpop.f32.mrb[0].mxu0
      %2799 = vmatprep.mubr.f32.mxu0 0.0
      %2800 = vmatmul.mubr.f32.gmra.mrb[0].mxu0 %v2612
      %v2801 = vpop.f32.mrb[0].mxu0
      %v2802 = vadd.f32 %v2481, %v2801
      %v2803 = vpop.f32.mrb[0].mxu0
      %2804 = vmatprep.mubr.f32.mxu0 0.0
      %2805 = vmatmul.mubr.f32.gmra.mrb[0].mxu0 %v2615
      %v2806 = vpop.f32.mrb[0].mxu0
      %v2807 = vadd.f32 %v2486, %v2806
      %v2808 = vpop.f32.mrb[0].mxu0
      %2809 = vmatprep.mubr.f32.mxu0 0.0
      %2810 = vmatmul.mubr.f32.gmra.mrb[0].mxu0 %v2618
      %v2811 = vpop.f32.mrb[0].mxu0
      %v2812 = vadd.f32 %v2491, %v2811
      %v2813 = vpop.f32.mrb[0].mxu0
      %2814 = vmatprep.mubr.f32.mxu0 0.0
      %2815 = vmatmul.mubr.f32.gmra.mrb[0].mxu0 %v2621
      %v2816 = vpop.f32.mrb[0].mxu0
      %v2817 = vadd.f32 %v2496, %v2816
      %v2818 = vpop.f32.mrb[0].mxu0
      %2819 = vmatprep.mubr.f32.mxu0 0.0
      %2820 = vmatmul.mubr.f32.gmra.mrb[0].mxu0 %v2624
      %v2821 = vpop.f32.mrb[0].mxu0
      %v2822 = vadd.f32 %v2501, %v2821
      %v2823 = vpop.f32.mrb[0].mxu0
      %2824 = vmatprep.mubr.f32.mxu0 0.0
      %2825 = vmatmul.mubr.f32.gmra.mrb[0].mxu0 %v2627
      %v2826 = vpop.f32.mrb[0].mxu0
      %v2827 = vadd.f32 %v2506, %v2826
      %v2828 = vpop.f32.mrb[0].mxu0
      %2829 = vmatprep.mubr.f32.mxu0 0.0
      %2830 = vmatmul.mubr.f32.gmra.mrb[0].mxu0 %v2630
      %v2831 = vpop.f32.mrb[0].mxu0
      %v2832 = vadd.f32 %v2511, %v2831
      %v2833 = vpop.f32.mrb[0].mxu0
      %2834 = vmatprep.mubr.f32.mxu0 0.0
      %2835 = vmatmul.mubr.f32.gmra.mrb[0].mxu0 %v2633
      %v2836 = vpop.f32.mrb[0].mxu0
      %v2837 = vadd.f32 %v2516, %v2836
      %v2838 = vpop.f32.mrb[0].mxu0
      %2839 = vmatprep.mubr.f32.mxu0 0.0
      %2840 = vmatmul.mubr.f32.gmra.mrb[0].mxu0 %v2636
      %v2841 = vpop.f32.mrb[0].mxu0
      %v2842 = vadd.f32 %v2521, %v2841
      %v2843 = vpop.f32.mrb[0].mxu0
      %2844 = vmatprep.mubr.f32.mxu0 0.0
      %2845 = vmatmul.mubr.f32.gmra.mrb[0].mxu0 %v2639
      %v2846 = vpop.f32.mrb[0].mxu0
      %v2847 = vadd.f32 %v2526, %v2846
      %v2848 = vpop.f32.mrb[0].mxu0
      %2849 = vmatprep.mubr.f32.mxu0 0.0
      %2850 = vmatmul.mubr.f32.gmra.mrb[0].mxu0 %v2642
      %v2851 = vpop.f32.mrb[0].mxu0
      %v2852 = vadd.f32 %v2531, %v2851
      %v2853 = vpop.f32.mrb[0].mxu0
      %2854 = vmatprep.mubr.f32.mxu0 0.0
      %2855 = vmatmul.mubr.f32.gmra.mrb[0].mxu0 %v2645
      %v2856 = vpop.f32.mrb[0].mxu0
      %v2857 = vadd.f32 %v2536, %v2856
      %v2858 = vpop.f32.mrb[0].mxu0
      %2859 = vmatprep.mubr.f32.mxu0 0.0
      %2860 = vmatmul.mubr.f32.gmra.mrb[0].mxu0 %v2648
      %v2861 = vpop.f32.mrb[0].mxu0
      %v2862 = vadd.f32 %v2541, %v2861
      %v2863 = vpop.f32.mrb[0].mxu0
      %2864 = vmatprep.mubr.f32.mxu0 0.0
      %2865 = vmatmul.mubr.f32.gmra.mrb[0].mxu0 %v2651
      %v2866 = vpop.f32.mrb[0].mxu0
      %v2867 = vadd.f32 %v2546, %v2866
      %v2868 = vpop.f32.mrb[0].mxu0
      %2869 = vmatprep.mubr.f32.mxu0 0.0
      %2870 = vmatmul.mubr.f32.gmra.mrb[0].mxu0 %v2654
      %v2871 = vpop.f32.mrb[0].mxu0
      %v2872 = vadd.f32 %v2551, %v2871
      %v2873 = vpop.f32.mrb[0].mxu0
      %2874 = vmatprep.mubr.f32.mxu0 0.0
      %2875 = vmatmul.mubr.f32.gmra.mrb[0].mxu0 %v2657
      %v2876 = vpop.f32.mrb[0].mxu0
      %v2877 = vadd.f32 %v2556, %v2876
      %v2878 = vpop.f32.mrb[0].mxu0
      %2879 = vmatprep.mubr.f32.mxu0 0.0
      %2880 = vmatmul.mubr.f32.gmra.mrb[0].mxu0 %v2660
      %v2881 = vpop.f32.mrb[0].mxu0
      %v2882 = vadd.f32 %v2561, %v2881
      %v2883 = vpop.f32.mrb[0].mxu0
      %2884 = vmatprep.mubr.f32.mxu0 0.0
      %2885 = vmatmul.mubr.f32.gmra.mrb[0].mxu0 %v2663
      %v2886 = vpop.f32.mrb[0].mxu0
      %v2887 = vadd.f32 %v2566, %v2886
      %v2888 = vpop.f32.mrb[0].mxu0
      %2889 = vdwg.mxu0
      %v2890 = vld [vmem:[%s8] sm:$0x1]
      %v2892 = vlaneseq
      %v2893 = vshrl.u32 %v2892, 7
      %v2894 = vsub.s32 0, %v2893
      %v2895 = vrot.slane %v2890, %v2894
      %v2897 = vadd.f32 %v2732, %v2895
      %v2898 = vadd.f32 %v2737, %v2895
      %v2899 = vadd.f32 %v2742, %v2895
      %v2900 = vadd.f32 %v2747, %v2895
      %v2901 = vadd.f32 %v2752, %v2895
      %v2902 = vadd.f32 %v2757, %v2895
      %v2903 = vadd.f32 %v2762, %v2895
      %v2904 = vadd.f32 %v2767, %v2895
      %v2905 = vadd.f32 %v2772, %v2895
      %v2906 = vadd.f32 %v2777, %v2895
      %v2907 = vadd.f32 %v2782, %v2895
      %v2908 = vadd.f32 %v2787, %v2895
      %v2909 = vadd.f32 %v2792, %v2895
      %v2910 = vadd.f32 %v2797, %v2895
      %v2911 = vadd.f32 %v2802, %v2895
      %v2912 = vadd.f32 %v2807, %v2895
      %v2913 = vadd.f32 %v2812, %v2895
      %v2914 = vadd.f32 %v2817, %v2895
      %v2915 = vadd.f32 %v2822, %v2895
      %v2916 = vadd.f32 %v2827, %v2895
      %v2917 = vadd.f32 %v2832, %v2895
      %v2918 = vadd.f32 %v2837, %v2895
      %v2919 = vadd.f32 %v2842, %v2895
      %v2920 = vadd.f32 %v2847, %v2895
      %v2921 = vadd.f32 %v2852, %v2895
      %v2922 = vadd.f32 %v2857, %v2895
      %v2923 = vadd.f32 %v2862, %v2895
      %v2924 = vadd.f32 %v2867, %v2895
      %v2925 = vadd.f32 %v2872, %v2895
      %v2926 = vadd.f32 %v2877, %v2895
      %v2927 = vadd.f32 %v2882, %v2895
      %v2928 = vadd.f32 %v2887, %v2895
      %v2929 = vmax.f32 %v2897, 0.0
      %v2930 = vmax.f32 %v2898, 0.0
      %v2931 = vmax.f32 %v2899, 0.0
      %v2932 = vmax.f32 %v2900, 0.0
      %v2933 = vmax.f32 %v2901, 0.0
      %v2934 = vmax.f32 %v2902, 0.0
      %v2935 = vmax.f32 %v2903, 0.0
      %v2936 = vmax.f32 %v2904, 0.0
      %v2937 = vmax.f32 %v2905, 0.0
      %v2938 = vmax.f32 %v2906, 0.0
      %v2939 = vmax.f32 %v2907, 0.0
      %v2940 = vmax.f32 %v2908, 0.0
      %v2941 = vmax.f32 %v2909, 0.0
      %v2942 = vmax.f32 %v2910, 0.0
      %v2943 = vmax.f32 %v2911, 0.0
      %v2944 = vmax.f32 %v2912, 0.0
      %v2945 = vmax.f32 %v2913, 0.0
      %v2946 = vmax.f32 %v2914, 0.0
      %v2947 = vmax.f32 %v2915, 0.0
      %v2948 = vmax.f32 %v2916, 0.0
      %v2949 = vmax.f32 %v2917, 0.0
      %v2950 = vmax.f32 %v2918, 0.0
      %v2951 = vmax.f32 %v2919, 0.0
      %v2952 = vmax.f32 %v2920, 0.0
      %v2953 = vmax.f32 %v2921, 0.0
      %v2954 = vmax.f32 %v2922, 0.0
      %v2955 = vmax.f32 %v2923, 0.0
      %v2956 = vmax.f32 %v2924, 0.0
      %v2957 = vmax.f32 %v2925, 0.0
      %v2958 = vmax.f32 %v2926, 0.0
      %v2959 = vmax.f32 %v2927, 0.0
      %v2960 = vmax.f32 %v2928, 0.0
      %v2961 = vld [vmem:[%s9] sm:$0xff]
      %v2962 = vld [vmem:[%s9 + $0x8] sm:$0xff]
      %v2963 = vld [vmem:[%s9 + $0x10] sm:$0xff]
      %v2964 = vld [vmem:[%s9 + $0x18] sm:$0xff]
      %v2965 = vld [vmem:[%s9 + $0x20] sm:$0xff]
      %v2966 = vld [vmem:[%s9 + $0x28] sm:$0xff]
      %v2967 = vld [vmem:[%s9 + $0x30] sm:$0xff]
      %v2968 = vld [vmem:[%s9 + $0x38] sm:$0xff]
      %v2969 = vld [vmem:[%s9 + $0x40] sm:$0xff]
      %v2970 = vld [vmem:[%s9 + $0x48] sm:$0xff]
      %v2971 = vld [vmem:[%s9 + $0x50] sm:$0xff]
      %v2972 = vld [vmem:[%s9 + $0x58] sm:$0xff]
      %v2973 = vld [vmem:[%s9 + $0x60] sm:$0xff]
      %v2974 = vld [vmem:[%s9 + $0x68] sm:$0xff]
      %v2975 = vld [vmem:[%s9 + $0x70] sm:$0xff]
      %v2976 = vld [vmem:[%s9 + $0x78] sm:$0xff]
      %v2977 = vld [vmem:[%s10] sm:$0x1]
      %v2979 = vlaneseq
      %v2980 = vshrl.u32 %v2979, 7
      %v2981 = vsub.s32 0, %v2980
      %v2982 = vrot.slane %v2977, %v2981
      %2984 = vmatprep.subr.mxu0 0.0
      %2985 = vmatpush1.msra.mxu0 %v2961
      %2986 = vmatprep.subr.mxu0 0.0
      %2987 = vmatpush1.msra.mxu0 %v2962
      %2988 = vmatprep.subr.mxu0 0.0
      %2989 = vmatpush1.msra.mxu0 %v2963
      %2990 = vmatprep.subr.mxu0 0.0
      %2991 = vmatpush1.msra.mxu0 %v2964
      %2992 = vmatprep.subr.mxu0 0.0
      %2993 = vmatpush1.msra.mxu0 %v2965
      %2994 = vmatprep.subr.mxu0 0.0
      %2995 = vmatpush1.msra.mxu0 %v2966
      %2996 = vmatprep.subr.mxu0 0.0
      %2997 = vmatpush1.msra.mxu0 %v2967
      %2998 = vmatprep.subr.mxu0 0.0
      %2999 = vmatpush1.msra.mxu0 %v2968
      %3000 = vmatprep.subr.mxu0 0.0
      %3001 = vmatpush1.msra.mxu0 %v2969
      %3002 = vmatprep.subr.mxu0 0.0
      %3003 = vmatpush1.msra.mxu0 %v2970
      %3004 = vmatprep.subr.mxu0 0.0
      %3005 = vmatpush1.msra.mxu0 %v2971
      %3006 = vmatprep.subr.mxu0 0.0
      %3007 = vmatpush1.msra.mxu0 %v2972
      %3008 = vmatprep.subr.mxu0 0.0
      %3009 = vmatpush1.msra.mxu0 %v2973
      %3010 = vmatprep.subr.mxu0 0.0
      %3011 = vmatpush1.msra.mxu0 %v2974
      %3012 = vmatprep.subr.mxu0 0.0
      %3013 = vmatpush1.msra.mxu0 %v2975
      %3014 = vmatprep.subr.mxu0 0.0
      %3015 = vmatpush1.msra.mxu0 %v2976
      %3016 = vmatprep.subr.mxu0 0.0
      %3017 = vmatpush1.msra.mxu0 0.0
      %3018 = vmatprep.subr.mxu0 0.0
      %3019 = vmatpush1.msra.mxu0 0.0
      %3020 = vmatprep.subr.mxu0 0.0
      %3021 = vmatpush1.msra.mxu0 0.0
      %3022 = vmatprep.subr.mxu0 0.0
      %3023 = vmatpush1.msra.mxu0 0.0
      %3024 = vmatprep.subr.mxu0 0.0
      %3025 = vmatpush1.msra.mxu0 0.0
      %3026 = vmatprep.subr.mxu0 0.0
      %3027 = vmatpush1.msra.mxu0 0.0
      %3028 = vmatprep.subr.mxu0 0.0
      %3029 = vmatpush1.msra.mxu0 0.0
      %3030 = vmatprep.subr.mxu0 0.0
      %3031 = vmatpush1.msra.mxu0 0.0
      %3032 = vmatprep.subr.mxu0 0.0
      %3033 = vmatpush1.msra.mxu0 0.0
      %3034 = vmatprep.subr.mxu0 0.0
      %3035 = vmatpush1.msra.mxu0 0.0
      %3036 = vmatprep.subr.mxu0 0.0
      %3037 = vmatpush1.msra.mxu0 0.0
      %3038 = vmatprep.subr.mxu0 0.0
      %3039 = vmatpush1.msra.mxu0 0.0
      %3040 = vmatprep.subr.mxu0 0.0
      %3041 = vmatpush1.msra.mxu0 0.0
      %3042 = vmatprep.subr.mxu0 0.0
      %3043 = vmatpush1.msra.mxu0 0.0
      %3044 = vmatprep.subr.mxu0 0.0
      %3045 = vmatpush1.msra.mxu0 0.0
      %3046 = vmatprep.subr.mxu0 0.0
      %3047 = vmatpush1.msra.mxu0 0.0
      %3048 = vmatprep.mubr.f32.mxu0 0.0
      %3049 = vmatmul.mubr.f32.gmra.mrb[0].mxu0 %v2929
      %v3050 = vpop.f32.mrb[0].mxu0
      %v3051 = vadd.f32 %v2982, %v3050
      %v3052 = vpop.f32.mrb[0].mxu0
      %3053 = vmatprep.mubr.f32.mxu0 0.0
      %3054 = vmatmul.mubr.f32.gmra.mrb[0].mxu0 %v2930
      %v3055 = vpop.f32.mrb[0].mxu0
      %v3056 = vadd.f32 %v2982, %v3055
      %v3057 = vpop.f32.mrb[0].mxu0
      %3058 = vmatprep.mubr.f32.mxu0 0.0
      %3059 = vmatmul.mubr.f32.gmra.mrb[0].mxu0 %v2931
      %v3060 = vpop.f32.mrb[0].mxu0
      %v3061 = vadd.f32 %v2982, %v3060
      %v3062 = vpop.f32.mrb[0].mxu0
      %3063 = vmatprep.mubr.f32.mxu0 0.0
      %3064 = vmatmul.mubr.f32.gmra.mrb[0].mxu0 %v2932
      %v3065 = vpop.f32.mrb[0].mxu0
      %v3066 = vadd.f32 %v2982, %v3065
      %v3067 = vpop.f32.mrb[0].mxu0
      %3068 = vmatprep.mubr.f32.mxu0 0.0
      %3069 = vmatmul.mubr.f32.gmra.mrb[0].mxu0 %v2933
      %v3070 = vpop.f32.mrb[0].mxu0
      %v3071 = vadd.f32 %v2982, %v3070
      %v3072 = vpop.f32.mrb[0].mxu0
      %3073 = vmatprep.mubr.f32.mxu0 0.0
      %3074 = vmatmul.mubr.f32.gmra.mrb[0].mxu0 %v2934
      %v3075 = vpop.f32.mrb[0].mxu0
      %v3076 = vadd.f32 %v2982, %v3075
      %v3077 = vpop.f32.mrb[0].mxu0
      %3078 = vmatprep.mubr.f32.mxu0 0.0
      %3079 = vmatmul.mubr.f32.gmra.mrb[0].mxu0 %v2935
      %v3080 = vpop.f32.mrb[0].mxu0
      %v3081 = vadd.f32 %v2982, %v3080
      %v3082 = vpop.f32.mrb[0].mxu0
      %3083 = vmatprep.mubr.f32.mxu0 0.0
      %3084 = vmatmul.mubr.f32.gmra.mrb[0].mxu0 %v2936
      %v3085 = vpop.f32.mrb[0].mxu0
      %v3086 = vadd.f32 %v2982, %v3085
      %v3087 = vpop.f32.mrb[0].mxu0
      %3088 = vmatprep.mubr.f32.mxu0 0.0
      %3089 = vmatmul.mubr.f32.gmra.mrb[0].mxu0 %v2937
      %v3090 = vpop.f32.mrb[0].mxu0
      %v3091 = vadd.f32 %v2982, %v3090
      %v3092 = vpop.f32.mrb[0].mxu0
      %3093 = vmatprep.mubr.f32.mxu0 0.0
      %3094 = vmatmul.mubr.f32.gmra.mrb[0].mxu0 %v2938
      %v3095 = vpop.f32.mrb[0].mxu0
      %v3096 = vadd.f32 %v2982, %v3095
      %v3097 = vpop.f32.mrb[0].mxu0
      %3098 = vmatprep.mubr.f32.mxu0 0.0
      %3099 = vmatmul.mubr.f32.gmra.mrb[0].mxu0 %v2939
      %v3100 = vpop.f32.mrb[0].mxu0
      %v3101 = vadd.f32 %v2982, %v3100
      %v3102 = vpop.f32.mrb[0].mxu0
      %3103 = vmatprep.mubr.f32.mxu0 0.0
      %3104 = vmatmul.mubr.f32.gmra.mrb[0].mxu0 %v2940
      %v3105 = vpop.f32.mrb[0].mxu0
      %v3106 = vadd.f32 %v2982, %v3105
      %v3107 = vpop.f32.mrb[0].mxu0
      %3108 = vmatprep.mubr.f32.mxu0 0.0
      %3109 = vmatmul.mubr.f32.gmra.mrb[0].mxu0 %v2941
      %v3110 = vpop.f32.mrb[0].mxu0
      %v3111 = vadd.f32 %v2982, %v3110
      %v3112 = vpop.f32.mrb[0].mxu0
      %3113 = vmatprep.mubr.f32.mxu0 0.0
      %3114 = vmatmul.mubr.f32.gmra.mrb[0].mxu0 %v2942
      %v3115 = vpop.f32.mrb[0].mxu0
      %v3116 = vadd.f32 %v2982, %v3115
      %v3117 = vpop.f32.mrb[0].mxu0
      %3118 = vmatprep.mubr.f32.mxu0 0.0
      %3119 = vmatmul.mubr.f32.gmra.mrb[0].mxu0 %v2943
      %v3120 = vpop.f32.mrb[0].mxu0
      %v3121 = vadd.f32 %v2982, %v3120
      %v3122 = vpop.f32.mrb[0].mxu0
      %3123 = vmatprep.mubr.f32.mxu0 0.0
      %3124 = vmatmul.mubr.f32.gmra.mrb[0].mxu0 %v2944
      %v3125 = vpop.f32.mrb[0].mxu0
      %v3126 = vadd.f32 %v2982, %v3125
      %v3127 = vpop.f32.mrb[0].mxu0
      %3128 = vmatprep.mubr.f32.mxu0 0.0
      %3129 = vmatmul.mubr.f32.gmra.mrb[0].mxu0 %v2945
      %v3130 = vpop.f32.mrb[0].mxu0
      %v3131 = vadd.f32 %v2982, %v3130
      %v3132 = vpop.f32.mrb[0].mxu0
      %3133 = vmatprep.mubr.f32.mxu0 0.0
      %3134 = vmatmul.mubr.f32.gmra.mrb[0].mxu0 %v2946
      %v3135 = vpop.f32.mrb[0].mxu0
      %v3136 = vadd.f32 %v2982, %v3135
      %v3137 = vpop.f32.mrb[0].mxu0
      %3138 = vmatprep.mubr.f32.mxu0 0.0
      %3139 = vmatmul.mubr.f32.gmra.mrb[0].mxu0 %v2947
      %v3140 = vpop.f32.mrb[0].mxu0
      %v3141 = vadd.f32 %v2982, %v3140
      %v3142 = vpop.f32.mrb[0].mxu0
      %3143 = vmatprep.mubr.f32.mxu0 0.0
      %3144 = vmatmul.mubr.f32.gmra.mrb[0].mxu0 %v2948
      %v3145 = vpop.f32.mrb[0].mxu0
      %v3146 = vadd.f32 %v2982, %v3145
      %v3147 = vpop.f32.mrb[0].mxu0
      %3148 = vmatprep.mubr.f32.mxu0 0.0
      %3149 = vmatmul.mubr.f32.gmra.mrb[0].mxu0 %v2949
      %v3150 = vpop.f32.mrb[0].mxu0
      %v3151 = vadd.f32 %v2982, %v3150
      %v3152 = vpop.f32.mrb[0].mxu0
      %3153 = vmatprep.mubr.f32.mxu0 0.0
      %3154 = vmatmul.mubr.f32.gmra.mrb[0].mxu0 %v2950
      %v3155 = vpop.f32.mrb[0].mxu0
      %v3156 = vadd.f32 %v2982, %v3155
      %v3157 = vpop.f32.mrb[0].mxu0
      %3158 = vmatprep.mubr.f32.mxu0 0.0
      %3159 = vmatmul.mubr.f32.gmra.mrb[0].mxu0 %v2951
      %v3160 = vpop.f32.mrb[0].mxu0
      %v3161 = vadd.f32 %v2982, %v3160
      %v3162 = vpop.f32.mrb[0].mxu0
      %3163 = vmatprep.mubr.f32.mxu0 0.0
      %3164 = vmatmul.mubr.f32.gmra.mrb[0].mxu0 %v2952
      %v3165 = vpop.f32.mrb[0].mxu0
      %v3166 = vadd.f32 %v2982, %v3165
      %v3167 = vpop.f32.mrb[0].mxu0
      %3168 = vmatprep.mubr.f32.mxu0 0.0
      %3169 = vmatmul.mubr.f32.gmra.mrb[0].mxu0 %v2953
      %v3170 = vpop.f32.mrb[0].mxu0
      %v3171 = vadd.f32 %v2982, %v3170
      %v3172 = vpop.f32.mrb[0].mxu0
      %3173 = vmatprep.mubr.f32.mxu0 0.0
      %3174 = vmatmul.mubr.f32.gmra.mrb[0].mxu0 %v2954
      %v3175 = vpop.f32.mrb[0].mxu0
      %v3176 = vadd.f32 %v2982, %v3175
      %v3177 = vpop.f32.mrb[0].mxu0
      %3178 = vmatprep.mubr.f32.mxu0 0.0
      %3179 = vmatmul.mubr.f32.gmra.mrb[0].mxu0 %v2955
      %v3180 = vpop.f32.mrb[0].mxu0
      %v3181 = vadd.f32 %v2982, %v3180
      %v3182 = vpop.f32.mrb[0].mxu0
      %3183 = vmatprep.mubr.f32.mxu0 0.0
      %3184 = vmatmul.mubr.f32.gmra.mrb[0].mxu0 %v2956
      %v3185 = vpop.f32.mrb[0].mxu0
      %v3186 = vadd.f32 %v2982, %v3185
      %v3187 = vpop.f32.mrb[0].mxu0
      %3188 = vmatprep.mubr.f32.mxu0 0.0
      %3189 = vmatmul.mubr.f32.gmra.mrb[0].mxu0 %v2957
      %v3190 = vpop.f32.mrb[0].mxu0
      %v3191 = vadd.f32 %v2982, %v3190
      %v3192 = vpop.f32.mrb[0].mxu0
      %3193 = vmatprep.mubr.f32.mxu0 0.0
      %3194 = vmatmul.mubr.f32.gmra.mrb[0].mxu0 %v2958
      %v3195 = vpop.f32.mrb[0].mxu0
      %v3196 = vadd.f32 %v2982, %v3195
      %v3197 = vpop.f32.mrb[0].mxu0
      %3198 = vmatprep.mubr.f32.mxu0 0.0
      %3199 = vmatmul.mubr.f32.gmra.mrb[0].mxu0 %v2959
      %v3200 = vpop.f32.mrb[0].mxu0
      %v3201 = vadd.f32 %v2982, %v3200
      %v3202 = vpop.f32.mrb[0].mxu0
      %3203 = vmatprep.mubr.f32.mxu0 0.0
      %3204 = vmatmul.mubr.f32.gmra.mrb[0].mxu0 %v2960
      %v3205 = vpop.f32.mrb[0].mxu0
      %v3206 = vadd.f32 %v2982, %v3205
      %v3207 = vpop.f32.mrb[0].mxu0
      %3208 = vdwg.mxu0
      %v3209 = vmax.f32 %v3051, 0.0
      %v3210 = vmax.f32 %v3056, 0.0
      %v3211 = vmax.f32 %v3061, 0.0
      %v3212 = vmax.f32 %v3066, 0.0
      %v3213 = vmax.f32 %v3071, 0.0
      %v3214 = vmax.f32 %v3076, 0.0
      %v3215 = vmax.f32 %v3081, 0.0
      %v3216 = vmax.f32 %v3086, 0.0
      %v3217 = vmax.f32 %v3091, 0.0
      %v3218 = vmax.f32 %v3096, 0.0
      %v3219 = vmax.f32 %v3101, 0.0
      %v3220 = vmax.f32 %v3106, 0.0
      %v3221 = vmax.f32 %v3111, 0.0
      %v3222 = vmax.f32 %v3116, 0.0
      %v3223 = vmax.f32 %v3121, 0.0
      %v3224 = vmax.f32 %v3126, 0.0
      %v3225 = vmax.f32 %v3131, 0.0
      %v3226 = vmax.f32 %v3136, 0.0
      %v3227 = vmax.f32 %v3141, 0.0
      %v3228 = vmax.f32 %v3146, 0.0
      %v3229 = vmax.f32 %v3151, 0.0
      %v3230 = vmax.f32 %v3156, 0.0
      %v3231 = vmax.f32 %v3161, 0.0
      %v3232 = vmax.f32 %v3166, 0.0
      %v3233 = vmax.f32 %v3171, 0.0
      %v3234 = vmax.f32 %v3176, 0.0
      %v3235 = vmax.f32 %v3181, 0.0
      %v3236 = vmax.f32 %v3186, 0.0
      %v3237 = vmax.f32 %v3191, 0.0
      %v3238 = vmax.f32 %v3196, 0.0
      %v3239 = vmax.f32 %v3201, 0.0
      %v3240 = vmax.f32 %v3206, 0.0
      %v3241 = vld [vmem:[%s11] sm:$0x1]
      %v3243 = vlaneseq
      %v3244 = vshrl.u32 %v3243, 7
      %v3245 = vsub.s32 0, %v3244
      %v3246 = vrot.slane %v3241, %v3245
      %v3248 = vmul.f32 %v2211, %v3246
      %v3249 = vmul.f32 %v2212, %v3246
      %v3250 = vmul.f32 %v2213, %v3246
      %v3251 = vmul.f32 %v2214, %v3246
      %v3252 = vmul.f32 %v2215, %v3246
      %v3253 = vmul.f32 %v2216, %v3246
      %v3254 = vmul.f32 %v2217, %v3246
      %v3255 = vmul.f32 %v2218, %v3246
      %v3256 = vmul.f32 %v2219, %v3246
      %v3257 = vmul.f32 %v2220, %v3246
      %v3258 = vmul.f32 %v2221, %v3246
      %v3259 = vmul.f32 %v2222, %v3246
      %v3260 = vmul.f32 %v2223, %v3246
      %v3261 = vmul.f32 %v2224, %v3246
      %v3262 = vmul.f32 %v2225, %v3246
      %v3263 = vmul.f32 %v2226, %v3246
      %v3264 = vmul.f32 %v2227, %v3246
      %v3265 = vmul.f32 %v2228, %v3246
      %v3266 = vmul.f32 %v2229, %v3246
      %v3267 = vmul.f32 %v2230, %v3246
      %v3268 = vmul.f32 %v2231, %v3246
      %v3269 = vmul.f32 %v2232, %v3246
      %v3270 = vmul.f32 %v2233, %v3246
      %v3271 = vmul.f32 %v2234, %v3246
      %v3272 = vmul.f32 %v2235, %v3246
      %v3273 = vmul.f32 %v2236, %v3246
      %v3274 = vmul.f32 %v2237, %v3246
      %v3275 = vmul.f32 %v2238, %v3246
      %v3276 = vmul.f32 %v2239, %v3246
      %v3277 = vmul.f32 %v2240, %v3246
      %v3278 = vmul.f32 %v2241, %v3246
      %v3279 = vmul.f32 %v2242, %v3246
      %v3280 = vsel %vm2247, %v3248, 0.0
      %3281 = vadd.xlane.f32.xlu0 %v3280
      %v3282 = vpop.xlane.xlu0 %3281
      %v3283 = vsel %vm2247, %v3249, 0.0
      %3284 = vadd.xlane.f32.xlu0 %v3283
      %v3285 = vpop.xlane.xlu0 %3284
      %v3286 = vsel %vm2247, %v3250, 0.0
      %3287 = vadd.xlane.f32.xlu0 %v3286
      %v3288 = vpop.xlane.xlu0 %3287
      %v3289 = vsel %vm2247, %v3251, 0.0
      %3290 = vadd.xlane.f32.xlu0 %v3289
      %v3291 = vpop.xlane.xlu0 %3290
      %v3292 = vsel %vm2247, %v3252, 0.0
      %3293 = vadd.xlane.f32.xlu0 %v3292
      %v3294 = vpop.xlane.xlu0 %3293
      %v3295 = vsel %vm2247, %v3253, 0.0
      %3296 = vadd.xlane.f32.xlu0 %v3295
      %v3297 = vpop.xlane.xlu0 %3296
      %v3298 = vsel %vm2247, %v3254, 0.0
      %3299 = vadd.xlane.f32.xlu0 %v3298
      %v3300 = vpop.xlane.xlu0 %3299
      %v3301 = vsel %vm2247, %v3255, 0.0
      %3302 = vadd.xlane.f32.xlu0 %v3301
      %v3303 = vpop.xlane.xlu0 %3302
      %v3304 = vsel %vm2247, %v3256, 0.0
      %3305 = vadd.xlane.f32.xlu0 %v3304
      %v3306 = vpop.xlane.xlu0 %3305
      %v3307 = vsel %vm2247, %v3257, 0.0
      %3308 = vadd.xlane.f32.xlu0 %v3307
      %v3309 = vpop.xlane.xlu0 %3308
      %v3310 = vsel %vm2247, %v3258, 0.0
      %3311 = vadd.xlane.f32.xlu0 %v3310
      %v3312 = vpop.xlane.xlu0 %3311
      %v3313 = vsel %vm2247, %v3259, 0.0
      %3314 = vadd.xlane.f32.xlu0 %v3313
      %v3315 = vpop.xlane.xlu0 %3314
      %v3316 = vsel %vm2247, %v3260, 0.0
      %3317 = vadd.xlane.f32.xlu0 %v3316
      %v3318 = vpop.xlane.xlu0 %3317
      %v3319 = vsel %vm2247, %v3261, 0.0
      %3320 = vadd.xlane.f32.xlu0 %v3319
      %v3321 = vpop.xlane.xlu0 %3320
      %v3322 = vsel %vm2247, %v3262, 0.0
      %3323 = vadd.xlane.f32.xlu0 %v3322
      %v3324 = vpop.xlane.xlu0 %3323
      %v3325 = vsel %vm2247, %v3263, 0.0
      %3326 = vadd.xlane.f32.xlu0 %v3325
      %v3327 = vpop.xlane.xlu0 %3326
      %v3328 = vsel %vm2247, %v3264, 0.0
      %3329 = vadd.xlane.f32.xlu0 %v3328
      %v3330 = vpop.xlane.xlu0 %3329
      %v3331 = vsel %vm2247, %v3265, 0.0
      %3332 = vadd.xlane.f32.xlu0 %v3331
      %v3333 = vpop.xlane.xlu0 %3332
      %v3334 = vsel %vm2247, %v3266, 0.0
      %3335 = vadd.xlane.f32.xlu0 %v3334
      %v3336 = vpop.xlane.xlu0 %3335
      %v3337 = vsel %vm2247, %v3267, 0.0
      %3338 = vadd.xlane.f32.xlu0 %v3337
      %v3339 = vpop.xlane.xlu0 %3338
      %v3340 = vsel %vm2247, %v3268, 0.0
      %3341 = vadd.xlane.f32.xlu0 %v3340
      %v3342 = vpop.xlane.xlu0 %3341
      %v3343 = vsel %vm2247, %v3269, 0.0
      %3344 = vadd.xlane.f32.xlu0 %v3343
      %v3345 = vpop.xlane.xlu0 %3344
      %v3346 = vsel %vm2247, %v3270, 0.0
      %3347 = vadd.xlane.f32.xlu0 %v3346
      %v3348 = vpop.xlane.xlu0 %3347
      %v3349 = vsel %vm2247, %v3271, 0.0
      %3350 = vadd.xlane.f32.xlu0 %v3349
      %v3351 = vpop.xlane.xlu0 %3350
      %v3352 = vsel %vm2247, %v3272, 0.0
      %3353 = vadd.xlane.f32.xlu0 %v3352
      %v3354 = vpop.xlane.xlu0 %3353
      %v3355 = vsel %vm2247, %v3273, 0.0
      %3356 = vadd.xlane.f32.xlu0 %v3355
      %v3357 = vpop.xlane.xlu0 %3356
      %v3358 = vsel %vm2247, %v3274, 0.0
      %3359 = vadd.xlane.f32.xlu0 %v3358
      %v3360 = vpop.xlane.xlu0 %3359
      %v3361 = vsel %vm2247, %v3275, 0.0
      %3362 = vadd.xlane.f32.xlu0 %v3361
      %v3363 = vpop.xlane.xlu0 %3362
      %v3364 = vsel %vm2247, %v3276, 0.0
      %3365 = vadd.xlane.f32.xlu0 %v3364
      %v3366 = vpop.xlane.xlu0 %3365
      %v3367 = vsel %vm2247, %v3277, 0.0
      %3368 = vadd.xlane.f32.xlu0 %v3367
      %v3369 = vpop.xlane.xlu0 %3368
      %v3370 = vsel %vm2247, %v3278, 0.0
      %3371 = vadd.xlane.f32.xlu0 %v3370
      %v3372 = vpop.xlane.xlu0 %3371
      %v3373 = vsel %vm2247, %v3279, 0.0
      %3374 = vadd.xlane.f32.xlu0 %v3373
      %v3375 = vpop.xlane.xlu0 %3374
      %v3376 = vld [vmem:[%s12] sm:$0x1]
      %v3378 = vlaneseq
      %v3379 = vshrl.u32 %v3378, 7
      %v3380 = vsub.s32 0, %v3379
      %v3381 = vrot.slane %v3376, %v3380
      %v3383 = vmul.f32 %v3209, %v3381
      %v3384 = vmul.f32 %v3210, %v3381
      %v3385 = vmul.f32 %v3211, %v3381
      %v3386 = vmul.f32 %v3212, %v3381
      %v3387 = vmul.f32 %v3213, %v3381
      %v3388 = vmul.f32 %v3214, %v3381
      %v3389 = vmul.f32 %v3215, %v3381
      %v3390 = vmul.f32 %v3216, %v3381
      %v3391 = vmul.f32 %v3217, %v3381
      %v3392 = vmul.f32 %v3218, %v3381
      %v3393 = vmul.f32 %v3219, %v3381
      %v3394 = vmul.f32 %v3220, %v3381
      %v3395 = vmul.f32 %v3221, %v3381
      %v3396 = vmul.f32 %v3222, %v3381
      %v3397 = vmul.f32 %v3223, %v3381
      %v3398 = vmul.f32 %v3224, %v3381
      %v3399 = vmul.f32 %v3225, %v3381
      %v3400 = vmul.f32 %v3226, %v3381
      %v3401 = vmul.f32 %v3227, %v3381
      %v3402 = vmul.f32 %v3228, %v3381
      %v3403 = vmul.f32 %v3229, %v3381
      %v3404 = vmul.f32 %v3230, %v3381
      %v3405 = vmul.f32 %v3231, %v3381
      %v3406 = vmul.f32 %v3232, %v3381
      %v3407 = vmul.f32 %v3233, %v3381
      %v3408 = vmul.f32 %v3234, %v3381
      %v3409 = vmul.f32 %v3235, %v3381
      %v3410 = vmul.f32 %v3236, %v3381
      %v3411 = vmul.f32 %v3237, %v3381
      %v3412 = vmul.f32 %v3238, %v3381
      %v3413 = vmul.f32 %v3239, %v3381
      %v3414 = vmul.f32 %v3240, %v3381
      %vm3415 = vcmask 523264
      %v3416 = vsel %vm3415, %v3383, 0.0
      %3417 = vadd.xlane.f32.xlu0 %v3416
      %v3418 = vpop.xlane.xlu0 %3417
      %v3419 = vsel %vm3415, %v3384, 0.0
      %3420 = vadd.xlane.f32.xlu0 %v3419
      %v3421 = vpop.xlane.xlu0 %3420
      %v3422 = vsel %vm3415, %v3385, 0.0
      %3423 = vadd.xlane.f32.xlu0 %v3422
      %v3424 = vpop.xlane.xlu0 %3423
      %v3425 = vsel %vm3415, %v3386, 0.0
      %3426 = vadd.xlane.f32.xlu0 %v3425
      %v3427 = vpop.xlane.xlu0 %3426
      %v3428 = vsel %vm3415, %v3387, 0.0
      %3429 = vadd.xlane.f32.xlu0 %v3428
      %v3430 = vpop.xlane.xlu0 %3429
      %v3431 = vsel %vm3415, %v3388, 0.0
      %3432 = vadd.xlane.f32.xlu0 %v3431
      %v3433 = vpop.xlane.xlu0 %3432
      %v3434 = vsel %vm3415, %v3389, 0.0
      %3435 = vadd.xlane.f32.xlu0 %v3434
      %v3436 = vpop.xlane.xlu0 %3435
      %v3437 = vsel %vm3415, %v3390, 0.0
      %3438 = vadd.xlane.f32.xlu0 %v3437
      %v3439 = vpop.xlane.xlu0 %3438
      %v3440 = vsel %vm3415, %v3391, 0.0
      %3441 = vadd.xlane.f32.xlu0 %v3440
      %v3442 = vpop.xlane.xlu0 %3441
      %v3443 = vsel %vm3415, %v3392, 0.0
      %3444 = vadd.xlane.f32.xlu0 %v3443
      %v3445 = vpop.xlane.xlu0 %3444
      %v3446 = vsel %vm3415, %v3393, 0.0
      %3447 = vadd.xlane.f32.xlu0 %v3446
      %v3448 = vpop.xlane.xlu0 %3447
      %v3449 = vsel %vm3415, %v3394, 0.0
      %3450 = vadd.xlane.f32.xlu0 %v3449
      %v3451 = vpop.xlane.xlu0 %3450
      %v3452 = vsel %vm3415, %v3395, 0.0
      %3453 = vadd.xlane.f32.xlu0 %v3452
      %v3454 = vpop.xlane.xlu0 %3453
      %v3455 = vsel %vm3415, %v3396, 0.0
      %3456 = vadd.xlane.f32.xlu0 %v3455
      %v3457 = vpop.xlane.xlu0 %3456
      %v3458 = vsel %vm3415, %v3397, 0.0
      %3459 = vadd.xlane.f32.xlu0 %v3458
      %v3460 = vpop.xlane.xlu0 %3459
      %v3461 = vsel %vm3415, %v3398, 0.0
      %3462 = vadd.xlane.f32.xlu0 %v3461
      %v3463 = vpop.xlane.xlu0 %3462
      %v3464 = vsel %vm3415, %v3399, 0.0
      %3465 = vadd.xlane.f32.xlu0 %v3464
      %v3466 = vpop.xlane.xlu0 %3465
      %v3467 = vsel %vm3415, %v3400, 0.0
      %3468 = vadd.xlane.f32.xlu0 %v3467
      %v3469 = vpop.xlane.xlu0 %3468
      %v3470 = vsel %vm3415, %v3401, 0.0
      %3471 = vadd.xlane.f32.xlu0 %v3470
      %v3472 = vpop.xlane.xlu0 %3471
      %v3473 = vsel %vm3415, %v3402, 0.0
      %3474 = vadd.xlane.f32.xlu0 %v3473
      %v3475 = vpop.xlane.xlu0 %3474
      %v3476 = vsel %vm3415, %v3403, 0.0
      %3477 = vadd.xlane.f32.xlu0 %v3476
      %v3478 = vpop.xlane.xlu0 %3477
      %v3479 = vsel %vm3415, %v3404, 0.0
      %3480 = vadd.xlane.f32.xlu0 %v3479
      %v3481 = vpop.xlane.xlu0 %3480
      %v3482 = vsel %vm3415, %v3405, 0.0
      %3483 = vadd.xlane.f32.xlu0 %v3482
      %v3484 = vpop.xlane.xlu0 %3483
      %v3485 = vsel %vm3415, %v3406, 0.0
      %3486 = vadd.xlane.f32.xlu0 %v3485
      %v3487 = vpop.xlane.xlu0 %3486
      %v3488 = vsel %vm3415, %v3407, 0.0
      %3489 = vadd.xlane.f32.xlu0 %v3488
      %v3490 = vpop.xlane.xlu0 %3489
      %v3491 = vsel %vm3415, %v3408, 0.0
      %3492 = vadd.xlane.f32.xlu0 %v3491
      %v3493 = vpop.xlane.xlu0 %3492
      %v3494 = vsel %vm3415, %v3409, 0.0
      %3495 = vadd.xlane.f32.xlu0 %v3494
      %v3496 = vpop.xlane.xlu0 %3495
      %v3497 = vsel %vm3415, %v3410, 0.0
      %3498 = vadd.xlane.f32.xlu0 %v3497
      %v3499 = vpop.xlane.xlu0 %3498
      %v3500 = vsel %vm3415, %v3411, 0.0
      %3501 = vadd.xlane.f32.xlu0 %v3500
      %v3502 = vpop.xlane.xlu0 %3501
      %v3503 = vsel %vm3415, %v3412, 0.0
      %3504 = vadd.xlane.f32.xlu0 %v3503
      %v3505 = vpop.xlane.xlu0 %3504
      %v3506 = vsel %vm3415, %v3413, 0.0
      %3507 = vadd.xlane.f32.xlu0 %v3506
      %v3508 = vpop.xlane.xlu0 %3507
      %v3509 = vsel %vm3415, %v3414, 0.0
      %3510 = vadd.xlane.f32.xlu0 %v3509
      %v3511 = vpop.xlane.xlu0 %3510
      %v3512 = vadd.f32 %v3282, %v3418
      %v3513 = vadd.f32 %v3285, %v3421
      %v3514 = vadd.f32 %v3288, %v3424
      %v3515 = vadd.f32 %v3291, %v3427
      %v3516 = vadd.f32 %v3294, %v3430
      %v3517 = vadd.f32 %v3297, %v3433
      %v3518 = vadd.f32 %v3300, %v3436
      %v3519 = vadd.f32 %v3303, %v3439
      %v3520 = vadd.f32 %v3306, %v3442
      %v3521 = vadd.f32 %v3309, %v3445
      %v3522 = vadd.f32 %v3312, %v3448
      %v3523 = vadd.f32 %v3315, %v3451
      %v3524 = vadd.f32 %v3318, %v3454
      %v3525 = vadd.f32 %v3321, %v3457
      %v3526 = vadd.f32 %v3324, %v3460
      %v3527 = vadd.f32 %v3327, %v3463
      %v3528 = vadd.f32 %v3330, %v3466
      %v3529 = vadd.f32 %v3333, %v3469
      %v3530 = vadd.f32 %v3336, %v3472
      %v3531 = vadd.f32 %v3339, %v3475
      %v3532 = vadd.f32 %v3342, %v3478
      %v3533 = vadd.f32 %v3345, %v3481
      %v3534 = vadd.f32 %v3348, %v3484
      %v3535 = vadd.f32 %v3351, %v3487
      %v3536 = vadd.f32 %v3354, %v3490
      %v3537 = vadd.f32 %v3357, %v3493
      %v3538 = vadd.f32 %v3360, %v3496
      %v3539 = vadd.f32 %v3363, %v3499
      %v3540 = vadd.f32 %v3366, %v3502
      %v3541 = vadd.f32 %v3369, %v3505
      %v3542 = vadd.f32 %v3372, %v3508
      %v3543 = vadd.f32 %v3375, %v3511
      %s3544 = sld [smem:[#allocation2]]
      %v3545 = vstv %s3544
      %v3546 = vadd.f32 %v3512, %v3545
      %v3547 = vadd.f32 %v3513, %v3545
      %v3548 = vadd.f32 %v3514, %v3545
      %v3549 = vadd.f32 %v3515, %v3545
      %v3550 = vadd.f32 %v3516, %v3545
      %v3551 = vadd.f32 %v3517, %v3545
      %v3552 = vadd.f32 %v3518, %v3545
      %v3553 = vadd.f32 %v3519, %v3545
      %v3554 = vadd.f32 %v3520, %v3545
      %v3555 = vadd.f32 %v3521, %v3545
      %v3556 = vadd.f32 %v3522, %v3545
      %v3557 = vadd.f32 %v3523, %v3545
      %v3558 = vadd.f32 %v3524, %v3545
      %v3559 = vadd.f32 %v3525, %v3545
      %v3560 = vadd.f32 %v3526, %v3545
      %v3561 = vadd.f32 %v3527, %v3545
      %v3562 = vadd.f32 %v3528, %v3545
      %v3563 = vadd.f32 %v3529, %v3545
      %v3564 = vadd.f32 %v3530, %v3545
      %v3565 = vadd.f32 %v3531, %v3545
      %v3566 = vadd.f32 %v3532, %v3545
      %v3567 = vadd.f32 %v3533, %v3545
      %v3568 = vadd.f32 %v3534, %v3545
      %v3569 = vadd.f32 %v3535, %v3545
      %v3570 = vadd.f32 %v3536, %v3545
      %v3571 = vadd.f32 %v3537, %v3545
      %v3572 = vadd.f32 %v3538, %v3545
      %v3573 = vadd.f32 %v3539, %v3545
      %v3574 = vadd.f32 %v3540, %v3545
      %v3575 = vadd.f32 %v3541, %v3545
      %v3576 = vadd.f32 %v3542, %v3545
      %v3577 = vadd.f32 %v3543, %v3545
      %v3578 = vxor.u32 %v3546, 2147483648
      %v3579 = vxor.u32 %v3547, 2147483648
      %v3580 = vxor.u32 %v3548, 2147483648
      %v3581 = vxor.u32 %v3549, 2147483648
      %v3582 = vxor.u32 %v3550, 2147483648
      %v3583 = vxor.u32 %v3551, 2147483648
      %v3584 = vxor.u32 %v3552, 2147483648
      %v3585 = vxor.u32 %v3553, 2147483648
      %v3586 = vxor.u32 %v3554, 2147483648
      %v3587 = vxor.u32 %v3555, 2147483648
      %v3588 = vxor.u32 %v3556, 2147483648
      %v3589 = vxor.u32 %v3557, 2147483648
      %v3590 = vxor.u32 %v3558, 2147483648
      %v3591 = vxor.u32 %v3559, 2147483648
      %v3592 = vxor.u32 %v3560, 2147483648
      %v3593 = vxor.u32 %v3561, 2147483648
      %v3594 = vxor.u32 %v3562, 2147483648
      %v3595 = vxor.u32 %v3563, 2147483648
      %v3596 = vxor.u32 %v3564, 2147483648
      %v3597 = vxor.u32 %v3565, 2147483648
      %v3598 = vxor.u32 %v3566, 2147483648
      %v3599 = vxor.u32 %v3567, 2147483648
      %v3600 = vxor.u32 %v3568, 2147483648
      %v3601 = vxor.u32 %v3569, 2147483648
      %v3602 = vxor.u32 %v3570, 2147483648
      %v3603 = vxor.u32 %v3571, 2147483648
      %v3604 = vxor.u32 %v3572, 2147483648
      %v3605 = vxor.u32 %v3573, 2147483648
      %v3606 = vxor.u32 %v3574, 2147483648
      %v3607 = vxor.u32 %v3575, 2147483648
      %v3608 = vxor.u32 %v3576, 2147483648
      %v3609 = vxor.u32 %v3577, 2147483648
      %v3610 = vmul.f32 %v3578, 1.442695
      %v3611 = vpow.pop %v3610
      %v3612 = vmul.f32 %v3579, 1.442695
      %v3613 = vpow.pop %v3612
      %v3614 = vmul.f32 %v3580, 1.442695
      %v3615 = vpow.pop %v3614
      %v3616 = vmul.f32 %v3581, 1.442695
      %v3617 = vpow.pop %v3616
      %v3618 = vmul.f32 %v3582, 1.442695
      %v3619 = vpow.pop %v3618
      %v3620 = vmul.f32 %v3583, 1.442695
      %v3621 = vpow.pop %v3620
      %v3622 = vmul.f32 %v3584, 1.442695
      %v3623 = vpow.pop %v3622
      %v3624 = vmul.f32 %v3585, 1.442695
      %v3625 = vpow.pop %v3624
      %v3626 = vmul.f32 %v3586, 1.442695
      %v3627 = vpow.pop %v3626
      %v3628 = vmul.f32 %v3587, 1.442695
      %v3629 = vpow.pop %v3628
      %v3630 = vmul.f32 %v3588, 1.442695
      %v3631 = vpow.pop %v3630
      %v3632 = vmul.f32 %v3589, 1.442695
      %v3633 = vpow.pop %v3632
      %v3634 = vmul.f32 %v3590, 1.442695
      %v3635 = vpow.pop %v3634
      %v3636 = vmul.f32 %v3591, 1.442695
      %v3637 = vpow.pop %v3636
      %v3638 = vmul.f32 %v3592, 1.442695
      %v3639 = vpow.pop %v3638
      %v3640 = vmul.f32 %v3593, 1.442695
      %v3641 = vpow.pop %v3640
      %v3642 = vmul.f32 %v3594, 1.442695
      %v3643 = vpow.pop %v3642
      %v3644 = vmul.f32 %v3595, 1.442695
      %v3645 = vpow.pop %v3644
      %v3646 = vmul.f32 %v3596, 1.442695
      %v3647 = vpow.pop %v3646
      %v3648 = vmul.f32 %v3597, 1.442695
      %v3649 = vpow.pop %v3648
      %v3650 = vmul.f32 %v3598, 1.442695
      %v3651 = vpow.pop %v3650
      %v3652 = vmul.f32 %v3599, 1.442695
      %v3653 = vpow.pop %v3652
      %v3654 = vmul.f32 %v3600, 1.442695
      %v3655 = vpow.pop %v3654
      %v3656 = vmul.f32 %v3601, 1.442695
      %v3657 = vpow.pop %v3656
      %v3658 = vmul.f32 %v3602, 1.442695
      %v3659 = vpow.pop %v3658
      %v3660 = vmul.f32 %v3603, 1.442695
      %v3661 = vpow.pop %v3660
      %v3662 = vmul.f32 %v3604, 1.442695
      %v3663 = vpow.pop %v3662
      %v3664 = vmul.f32 %v3605, 1.442695
      %v3665 = vpow.pop %v3664
      %v3666 = vmul.f32 %v3606, 1.442695
      %v3667 = vpow.pop %v3666
      %v3668 = vmul.f32 %v3607, 1.442695
      %v3669 = vpow.pop %v3668
      %v3670 = vmul.f32 %v3608, 1.442695
      %v3671 = vpow.pop %v3670
      %v3672 = vmul.f32 %v3609, 1.442695
      %v3673 = vpow.pop %v3672
      %v3674 = vadd.f32 %v3611, 1.0
      %v3675 = vadd.f32 %v3613, 1.0
      %v3676 = vadd.f32 %v3615, 1.0
      %v3677 = vadd.f32 %v3617, 1.0
      %v3678 = vadd.f32 %v3619, 1.0
      %v3679 = vadd.f32 %v3621, 1.0
      %v3680 = vadd.f32 %v3623, 1.0
      %v3681 = vadd.f32 %v3625, 1.0
      %v3682 = vadd.f32 %v3627, 1.0
      %v3683 = vadd.f32 %v3629, 1.0
      %v3684 = vadd.f32 %v3631, 1.0
      %v3685 = vadd.f32 %v3633, 1.0
      %v3686 = vadd.f32 %v3635, 1.0
      %v3687 = vadd.f32 %v3637, 1.0
      %v3688 = vadd.f32 %v3639, 1.0
      %v3689 = vadd.f32 %v3641, 1.0
      %v3690 = vadd.f32 %v3643, 1.0
      %v3691 = vadd.f32 %v3645, 1.0
      %v3692 = vadd.f32 %v3647, 1.0
      %v3693 = vadd.f32 %v3649, 1.0
      %v3694 = vadd.f32 %v3651, 1.0
      %v3695 = vadd.f32 %v3653, 1.0
      %v3696 = vadd.f32 %v3655, 1.0
      %v3697 = vadd.f32 %v3657, 1.0
      %v3698 = vadd.f32 %v3659, 1.0
      %v3699 = vadd.f32 %v3661, 1.0
      %v3700 = vadd.f32 %v3663, 1.0
      %v3701 = vadd.f32 %v3665, 1.0
      %v3702 = vadd.f32 %v3667, 1.0
      %v3703 = vadd.f32 %v3669, 1.0
      %v3704 = vadd.f32 %v3671, 1.0
      %v3705 = vadd.f32 %v3673, 1.0
      %v3706 = vrcp.pop %v3674
      %v3707 = vmul.f32 1.0, %v3706
      %v3708 = vrcp.pop %v3675
      %v3709 = vmul.f32 1.0, %v3708
      %v3710 = vrcp.pop %v3676
      %v3711 = vmul.f32 1.0, %v3710
      %v3712 = vrcp.pop %v3677
      %v3713 = vmul.f32 1.0, %v3712
      %v3714 = vrcp.pop %v3678
      %v3715 = vmul.f32 1.0, %v3714
      %v3716 = vrcp.pop %v3679
      %v3717 = vmul.f32 1.0, %v3716
      %v3718 = vrcp.pop %v3680
      %v3719 = vmul.f32 1.0, %v3718
      %v3720 = vrcp.pop %v3681
      %v3721 = vmul.f32 1.0, %v3720
      %v3722 = vrcp.pop %v3682
      %v3723 = vmul.f32 1.0, %v3722
      %v3724 = vrcp.pop %v3683
      %v3725 = vmul.f32 1.0, %v3724
      %v3726 = vrcp.pop %v3684
      %v3727 = vmul.f32 1.0, %v3726
      %v3728 = vrcp.pop %v3685
      %v3729 = vmul.f32 1.0, %v3728
      %v3730 = vrcp.pop %v3686
      %v3731 = vmul.f32 1.0, %v3730
      %v3732 = vrcp.pop %v3687
      %v3733 = vmul.f32 1.0, %v3732
      %v3734 = vrcp.pop %v3688
      %v3735 = vmul.f32 1.0, %v3734
      %v3736 = vrcp.pop %v3689
      %v3737 = vmul.f32 1.0, %v3736
      %v3738 = vrcp.pop %v3690
      %v3739 = vmul.f32 1.0, %v3738
      %v3740 = vrcp.pop %v3691
      %v3741 = vmul.f32 1.0, %v3740
      %v3742 = vrcp.pop %v3692
      %v3743 = vmul.f32 1.0, %v3742
      %v3744 = vrcp.pop %v3693
      %v3745 = vmul.f32 1.0, %v3744
      %v3746 = vrcp.pop %v3694
      %v3747 = vmul.f32 1.0, %v3746
      %v3748 = vrcp.pop %v3695
      %v3749 = vmul.f32 1.0, %v3748
      %v3750 = vrcp.pop %v3696
      %v3751 = vmul.f32 1.0, %v3750
      %v3752 = vrcp.pop %v3697
      %v3753 = vmul.f32 1.0, %v3752
      %v3754 = vrcp.pop %v3698
      %v3755 = vmul.f32 1.0, %v3754
      %v3756 = vrcp.pop %v3699
      %v3757 = vmul.f32 1.0, %v3756
      %v3758 = vrcp.pop %v3700
      %v3759 = vmul.f32 1.0, %v3758
      %v3760 = vrcp.pop %v3701
      %v3761 = vmul.f32 1.0, %v3760
      %v3762 = vrcp.pop %v3702
      %v3763 = vmul.f32 1.0, %v3762
      %v3764 = vrcp.pop %v3703
      %v3765 = vmul.f32 1.0, %v3764
      %v3766 = vrcp.pop %v3704
      %v3767 = vmul.f32 1.0, %v3766
      %v3768 = vrcp.pop %v3705
      %v3769 = vmul.f32 1.0, %v3768
      %vm3770 = vcmask 7168
      %3771 = vst.msk [vmem:[%s492] sm:$0xff] %vm3770, %v3707
      %3772 = vst.msk [vmem:[%s492 + $0x8] sm:$0xff] %vm3770, %v3709
      %3773 = vst.msk [vmem:[%s492 + $0x10] sm:$0xff] %vm3770, %v3711
      %3774 = vst.msk [vmem:[%s492 + $0x18] sm:$0xff] %vm3770, %v3713
      %3775 = vst.msk [vmem:[%s492 + $0x20] sm:$0xff] %vm3770, %v3715
      %3776 = vst.msk [vmem:[%s492 + $0x28] sm:$0xff] %vm3770, %v3717
      %3777 = vst.msk [vmem:[%s492 + $0x30] sm:$0xff] %vm3770, %v3719
      %3778 = vst.msk [vmem:[%s492 + $0x38] sm:$0xff] %vm3770, %v3721
      %3779 = vst.msk [vmem:[%s492 + $0x40] sm:$0xff] %vm3770, %v3723
      %3780 = vst.msk [vmem:[%s492 + $0x48] sm:$0xff] %vm3770, %v3725
      %3781 = vst.msk [vmem:[%s492 + $0x50] sm:$0xff] %vm3770, %v3727
      %3782 = vst.msk [vmem:[%s492 + $0x58] sm:$0xff] %vm3770, %v3729
      %3783 = vst.msk [vmem:[%s492 + $0x60] sm:$0xff] %vm3770, %v3731
      %3784 = vst.msk [vmem:[%s492 + $0x68] sm:$0xff] %vm3770, %v3733
      %3785 = vst.msk [vmem:[%s492 + $0x70] sm:$0xff] %vm3770, %v3735
      %3786 = vst.msk [vmem:[%s492 + $0x78] sm:$0xff] %vm3770, %v3737
      %3787 = vst.msk [vmem:[%s492 + $0x80] sm:$0xff] %vm3770, %v3739
      %3788 = vst.msk [vmem:[%s492 + $0x88] sm:$0xff] %vm3770, %v3741
      %3789 = vst.msk [vmem:[%s492 + $0x90] sm:$0xff] %vm3770, %v3743
      %3790 = vst.msk [vmem:[%s492 + $0x98] sm:$0xff] %vm3770, %v3745
      %3791 = vst.msk [vmem:[%s492 + $0xa0] sm:$0xff] %vm3770, %v3747
      %3792 = vst.msk [vmem:[%s492 + $0xa8] sm:$0xff] %vm3770, %v3749
      %3793 = vst.msk [vmem:[%s492 + $0xb0] sm:$0xff] %vm3770, %v3751
      %3794 = vst.msk [vmem:[%s492 + $0xb8] sm:$0xff] %vm3770, %v3753
      %3795 = vst.msk [vmem:[%s492 + $0xc0] sm:$0xff] %vm3770, %v3755
      %3796 = vst.msk [vmem:[%s492 + $0xc8] sm:$0xff] %vm3770, %v3757
      %3797 = vst.msk [vmem:[%s492 + $0xd0] sm:$0xff] %vm3770, %v3759
      %3798 = vst.msk [vmem:[%s492 + $0xd8] sm:$0xff] %vm3770, %v3761
      %3799 = vst.msk [vmem:[%s492 + $0xe0] sm:$0xff] %vm3770, %v3763
      %3800 = vst.msk [vmem:[%s492 + $0xe8] sm:$0xff] %vm3770, %v3765
      %3801 = vst.msk [vmem:[%s492 + $0xf0] sm:$0xff] %vm3770, %v3767
      %3802 = vst.msk [vmem:[%s492 + $0xf8] sm:$0xff] %vm3770, %v3769
      %s3803 = smul.u32 32, %s26
      %p3804 = scmp.lt.s32.totalorder %s3803, 63
      %s3805 = scalar_select %p3804, %s3803, 63
      %s3806 = smul.addr %s3805, 8
      %s3807 = scalar_lea.vmem %s14, %s3806
      // Predicated region
      $region77: #{tpu_custom_call.1} parent=75 // pred_check
        %p3808 = pneg %p348
      $region78: #{tpu_custom_call.1} parent=75 // pred_check_branch
        %3810 = sbr.rel (%p3808) target = $region80
      $region79: #{tpu_custom_call.1} parent=75 // pred_region
        %s3811 = smul.u32 32, %s26
      $region80: #{tpu_custom_call.1} parent=75 // pred_fallthru
        _
    $region76: #{tpu_custom_call.1} parent=5 // pred_fallthru
      _
    %p3812 = scmp.le.s32.totalorder 2, %s21
    // Predicated region
    $region81: #{tpu_custom_call.1} parent=5 // pred_check
      %p3813 = pneg %p3812
    $region82: #{tpu_custom_call.1} parent=5 // pred_check_branch
      %3815 = sbr.rel (%p3813) target = $region84
    $region83: #{tpu_custom_call.1} parent=5 // pred_region
      %s3816 = ssub.s32 %s21, 2
      // Predicated region
      $region85: #{tpu_custom_call.1} parent=83 // pred_check
        %p3817 = pneg %p354
      $region86: #{tpu_custom_call.1} parent=83 // pred_check_branch
        %3819 = sbr.rel (%p3817) target = $region88
      $region87: #{tpu_custom_call.1} parent=83 // pred_region
        %s3820 = smul.u32 32, %s27
        %p3821 = scmp.lt.s32.totalorder %s3820, 63
        %s3822 = scalar_select %p3821, %s3820, 63
        %s3823 = smul.addr %s3822, 8
        %s3824 = scalar_lea.vmem %s14, %s3823
      $region88: #{tpu_custom_call.1} parent=83 // pred_fallthru
        _
    $region84: #{tpu_custom_call.1} parent=5 // pred_fallthru
      _
  $region6: #{tpu_custom_call.1} parent=0 // loop_footer
    %s25 = sadd.s32 1, %s21
  $region7: #{tpu_custom_call.1} parent=0 // loop_footer_branch
    %20 = sbr.rel target = $region3
  $region8: #{tpu_custom_call.1} parent=0 // loop_exit
    _

</llo_original>
